<compile_context>
chip_gen: v6e
topology: v6e:2x2x1
jax: 0.10.0
libtpu: 0.0.40
codegen_flags: <defaults>
</compile_context>

<pallas_src>
import functools
import math

import numpy as np
import jax
import jax.numpy as jnp
from jax.experimental import pallas as pl
from jax.experimental.pallas import tpu as pltpu

BN_EPS = 1e-5
# MXU input dtype (accumulation is always f32).  bf16 is MXU-native on all
# current TPU generations; elementwise math stays f32 (v5e has no bf16 VPU).
MXU_DTYPE = jnp.bfloat16


# ---------------------------------------------------------------------------
# pltpu.roll convention probe — run ONCE per backend at build time (never on
# the forward hot path).  mode 0: pltpu.roll == jnp.roll, mode 1: opposite
# rotate direction, mode 2: concat-of-slices fallback (roll did not lower).
# ---------------------------------------------------------------------------
_ROLL_MODE_CACHE = {}


def _roll_probe_kernel(x_ref, o_ref):
    o_ref[...] = pltpu.roll(x_ref[...], shift=1, axis=1)


def _get_roll_mode():
    backend = jax.default_backend()
    if backend in _ROLL_MODE_CACHE:
        return _ROLL_MODE_CACHE[backend]
    mode = 2
    try:
        x = jax.lax.broadcasted_iota(jnp.float32, (8, 128), 1)
        y = pl.pallas_call(
            _roll_probe_kernel,
            out_shape=jax.ShapeDtypeStruct((8, 128), jnp.float32))(x)
        if bool(jnp.all(y == jnp.roll(x, 1, axis=1))):
            mode = 0
        elif bool(jnp.all(y == jnp.roll(x, -1, axis=1))):
            mode = 1
    except Exception:
        mode = 2
    _ROLL_MODE_CACHE[backend] = mode
    return mode


# ---------------------------------------------------------------------------
# Kernel 1: fused conv tower.  Activations are (C, Bblk*L) with Bblk batch
# items concatenated on the lane axis; every layer is one stacked-tap matmul.
# ---------------------------------------------------------------------------
def _conv_tower_kernel(*refs, pre_specs, bank_offsets, conv_specs,
                       item_len0, item_len1, mp1, mp2, roll_mode):
    n_w = len(pre_specs) + 1 + len(conv_specs)
    x_ref = refs[0]
    w_refs = refs[1:1 + n_w]
    t0_ref = refs[1 + n_w]          # (1, Bblk*L0) int32 : global lane -> t within item
    t1_ref = refs[2 + n_w]          # (1, Bblk*L1) int32
    sel1_ref = refs[3 + n_w]        # (Bblk*L0, Bblk*L1) f32 maxpool decimation
    sel2_ref = refs[4 + n_w]        # (Bblk*L1, Bblk*L2) f32
    out_ref = refs[-1]              # (c_last, Bblk*L2) f32

    def gshift(v, s):
        # Global lane shift: result[:, g] = v[:, (g + s) mod N]  (XLU rotate).
        n = v.shape[1]
        s = s % n
        if s == 0:
            return v
        if roll_mode == 0:                       # pltpu.roll == jnp.roll
            return pltpu.roll(v, shift=n - s, axis=1)
        if roll_mode == 1:                       # opposite convention
            return pltpu.roll(v, shift=s, axis=1)
        return jnp.concatenate([v[:, s:], v[:, :s]], axis=1)   # fallback

    def conv_relu(v, w, K, d, item_len, t_idx, ones_row):
        # torch Conv1d(padding='same', zeros) + bias + ReLU as one MXU matmul.
        # Cross-item lane spill of the global shift only lands on positions the
        # zero-pad mask kills, so one roll per tap covers all Bblk items.
        left = (d * (K - 1)) // 2
        tiles = []
        for k in range(K):
            off = k * d - left
            if off == 0:
                tiles.append(v)
            else:
                vs = gshift(v, off)
                valid = (t_idx >= -off) & (t_idx < item_len - off)
                tiles.append(jnp.where(valid, vs, 0.0))
        stack = jnp.concatenate(tiles + [ones_row], axis=0).astype(MXU_DTYPE)
        y = jnp.dot(w, stack, preferred_element_type=jnp.float32)
        return jnp.maximum(y, 0.0)               # bias lives in the ones column

    def circ_shift(v, off, item_len, t_idx):
        # Per-item circular shift: result[:, b*L + t] = v[:, b*L + (t+off) % L],
        # built from two global rolls + a precomputed-position select.
        r = off % item_len
        if r == 0:
            return v
        return jnp.where(t_idx < item_len - r,
                         gshift(v, r), gshift(v, r - item_len))

    def bank_relu(v, w, item_len, t_idx, ones_row):
        # All dilations of the bank as ONE matmul over dedup'ed shift tiles;
        # BN scale/shift are folded into the weight / ones column.  Output rows
        # are already the channel-concatenated bank output.
        tiles = [circ_shift(v, o, item_len, t_idx) for o in bank_offsets]
        stack = jnp.concatenate(tiles + [ones_row], axis=0).astype(MXU_DTYPE)
        y = jnp.dot(w, stack, preferred_element_type=jnp.float32)
        return jnp.maximum(y, 0.0)

    def maxpool(v, m, sel):
        # MaxPool1d(kernel=m, stride=m): shifted window max (XLU rolls) + exact
        # 0/1 decimation matmul (host-precomputed, f32 -> exact selection).
        win = v
        for j in range(1, m):
            win = jnp.maximum(win, gshift(v, j))
        return jnp.dot(win, sel, preferred_element_type=jnp.float32)

    x = x_ref[...]                                    # (cin0, Bblk*L0) f32
    ones0 = jnp.ones((1, x.shape[1]), jnp.float32)    # hoisted, reused per layer
    t0 = t0_ref[...]

    wi = 0
    for (_cin, _cout, K, d) in pre_specs:             # ConvRelu stack
        x = conv_relu(x, w_refs[wi][...], K, d, item_len0, t0, ones0)
        wi += 1

    x = bank_relu(x, w_refs[wi][...], item_len0, t0, ones0)   # DilationBank
    wi += 1
    x = maxpool(x, mp1, sel1_ref[...])

    ones1 = jnp.ones((1, x.shape[1]), jnp.float32)
    t1 = t1_ref[...]
    for (_cin, _cout, K, d) in conv_specs:            # ConvStack1D
        x = conv_relu(x, w_refs[wi][...], K, d, item_len1, t1, ones1)
        wi += 1
    x = maxpool(x, mp2, sel2_ref[...])

    out_ref[...] = x.astype(out_ref.dtype)            # lane-dense full-tile store


# ---------------------------------------------------------------------------
# Kernel 2: fused MLP tail (Linear+ReLU stack + output Linear, one kernel,
# pre-packed bf16 weights, one consolidated bias row vector).
# ---------------------------------------------------------------------------
def _mlp_kernel(*refs, num_layers, bias_offsets):
    x_ref = refs[0]
    b_ref = refs[1 + num_layers]                      # (1, sum(fout)) f32
    out_ref = refs[-1]
    h = x_ref[...]
    for i in range(num_layers):
        w = refs[1 + i][...]                          # (fin, fout) bf16
        off, fout = bias_offsets[i]
        h = jnp.dot(h.astype(MXU_DTYPE), w, preferred_element_type=jnp.float32)
        h = h + b_ref[:, off:off + fout]
        if i + 1 < num_layers:
            h = jnp.maximum(h, 0.0)                   # dropout = identity (eval)
    out_ref[...] = h.astype(out_ref.dtype)


# ---------------------------------------------------------------------------
# Host-side packing helpers (run ONCE at build time, not per forward)
# ---------------------------------------------------------------------------
def _pack_conv(w, b):
    # torch (Cout, Cin, K) -> (Cout, K*Cin + 1); last column = bias (ones row).
    cout, cin, K = w.shape
    wm = jnp.transpose(w, (0, 2, 1)).reshape(cout, K * cin)
    return jnp.concatenate([wm, b.reshape(cout, 1)], axis=1).astype(MXU_DTYPE)


def _pack_bank(bank):
    # Dense (ndil*Cout, n_off*Cin + 1) weight over the dedup'ed shift offsets,
    # with eval-mode BatchNorm folded (scale into weights, shift into the bias
    # column).
    w0 = np.asarray(bank[0][0])
    cout, cin, K = w0.shape
    dilations = [e[6] for e in bank]
    offsets = sorted({k * d - (d * (K - 1)) // 2
                      for d in dilations for k in range(K)})
    n_off = len(offsets)
    wd = np.zeros((len(bank) * cout, n_off * cin + 1), np.float32)
    for i, (w, b, gamma, beta, mean, var, d) in enumerate(bank):
        w = np.asarray(w, np.float32)
        b = np.asarray(b, np.float32)
        gamma = np.asarray(gamma, np.float32)
        beta = np.asarray(beta, np.float32)
        mean = np.asarray(mean, np.float32)
        var = np.asarray(var, np.float32)
        s = gamma / np.sqrt(var + BN_EPS)
        left = (d * (K - 1)) // 2
        for k in range(K):
            col = offsets.index(k * d - left)
            wd[i * cout:(i + 1) * cout, col * cin:(col + 1) * cin] += \
                s[:, None] * w[:, :, k]
        wd[i * cout:(i + 1) * cout, -1] = s * (b - mean) + beta
    return jnp.asarray(wd).astype(MXU_DTYPE), tuple(offsets)


def _pool_sel(bblk, l_in, m):
    # 0/1 decimation matrix for MaxPool1d(kernel=m, stride=m) on batch-blocked
    # lanes: column b*Lout+u picks input lane b*Lin + m*u.
    l_out = l_in // m
    sel = np.zeros((bblk * l_in, bblk * l_out), np.float32)
    for b in range(bblk):
        sel[b * l_in + m * np.arange(l_out), b * l_out + np.arange(l_out)] = 1.0
    return jnp.asarray(sel)


def _choose_bblk(B, L, mp1):
    # Largest divisor of B keeping grid >= 2 (both v7x TCs busy), lanes <= 2048,
    # and the mp1 selection matrix modest (VMEM headroom on v7x's 64 MiB).
    best = 1
    for cand in range(1, B + 1):
        if B % cand:
            continue
        if B >= 2 and B // cand < 2:
            continue
        if cand * L > 2048:
            continue
        if (cand * L) * (cand * (L // mp1)) * 4 > 4 * 1024 * 1024:
            continue
        best = max(best, cand)
    return best


# ---------------------------------------------------------------------------
# build_forward: pack weights/constants once, return a jitted forward fn
# ---------------------------------------------------------------------------
def build_forward(params, B, L):
    roll_mode = _get_roll_mode()          # probed once, off the hot path

    pre_specs, w_pre = [], []
    for (w, b, d) in params['pre_convs']:
        cout, cin, K = w.shape
        w_pre.append(_pack_conv(w, b))
        pre_specs.append((cin, cout, K, d))

    w_bank, bank_offsets = _pack_bank(params['bank'])

    conv_specs, w_conv = [], []
    for (w, b, d) in params['convs']:
        cout, cin, K = w.shape
        w_conv.append(_pack_conv(w, b))
        conv_specs.append((cin, cout, K, d))

    mp1, mp2 = params['mp1'], params['mp2']
    L1 = L // mp1
    L2 = L1 // mp2
    c_last = conv_specs[-1][1]
    feat = c_last * L2
    cin0 = pre_specs[0][0]

    bblk = _choose_bblk(B, L, mp1)
    n_blk = B // bblk
    N0, N1, N2 = bblk * L, bblk * L1, bblk * L2

    # Host-precomputed constants (VMEM-resident, constant index maps).
    t0 = jnp.asarray((np.arange(N0) % L).reshape(1, N0), jnp.int32)
    t1 = jnp.asarray((np.arange(N1) % L1).reshape(1, N1), jnp.int32)
    sel1 = _pool_sel(bblk, L, mp1)
    sel2 = _pool_sel(bblk, L1, mp2)

    weights1 = tuple(w_pre + [w_bank] + w_conv)
    consts1 = (t0, t1, sel1, sel2)

    conv_in_specs = (
        [pl.BlockSpec((cin0, N0), lambda s: (0, s))]
        + [pl.BlockSpec(w.shape, lambda s: (0, 0)) for w in weights1]
        + [pl.BlockSpec(a.shape, lambda s: (0, 0)) for a in consts1])

    conv_call = pl.pallas_call(
        functools.partial(_conv_tower_kernel,
                          pre_specs=tuple(pre_specs),
                          bank_offsets=bank_offsets,
                          conv_specs=tuple(conv_specs),
                          item_len0=L, item_len1=L1,
                          mp1=mp1, mp2=mp2, roll_mode=roll_mode),
        out_shape=jax.ShapeDtypeStruct((c_last, B * L2), jnp.float32),
        grid=(n_blk,),
        in_specs=conv_in_specs,
        out_specs=pl.BlockSpec((c_last, N2), lambda s: (0, s)),
        compiler_params=pltpu.CompilerParams(
            dimension_semantics=("parallel",)),
    )

    # MLP: weights pre-transposed once (no per-forward w.T), biases packed.
    layer_list = list(params['linears']) + [params['linear_out']]
    w_mlp = tuple(w.T.astype(MXU_DTYPE) for (w, _b) in layer_list)
    b_all = jnp.concatenate([b for (_w, b) in layer_list]).reshape(1, -1)
    bias_offsets, off = [], 0
    for (_w, b) in layer_list:
        bias_offsets.append((off, b.shape[0]))
        off += b.shape[0]
    num_layers = len(layer_list)
    nclass = params['linear_out'][0].shape[0]

    mlp_in_shapes = [(B, feat)] + [w.shape for w in w_mlp] + [b_all.shape]
    mlp_call = pl.pallas_call(
        functools.partial(_mlp_kernel, num_layers=num_layers,
                          bias_offsets=tuple(bias_offsets)),
        out_shape=jax.ShapeDtypeStruct((B, nclass), jnp.float32),
        grid=(1,),
        in_specs=[pl.BlockSpec(s, lambda i: (0, 0)) for s in mlp_in_shapes],
        out_specs=pl.BlockSpec((B, nclass), lambda i: (0, 0)),
    )

    def fwd(x):
        # (B, cin0, L) -> (cin0, B*L): batch concatenated on the lane axis.
        x_lanes = jnp.transpose(x, (1, 0, 2)).reshape(cin0, B * L)
        conv_out = conv_call(x_lanes, *weights1, *consts1)
        # per-item flatten (== torch x.view(-1, C*L), C-major) — tiny XLA op.
        flat = (conv_out.reshape(c_last, B, L2)
                .transpose(1, 0, 2).reshape(B, feat))
        return mlp_call(flat, *w_mlp, b_all)

    return jax.jit(fwd)


# ---------------------------------------------------------------------------
# Deterministic parameter initialization (PyTorch-like uniform fan-in bounds)
# ---------------------------------------------------------------------------
def _uniform(key, shape, bound):
    return jax.random.uniform(key, shape, jnp.float32, -bound, bound)


def init_conv_params(key, cin, cout, k):
    kw, kb = jax.random.split(key)
    bound = 1.0 / math.sqrt(cin * k)
    return _uniform(kw, (cout, cin, k), bound), _uniform(kb, (cout,), bound)


def init_linear_params(key, fin, fout):
    kw, kb = jax.random.split(key)
    bound = 1.0 / math.sqrt(fin)
    return _uniform(kw, (fout, fin), bound), _uniform(kb, (fout,), bound)


def init_params(key, config):
    keys = iter(jax.random.split(key, 32))
    p = {}
    dc = config['dilated_conv']

    cc = dc['conv']
    p['pre_convs'] = []
    for cin, cout, k, d in zip(cc['in_ch'], cc['out_ch'], cc['kernel_size'],
                               cc['dilation']):
        w, b = init_conv_params(next(keys), cin, cout, k)
        p['pre_convs'].append((w, b, d))
    p['mp1'] = cc['maxpool_kernel']

    db = dc['dilation']
    p['bank'] = []
    for d in db['dilations']:
        w, b = init_conv_params(next(keys), db['in_ch'], db['out_ch'],
                                db['kernel_size'])
        co = db['out_ch']
        gamma = jnp.ones((co,), jnp.float32)
        beta = jnp.zeros((co,), jnp.float32)
        mean = jnp.zeros((co,), jnp.float32)
        var = jnp.ones((co,), jnp.float32)
        p['bank'].append((w, b, gamma, beta, mean, var, d))

    c2 = config['conv']
    p['convs'] = []
    for cin, cout, k, d in zip(c2['in_ch'], c2['out_ch'], c2['kernel_size'],
                               c2['dilation']):
        w, b = init_conv_params(next(keys), cin, cout, k)
        p['convs'].append((w, b, d))
    p['mp2'] = c2['maxpool_kernel']

    p['linears'] = [init_linear_params(next(keys), fin, fout)
                    for fin, fout in zip(config['linear'][0], config['linear'][1])]
    p['linear_out'] = init_linear_params(next(keys), config['linear'][1][-1],
                                         config['nclass'])
    return p


# ---------------------------------------------------------------------------
# Pure-JAX reference (no Pallas) used as a correctness cross-check
# ---------------------------------------------------------------------------
def reference_forward(params, x):
    hp = jax.lax.Precision.HIGHEST

    def conv1d_same(x, w, b, d, circular):
        K = w.shape[2]
        L = x.shape[2]
        total = d * (K - 1)
        left = total // 2
        right = total - left
        xp = jnp.pad(x, ((0, 0), (0, 0), (left, right)),
                     mode='wrap' if circular else 'constant')
        y = b[None, :, None]
        for k in range(K):
            y = y + jnp.einsum('bcl,oc->bol', xp[:, :, k * d:k * d + L],
                               w[:, :, k], precision=hp)
        return y

    def maxpool(x, m):
        B, C, L = x.shape
        Lout = L // m
        return jnp.max(x[:, :, :Lout * m].reshape(B, C, Lout, m), axis=-1)

    for (w, b, d) in params['pre_convs']:
        x = jax.nn.relu(conv1d_same(x, w, b, d, False))

    outs = []
    for (w, b, gamma, beta, mean, var, d) in params['bank']:
        y = conv1d_same(x, w, b, d, True)
        y = ((y - mean[None, :, None])
             / jnp.sqrt(var[None, :, None] + BN_EPS)
             * gamma[None, :, None] + beta[None, :, None])
        outs.append(jax.nn.relu(y))
    x = jnp.concatenate(outs, axis=1)
    x = maxpool(x, params['mp1'])

    for (w, b, d) in params['convs']:
        x = jax.nn.relu(conv1d_same(x, w, b, d, False))
    x = maxpool(x, params['mp2'])

    x = x.reshape(x.shape[0], -1)
    for (w, b) in params['linears']:
        x = jax.nn.relu(jnp.dot(x, w.T, precision=hp) + b)
    w, b = params['linear_out']
    return jnp.dot(x, w.T, precision=hp) + b


# ---------------------------------------------------------------------------
if __name__ == "__main__":
    B, L = 8, 128
    config = {
        'dilated_conv': {
            'conv': {'in_ch': [1, 4], 'out_ch': [4, 4], 'kernel_size': [3, 3],
                     'dilation': [1, 1], 'maxpool_kernel': 2},
            'dilation': {'in_ch': 4, 'out_ch': 4, 'kernel_size': 3,
                         'dilations': [1, 2, 4]},
        },
        'conv': {'in_ch': [12, 8], 'out_ch': [8, 8], 'kernel_size': [3, 3],
                 'dilation': [1, 1], 'maxpool_kernel': 2},
        'linear': [[8 * (L // 4), 64], [64, 32], 0.0],
        'nclass': 5,
    }

    key = jax.random.PRNGKey(0)
    kx, kp = jax.random.split(key)
    params = init_params(kp, config)
    x = jax.random.normal(
        kx, (B, config['dilated_conv']['conv']['in_ch'][0], L), jnp.float32)

    fwd = build_forward(params, B, L)
    out = jax.block_until_ready(fwd(x))
    assert out.shape == (B, config['nclass']), out.shape
    assert bool(jnp.all(jnp.isfinite(out)))

    ref = jax.block_until_ready(reference_forward(params, x))
    err = float(jnp.max(jnp.abs(out - ref)))
    scale = float(jnp.max(jnp.abs(ref))) + 1e-6
    rel = 5e-2 if MXU_DTYPE == jnp.bfloat16 else 2e-2   # bf16 MXU inputs
    assert err <= rel * scale + 1e-3, (
        f"mismatch vs JAX reference: abs err {err}, ref scale {scale}")
    print("KERNEL_OK")
</pallas_src>

<mosaic_0001>
module attributes {stable_mosaic.version = 11 : i64} {
  func.func @_roll_probe_kernel(%arg0: memref<8x128xf32, #tpu.memory_space<vmem>>, %arg1: memref<8x128xf32, #tpu.memory_space<vmem>>) attributes {dimension_semantics = [], scalar_prefetch = 0 : i64, scratch_operands = 0 : i64, tpu.core_type = #tpu.core_type<tc>} {
    %c0 = arith.constant 0 : index
    %c0_0 = arith.constant 0 : index
    %0 = vector.load %arg0[%c0, %c0_0] : memref<8x128xf32, #tpu.memory_space<vmem>>, vector<8x128xf32>
    %c1_i32 = arith.constant 1 : i32
    %1 = tpu.dynamic_rotate %0 by %c1_i32 dim 1 : vector<8x128xf32>, i32 -> vector<8x128xf32>
    %c0_1 = arith.constant 0 : index
    %c0_2 = arith.constant 0 : index
    %2 = vector.load %arg1[%c0_1, %c0_2] : memref<8x128xf32, #tpu.memory_space<vmem>>, vector<8x128xf32>
    tpu.vector_store %arg1[%c0_1, %c0_2], %1 {strides = array<i32>} : memref<8x128xf32, #tpu.memory_space<vmem>>, vector<8x128xf32>,
    return
  }
}

module attributes {stable_mosaic.version = 11 : i64} {
  func.func @_mlp_kernel(%arg0: i32, %arg1: memref<8x256xf32, #tpu.memory_space<vmem>>, %arg2: memref<256x64xbf16, #tpu.memory_space<vmem>>, %arg3: memref<64x32xbf16, #tpu.memory_space<vmem>>, %arg4: memref<32x5xbf16, #tpu.memory_space<vmem>>, %arg5: memref<1x101xf32, #tpu.memory_space<vmem>>, %arg6: memref<8x5xf32, #tpu.memory_space<vmem>>) attributes {dimension_semantics = [#tpu.dimension_semantics<arbitrary>], iteration_bounds = array<i64: 1>, scalar_prefetch = 0 : i64, scratch_operands = 0 : i64, tpu.core_type = #tpu.core_type<tc>, window_params = [{pipeline_mode = #tpu.pipeline_mode<synchronous>, transform_indices = @transform_0, window_bounds = array<i64: 8, 256>}, {pipeline_mode = #tpu.pipeline_mode<synchronous>, transform_indices = @transform_1, window_bounds = array<i64: 256, 64>}, {pipeline_mode = #tpu.pipeline_mode<synchronous>, transform_indices = @transform_2, window_bounds = array<i64: 64, 32>}, {pipeline_mode = #tpu.pipeline_mode<synchronous>, transform_indices = @transform_3, window_bounds = array<i64: 32, 5>}, {pipeline_mode = #tpu.pipeline_mode<synchronous>, transform_indices = @transform_4, window_bounds = array<i64: 1, 101>}, {pipeline_mode = #tpu.pipeline_mode<synchronous>, transform_indices = @transform_5, window_bounds = array<i64: 8, 5>}]} {
    %c0 = arith.constant 0 : index
    %c0_0 = arith.constant 0 : index
    %0 = vector.load %arg1[%c0, %c0_0] : memref<8x256xf32, #tpu.memory_space<vmem>>, vector<8x256xf32>
    %c0_1 = arith.constant 0 : index
    %c0_2 = arith.constant 0 : index
    %1 = vector.load %arg2[%c0_1, %c0_2] : memref<256x64xbf16, #tpu.memory_space<vmem>>, vector<256x64xbf16>
    %2 = arith.truncf %0 : vector<8x256xf32> to vector<8x256xbf16>
    %cst = arith.constant dense<0.000000e+00> : vector<8x64xf32>
    %3 = tpu.matmul %2, %1, %cst {dimension_numbers = #tpu.dot_dimension_numbers<[1], [0], [0], [1], [0, 0, 1, 1], [], []>} : vector<8x256xbf16>, vector<256x64xbf16>, vector<8x64xf32> -> vector<8x64xf32>
    %c0_3 = arith.constant 0 : index
    %c0_4 = arith.constant 0 : index
    %4 = vector.load %arg5[%c0_3, %c0_4] : memref<1x101xf32, #tpu.memory_space<vmem>>, vector<1x64xf32>
    %5 = vector.broadcast %4 : vector<1x64xf32> to vector<8x64xf32>
    %6 = arith.addf %3, %5 : vector<8x64xf32>
    %cst_5 = arith.constant 0.000000e+00 : f32
    %7 = vector.broadcast %cst_5 : f32 to vector<8x64xf32>
    %8 = arith.maximumf %6, %7 : vector<8x64xf32>
    %c0_6 = arith.constant 0 : index
    %c0_7 = arith.constant 0 : index
    %9 = vector.load %arg3[%c0_6, %c0_7] : memref<64x32xbf16, #tpu.memory_space<vmem>>, vector<64x32xbf16>
    %10 = arith.truncf %8 : vector<8x64xf32> to vector<8x64xbf16>
    %cst_8 = arith.constant dense<0.000000e+00> : vector<8x32xf32>
    %11 = tpu.matmul %10, %9, %cst_8 {dimension_numbers = #tpu.dot_dimension_numbers<[1], [0], [0], [1], [0, 0, 1, 1], [], []>} : vector<8x64xbf16>, vector<64x32xbf16>, vector<8x32xf32> -> vector<8x32xf32>
    %c0_9 = arith.constant 0 : index
    %c64 = arith.constant 64 : index
    %12 = vector.load %arg5[%c0_9, %c64] : memref<1x101xf32, #tpu.memory_space<vmem>>, vector<1x32xf32>
    %13 = vector.broadcast %12 : vector<1x32xf32> to vector<8x32xf32>
    %14 = arith.addf %11, %13 : vector<8x32xf32>
    %cst_10 = arith.constant 0.000000e+00 : f32
    %15 = vector.broadcast %cst_10 : f32 to vector<8x32xf32>
    %16 = arith.maximumf %14, %15 : vector<8x32xf32>
    %c0_11 = arith.constant 0 : index
    %c0_12 = arith.constant 0 : index
    %17 = vector.load %arg4[%c0_11, %c0_12] : memref<32x5xbf16, #tpu.memory_space<vmem>>, vector<32x5xbf16>
    %18 = arith.truncf %16 : vector<8x32xf32> to vector<8x32xbf16>
    %cst_13 = arith.constant dense<0.000000e+00> : vector<8x5xf32>
    %19 = tpu.matmul %18, %17, %cst_13 {dimension_numbers = #tpu.dot_dimension_numbers<[1], [0], [0], [1], [0, 0, 1, 1], [], []>} : vector<8x32xbf16>, vector<32x5xbf16>, vector<8x5xf32> -> vector<8x5xf32>
    %c0_14 = arith.constant 0 : index
    %c96 = arith.constant 96 : index
    %20 = vector.load %arg5[%c0_14, %c96] : memref<1x101xf32, #tpu.memory_space<vmem>>, vector<1x5xf32>
    %21 = vector.broadcast %20 : vector<1x5xf32> to vector<8x5xf32>
    %22 = arith.addf %19, %21 : vector<8x5xf32>
    %c0_15 = arith.constant 0 : index
    %c0_16 = arith.constant 0 : index
    %23 = vector.load %arg6[%c0_15, %c0_16] : memref<8x5xf32, #tpu.memory_space<vmem>>, vector<8x5xf32>
    tpu.vector_store %arg6[%c0_15, %c0_16], %22 {strides = array<i32>} : memref<8x5xf32, #tpu.memory_space<vmem>>, vector<8x5xf32>,
    return
  }
  func.func @transform_0(%arg0: i32) -> (i32, i32) {
    %c0_i32 = arith.constant 0 : i32
    %c0_i32_0 = arith.constant 0 : i32
    %c0_i32_1 = arith.constant 0 : i32
    return %c0_i32, %c0_i32_0 : i32, i32
  }
  func.func @transform_1(%arg0: i32) -> (i32, i32) {
    %c0_i32 = arith.constant 0 : i32
    %c0_i32_0 = arith.constant 0 : i32
    %c0_i32_1 = arith.constant 0 : i32
    return %c0_i32, %c0_i32_0 : i32, i32
  }
  func.func @transform_2(%arg0: i32) -> (i32, i32) {
    %c0_i32 = arith.constant 0 : i32
    %c0_i32_0 = arith.constant 0 : i32
    %c0_i32_1 = arith.constant 0 : i32
    return %c0_i32, %c0_i32_0 : i32, i32
  }
  func.func @transform_3(%arg0: i32) -> (i32, i32) {
    %c0_i32 = arith.constant 0 : i32
    %c0_i32_0 = arith.constant 0 : i32
    %c0_i32_1 = arith.constant 0 : i32
    return %c0_i32, %c0_i32_0 : i32, i32
  }
  func.func @transform_4(%arg0: i32) -> (i32, i32) {
    %c0_i32 = arith.constant 0 : i32
    %c0_i32_0 = arith.constant 0 : i32
    %c0_i32_1 = arith.constant 0 : i32
    return %c0_i32, %c0_i32_0 : i32, i32
  }
  func.func @transform_5(%arg0: i32) -> (i32, i32) {
    %c0_i32 = arith.constant 0 : i32
    %c0_i32_0 = arith.constant 0 : i32
    %c0_i32_1 = arith.constant 0 : i32
    return %c0_i32, %c0_i32_0 : i32, i32
  }
}

module attributes {stable_mosaic.version = 11 : i64} {
  func.func @_conv_tower_kernel(%arg0: i32, %arg1: memref<1x512xf32, #tpu.memory_space<vmem>>, %arg2: memref<4x4xbf16, #tpu.memory_space<vmem>>, %arg3: memref<4x13xbf16, #tpu.memory_space<vmem>>, %arg4: memref<12x29xbf16, #tpu.memory_space<vmem>>, %arg5: memref<8x37xbf16, #tpu.memory_space<vmem>>, %arg6: memref<8x25xbf16, #tpu.memory_space<vmem>>, %arg7: memref<1x512xi32, #tpu.memory_space<vmem>>, %arg8: memref<1x256xi32, #tpu.memory_space<vmem>>, %arg9: memref<512x256xf32, #tpu.memory_space<vmem>>, %arg10: memref<256x128xf32, #tpu.memory_space<vmem>>, %arg11: memref<8x128xf32, #tpu.memory_space<vmem>>) attributes {dimension_semantics = [#tpu.dimension_semantics<parallel>], iteration_bounds = array<i64: 2>, scalar_prefetch = 0 : i64, scratch_operands = 0 : i64, tpu.core_type = #tpu.core_type<tc>, window_params = [{transform_indices = @transform_0, window_bounds = array<i64: 1, 512>}, {pipeline_mode = #tpu.pipeline_mode<synchronous>, transform_indices = @transform_1, window_bounds = array<i64: 4, 4>}, {pipeline_mode = #tpu.pipeline_mode<synchronous>, transform_indices = @transform_2, window_bounds = array<i64: 4, 13>}, {pipeline_mode = #tpu.pipeline_mode<synchronous>, transform_indices = @transform_3, window_bounds = array<i64: 12, 29>}, {pipeline_mode = #tpu.pipeline_mode<synchronous>, transform_indices = @transform_4, window_bounds = array<i64: 8, 37>}, {pipeline_mode = #tpu.pipeline_mode<synchronous>, transform_indices = @transform_5, window_bounds = array<i64: 8, 25>}, {pipeline_mode = #tpu.pipeline_mode<synchronous>, transform_indices = @transform_6, window_bounds = array<i64: 1, 512>}, {pipeline_mode = #tpu.pipeline_mode<synchronous>, transform_indices = @transform_7, window_bounds = array<i64: 1, 256>}, {pipeline_mode = #tpu.pipeline_mode<synchronous>, transform_indices = @transform_8, window_bounds = array<i64: 512, 256>}, {pipeline_mode = #tpu.pipeline_mode<synchronous>, transform_indices = @transform_9, window_bounds = array<i64: 256, 128>}, {transform_indices = @transform_10, window_bounds = array<i64: 8, 128>}]} {
    %c0 = arith.constant 0 : index
    %c0_0 = arith.constant 0 : index
    %0 = vector.load %arg1[%c0, %c0_0] : memref<1x512xf32, #tpu.memory_space<vmem>>, vector<1x512xf32>
    %cst = arith.constant 1.000000e+00 : f32
    %1 = vector.broadcast %cst : f32 to vector<1x512xf32>
    %c0_1 = arith.constant 0 : index
    %c0_2 = arith.constant 0 : index
    %2 = vector.load %arg7[%c0_1, %c0_2] : memref<1x512xi32, #tpu.memory_space<vmem>>, vector<1x512xi32>
    %c0_3 = arith.constant 0 : index
    %c0_4 = arith.constant 0 : index
    %3 = vector.load %arg2[%c0_3, %c0_4] : memref<4x4xbf16, #tpu.memory_space<vmem>>, vector<4x4xbf16>
    %4 = vector.extract_strided_slice %0 {offsets = [0, 511], sizes = [1, 1], strides = [1, 1]} : vector<1x512xf32> to vector<1x1xf32>
    %5 = vector.extract_strided_slice %0 {offsets = [0, 0], sizes = [1, 511], strides = [1, 1]} : vector<1x512xf32> to vector<1x511xf32>
    %6 = tpu.concatenate %4, %5 in 1 : vector<1x1xf32>, vector<1x511xf32> -> vector<1x512xf32>
    %c1_i32 = arith.constant 1 : i32
    %7 = vector.broadcast %c1_i32 : i32 to vector<1x512xi32>
    %8 = arith.cmpi sge, %2, %7 : vector<1x512xi32>
    %c129_i32 = arith.constant 129 : i32
    %9 = vector.broadcast %c129_i32 : i32 to vector<1x512xi32>
    %10 = arith.cmpi slt, %2, %9 : vector<1x512xi32>
    %11 = arith.andi %8, %10 : vector<1x512xi1>
    %cst_5 = arith.constant 0.000000e+00 : f32
    %12 = vector.broadcast %cst_5 : f32 to vector<1x512xf32>
    %13 = arith.select %11, %6, %12 : vector<1x512xi1>, vector<1x512xf32>
    %14 = vector.extract_strided_slice %0 {offsets = [0, 1], sizes = [1, 511], strides = [1, 1]} : vector<1x512xf32> to vector<1x511xf32>
    %15 = vector.extract_strided_slice %0 {offsets = [0, 0], sizes = [1, 1], strides = [1, 1]} : vector<1x512xf32> to vector<1x1xf32>
    %16 = tpu.concatenate %14, %15 in 1 : vector<1x511xf32>, vector<1x1xf32> -> vector<1x512xf32>
    %c-1_i32 = arith.constant -1 : i32
    %17 = vector.broadcast %c-1_i32 : i32 to vector<1x512xi32>
    %18 = arith.cmpi sge, %2, %17 : vector<1x512xi32>
    %c127_i32 = arith.constant 127 : i32
    %19 = vector.broadcast %c127_i32 : i32 to vector<1x512xi32>
    %20 = arith.cmpi slt, %2, %19 : vector<1x512xi32>
    %21 = arith.andi %18, %20 : vector<1x512xi1>
    %cst_6 = arith.constant 0.000000e+00 : f32
    %22 = vector.broadcast %cst_6 : f32 to vector<1x512xf32>
    %23 = arith.select %21, %16, %22 : vector<1x512xi1>, vector<1x512xf32>
    %24 = tpu.concatenate %13, %0, %23, %1 in 0 : vector<1x512xf32>, vector<1x512xf32>, vector<1x512xf32>, vector<1x512xf32> -> vector<4x512xf32>
    %25 = arith.truncf %24 : vector<4x512xf32> to vector<4x512xbf16>
    %cst_7 = arith.constant dense<0.000000e+00> : vector<4x512xf32>
    %26 = tpu.matmul %3, %25, %cst_7 {dimension_numbers = #tpu.dot_dimension_numbers<[1], [0], [0], [1], [0, 0, 1, 1], [], []>} : vector<4x4xbf16>, vector<4x512xbf16>, vector<4x512xf32> -> vector<4x512xf32>
    %cst_8 = arith.constant 0.000000e+00 : f32
    %27 = vector.broadcast %cst_8 : f32 to vector<4x512xf32>
    %28 = arith.maximumf %26, %27 : vector<4x512xf32>
    %c0_9 = arith.constant 0 : index
    %c0_10 = arith.constant 0 : index
    %29 = vector.load %arg3[%c0_9, %c0_10] : memref<4x13xbf16, #tpu.memory_space<vmem>>, vector<4x13xbf16>
    %30 = vector.extract_strided_slice %28 {offsets = [0, 511], sizes = [4, 1], strides = [1, 1]} : vector<4x512xf32> to vector<4x1xf32>
    %31 = vector.extract_strided_slice %28 {offsets = [0, 0], sizes = [4, 511], strides = [1, 1]} : vector<4x512xf32> to vector<4x511xf32>
    %32 = tpu.concatenate %30, %31 in 1 : vector<4x1xf32>, vector<4x511xf32> -> vector<4x512xf32>
    %c1_i32_11 = arith.constant 1 : i32
    %33 = vector.broadcast %c1_i32_11 : i32 to vector<1x512xi32>
    %34 = arith.cmpi sge, %2, %33 : vector<1x512xi32>
    %c129_i32_12 = arith.constant 129 : i32
    %35 = vector.broadcast %c129_i32_12 : i32 to vector<1x512xi32>
    %36 = arith.cmpi slt, %2, %35 : vector<1x512xi32>
    %37 = arith.andi %34, %36 : vector<1x512xi1>
    %cst_13 = arith.constant 0.000000e+00 : f32
    %38 = vector.shape_cast %37 : vector<1x512xi1> to vector<1x512xi1>
    %39 = vector.broadcast %38 : vector<1x512xi1> to vector<4x512xi1>
    %40 = vector.broadcast %cst_13 : f32 to vector<4x512xf32>
    %41 = arith.select %39, %32, %40 : vector<4x512xi1>, vector<4x512xf32>
    %42 = vector.extract_strided_slice %28 {offsets = [0, 1], sizes = [4, 511], strides = [1, 1]} : vector<4x512xf32> to vector<4x511xf32>
    %43 = vector.extract_strided_slice %28 {offsets = [0, 0], sizes = [4, 1], strides = [1, 1]} : vector<4x512xf32> to vector<4x1xf32>
    %44 = tpu.concatenate %42, %43 in 1 : vector<4x511xf32>, vector<4x1xf32> -> vector<4x512xf32>
    %c-1_i32_14 = arith.constant -1 : i32
    %45 = vector.broadcast %c-1_i32_14 : i32 to vector<1x512xi32>
    %46 = arith.cmpi sge, %2, %45 : vector<1x512xi32>
    %c127_i32_15 = arith.constant 127 : i32
    %47 = vector.broadcast %c127_i32_15 : i32 to vector<1x512xi32>
    %48 = arith.cmpi slt, %2, %47 : vector<1x512xi32>
    %49 = arith.andi %46, %48 : vector<1x512xi1>
    %cst_16 = arith.constant 0.000000e+00 : f32
    %50 = vector.shape_cast %49 : vector<1x512xi1> to vector<1x512xi1>
    %51 = vector.broadcast %50 : vector<1x512xi1> to vector<4x512xi1>
    %52 = vector.broadcast %cst_16 : f32 to vector<4x512xf32>
    %53 = arith.select %51, %44, %52 : vector<4x512xi1>, vector<4x512xf32>
    %54 = tpu.concatenate %41, %28, %53, %1 in 0 : vector<4x512xf32>, vector<4x512xf32>, vector<4x512xf32>, vector<1x512xf32> -> vector<13x512xf32>
    %55 = arith.truncf %54 : vector<13x512xf32> to vector<13x512xbf16>
    %cst_17 = arith.constant dense<0.000000e+00> : vector<4x512xf32>
    %56 = tpu.matmul %29, %55, %cst_17 {dimension_numbers = #tpu.dot_dimension_numbers<[1], [0], [0], [1], [0, 0, 1, 1], [], []>} : vector<4x13xbf16>, vector<13x512xbf16>, vector<4x512xf32> -> vector<4x512xf32>
    %cst_18 = arith.constant 0.000000e+00 : f32
    %57 = vector.broadcast %cst_18 : f32 to vector<4x512xf32>
    %58 = arith.maximumf %56, %57 : vector<4x512xf32>
    %c0_19 = arith.constant 0 : index
    %c0_20 = arith.constant 0 : index
    %59 = vector.load %arg4[%c0_19, %c0_20] : memref<12x29xbf16, #tpu.memory_space<vmem>>, vector<12x29xbf16>
    %c4_i32 = arith.constant 4 : i32
    %60 = vector.broadcast %c4_i32 : i32 to vector<1x512xi32>
    %61 = arith.cmpi slt, %2, %60 : vector<1x512xi32>
    %62 = vector.extract_strided_slice %58 {offsets = [0, 124], sizes = [4, 388], strides = [1, 1]} : vector<4x512xf32> to vector<4x388xf32>
    %63 = vector.extract_strided_slice %58 {offsets = [0, 0], sizes = [4, 124], strides = [1, 1]} : vector<4x512xf32> to vector<4x124xf32>
    %64 = tpu.concatenate %62, %63 in 1 : vector<4x388xf32>, vector<4x124xf32> -> vector<4x512xf32>
    %65 = vector.extract_strided_slice %58 {offsets = [0, 508], sizes = [4, 4], strides = [1, 1]} : vector<4x512xf32> to vector<4x4xf32>
    %66 = vector.extract_strided_slice %58 {offsets = [0, 0], sizes = [4, 508], strides = [1, 1]} : vector<4x512xf32> to vector<4x508xf32>
    %67 = tpu.concatenate %65, %66 in 1 : vector<4x4xf32>, vector<4x508xf32> -> vector<4x512xf32>
    %68 = vector.shape_cast %61 : vector<1x512xi1> to vector<1x512xi1>
    %69 = vector.broadcast %68 : vector<1x512xi1> to vector<4x512xi1>
    %70 = arith.select %69, %64, %67 : vector<4x512xi1>, vector<4x512xf32>
    %c2_i32 = arith.constant 2 : i32
    %71 = vector.broadcast %c2_i32 : i32 to vector<1x512xi32>
    %72 = arith.cmpi slt, %2, %71 : vector<1x512xi32>
    %73 = vector.extract_strided_slice %58 {offsets = [0, 126], sizes = [4, 386], strides = [1, 1]} : vector<4x512xf32> to vector<4x386xf32>
    %74 = vector.extract_strided_slice %58 {offsets = [0, 0], sizes = [4, 126], strides = [1, 1]} : vector<4x512xf32> to vector<4x126xf32>
    %75 = tpu.concatenate %73, %74 in 1 : vector<4x386xf32>, vector<4x126xf32> -> vector<4x512xf32>
    %76 = vector.extract_strided_slice %58 {offsets = [0, 510], sizes = [4, 2], strides = [1, 1]} : vector<4x512xf32> to vector<4x2xf32>
    %77 = vector.extract_strided_slice %58 {offsets = [0, 0], sizes = [4, 510], strides = [1, 1]} : vector<4x512xf32> to vector<4x510xf32>
    %78 = tpu.concatenate %76, %77 in 1 : vector<4x2xf32>, vector<4x510xf32> -> vector<4x512xf32>
    %79 = vector.shape_cast %72 : vector<1x512xi1> to vector<1x512xi1>
    %80 = vector.broadcast %79 : vector<1x512xi1> to vector<4x512xi1>
    %81 = arith.select %80, %75, %78 : vector<4x512xi1>, vector<4x512xf32>
    %c1_i32_21 = arith.constant 1 : i32
    %82 = vector.broadcast %c1_i32_21 : i32 to vector<1x512xi32>
    %83 = arith.cmpi slt, %2, %82 : vector<1x512xi32>
    %84 = vector.extract_strided_slice %58 {offsets = [0, 127], sizes = [4, 385], strides = [1, 1]} : vector<4x512xf32> to vector<4x385xf32>
    %85 = vector.extract_strided_slice %58 {offsets = [0, 0], sizes = [4, 127], strides = [1, 1]} : vector<4x512xf32> to vector<4x127xf32>
    %86 = tpu.concatenate %84, %85 in 1 : vector<4x385xf32>, vector<4x127xf32> -> vector<4x512xf32>
    %87 = vector.extract_strided_slice %58 {offsets = [0, 511], sizes = [4, 1], strides = [1, 1]} : vector<4x512xf32> to vector<4x1xf32>
    %88 = vector.extract_strided_slice %58 {offsets = [0, 0], sizes = [4, 511], strides = [1, 1]} : vector<4x512xf32> to vector<4x511xf32>
    %89 = tpu.concatenate %87, %88 in 1 : vector<4x1xf32>, vector<4x511xf32> -> vector<4x512xf32>
    %90 = vector.shape_cast %83 : vector<1x512xi1> to vector<1x512xi1>
    %91 = vector.broadcast %90 : vector<1x512xi1> to vector<4x512xi1>
    %92 = arith.select %91, %86, %89 : vector<4x512xi1>, vector<4x512xf32>
    %c127_i32_22 = arith.constant 127 : i32
    %93 = vector.broadcast %c127_i32_22 : i32 to vector<1x512xi32>
    %94 = arith.cmpi slt, %2, %93 : vector<1x512xi32>
    %95 = vector.extract_strided_slice %58 {offsets = [0, 1], sizes = [4, 511], strides = [1, 1]} : vector<4x512xf32> to vector<4x511xf32>
    %96 = vector.extract_strided_slice %58 {offsets = [0, 0], sizes = [4, 1], strides = [1, 1]} : vector<4x512xf32> to vector<4x1xf32>
    %97 = tpu.concatenate %95, %96 in 1 : vector<4x511xf32>, vector<4x1xf32> -> vector<4x512xf32>
    %98 = vector.extract_strided_slice %58 {offsets = [0, 385], sizes = [4, 127], strides = [1, 1]} : vector<4x512xf32> to vector<4x127xf32>
    %99 = vector.extract_strided_slice %58 {offsets = [0, 0], sizes = [4, 385], strides = [1, 1]} : vector<4x512xf32> to vector<4x385xf32>
    %100 = tpu.concatenate %98, %99 in 1 : vector<4x127xf32>, vector<4x385xf32> -> vector<4x512xf32>
    %101 = vector.shape_cast %94 : vector<1x512xi1> to vector<1x512xi1>
    %102 = vector.broadcast %101 : vector<1x512xi1> to vector<4x512xi1>
    %103 = arith.select %102, %97, %100 : vector<4x512xi1>, vector<4x512xf32>
    %c126_i32 = arith.constant 126 : i32
    %104 = vector.broadcast %c126_i32 : i32 to vector<1x512xi32>
    %105 = arith.cmpi slt, %2, %104 : vector<1x512xi32>
    %106 = vector.extract_strided_slice %58 {offsets = [0, 2], sizes = [4, 510], strides = [1, 1]} : vector<4x512xf32> to vector<4x510xf32>
    %107 = vector.extract_strided_slice %58 {offsets = [0, 0], sizes = [4, 2], strides = [1, 1]} : vector<4x512xf32> to vector<4x2xf32>
    %108 = tpu.concatenate %106, %107 in 1 : vector<4x510xf32>, vector<4x2xf32> -> vector<4x512xf32>
    %109 = vector.extract_strided_slice %58 {offsets = [0, 386], sizes = [4, 126], strides = [1, 1]} : vector<4x512xf32> to vector<4x126xf32>
    %110 = vector.extract_strided_slice %58 {offsets = [0, 0], sizes = [4, 386], strides = [1, 1]} : vector<4x512xf32> to vector<4x386xf32>
    %111 = tpu.concatenate %109, %110 in 1 : vector<4x126xf32>, vector<4x386xf32> -> vector<4x512xf32>
    %112 = vector.shape_cast %105 : vector<1x512xi1> to vector<1x512xi1>
    %113 = vector.broadcast %112 : vector<1x512xi1> to vector<4x512xi1>
    %114 = arith.select %113, %108, %111 : vector<4x512xi1>, vector<4x512xf32>
    %c124_i32 = arith.constant 124 : i32
    %115 = vector.broadcast %c124_i32 : i32 to vector<1x512xi32>
    %116 = arith.cmpi slt, %2, %115 : vector<1x512xi32>
    %117 = vector.extract_strided_slice %58 {offsets = [0, 4], sizes = [4, 508], strides = [1, 1]} : vector<4x512xf32> to vector<4x508xf32>
    %118 = vector.extract_strided_slice %58 {offsets = [0, 0], sizes = [4, 4], strides = [1, 1]} : vector<4x512xf32> to vector<4x4xf32>
    %119 = tpu.concatenate %117, %118 in 1 : vector<4x508xf32>, vector<4x4xf32> -> vector<4x512xf32>
    %120 = vector.extract_strided_slice %58 {offsets = [0, 388], sizes = [4, 124], strides = [1, 1]} : vector<4x512xf32> to vector<4x124xf32>
    %121 = vector.extract_strided_slice %58 {offsets = [0, 0], sizes = [4, 388], strides = [1, 1]} : vector<4x512xf32> to vector<4x388xf32>
    %122 = tpu.concatenate %120, %121 in 1 : vector<4x124xf32>, vector<4x388xf32> -> vector<4x512xf32>
    %123 = vector.shape_cast %116 : vector<1x512xi1> to vector<1x512xi1>
    %124 = vector.broadcast %123 : vector<1x512xi1> to vector<4x512xi1>
    %125 = arith.select %124, %119, %122 : vector<4x512xi1>, vector<4x512xf32>
    %126 = tpu.concatenate %70, %81, %92, %58, %103, %114, %125, %1 in 0 : vector<4x512xf32>, vector<4x512xf32>, vector<4x512xf32>, vector<4x512xf32>, vector<4x512xf32>, vector<4x512xf32>, vector<4x512xf32>, vector<1x512xf32> -> vector<29x512xf32>
    %127 = arith.truncf %126 : vector<29x512xf32> to vector<29x512xbf16>
    %cst_23 = arith.constant dense<0.000000e+00> : vector<12x512xf32>
    %128 = tpu.matmul %59, %127, %cst_23 {dimension_numbers = #tpu.dot_dimension_numbers<[1], [0], [0], [1], [0, 0, 1, 1], [], []>} : vector<12x29xbf16>, vector<29x512xbf16>, vector<12x512xf32> -> vector<12x512xf32>
    %cst_24 = arith.constant 0.000000e+00 : f32
    %129 = vector.broadcast %cst_24 : f32 to vector<12x512xf32>
    %130 = arith.maximumf %128, %129 : vector<12x512xf32>
    %c0_25 = arith.constant 0 : index
    %c0_26 = arith.constant 0 : index
    %131 = vector.load %arg9[%c0_25, %c0_26] : memref<512x256xf32, #tpu.memory_space<vmem>>, vector<512x256xf32>
    %132 = vector.extract_strided_slice %130 {offsets = [0, 1], sizes = [12, 511], strides = [1, 1]} : vector<12x512xf32> to vector<12x511xf32>
    %133 = vector.extract_strided_slice %130 {offsets = [0, 0], sizes = [12, 1], strides = [1, 1]} : vector<12x512xf32> to vector<12x1xf32>
    %134 = tpu.concatenate %132, %133 in 1 : vector<12x511xf32>, vector<12x1xf32> -> vector<12x512xf32>
    %135 = arith.maximumf %130, %134 : vector<12x512xf32>
    %cst_27 = arith.constant dense<0.000000e+00> : vector<12x256xf32>
    %136 = tpu.matmul %135, %131, %cst_27 {dimension_numbers = #tpu.dot_dimension_numbers<[1], [0], [0], [1], [0, 0, 1, 1], [], []>} : vector<12x512xf32>, vector<512x256xf32>, vector<12x256xf32> -> vector<12x256xf32>
    %cst_28 = arith.constant 1.000000e+00 : f32
    %137 = vector.broadcast %cst_28 : f32 to vector<1x256xf32>
    %c0_29 = arith.constant 0 : index
    %c0_30 = arith.constant 0 : index
    %138 = vector.load %arg8[%c0_29, %c0_30] : memref<1x256xi32, #tpu.memory_space<vmem>>, vector<1x256xi32>
    %c0_31 = arith.constant 0 : index
    %c0_32 = arith.constant 0 : index
    %139 = vector.load %arg5[%c0_31, %c0_32] : memref<8x37xbf16, #tpu.memory_space<vmem>>, vector<8x37xbf16>
    %140 = vector.extract_strided_slice %136 {offsets = [0, 255], sizes = [12, 1], strides = [1, 1]} : vector<12x256xf32> to vector<12x1xf32>
    %141 = vector.extract_strided_slice %136 {offsets = [0, 0], sizes = [12, 255], strides = [1, 1]} : vector<12x256xf32> to vector<12x255xf32>
    %142 = tpu.concatenate %140, %141 in 1 : vector<12x1xf32>, vector<12x255xf32> -> vector<12x256xf32>
    %c1_i32_33 = arith.constant 1 : i32
    %143 = vector.broadcast %c1_i32_33 : i32 to vector<1x256xi32>
    %144 = arith.cmpi sge, %138, %143 : vector<1x256xi32>
    %c65_i32 = arith.constant 65 : i32
    %145 = vector.broadcast %c65_i32 : i32 to vector<1x256xi32>
    %146 = arith.cmpi slt, %138, %145 : vector<1x256xi32>
    %147 = arith.andi %144, %146 : vector<1x256xi1>
    %cst_34 = arith.constant 0.000000e+00 : f32
    %148 = vector.shape_cast %147 : vector<1x256xi1> to vector<1x256xi1>
    %149 = vector.broadcast %148 : vector<1x256xi1> to vector<12x256xi1>
    %150 = vector.broadcast %cst_34 : f32 to vector<12x256xf32>
    %151 = arith.select %149, %142, %150 : vector<12x256xi1>, vector<12x256xf32>
    %152 = vector.extract_strided_slice %136 {offsets = [0, 1], sizes = [12, 255], strides = [1, 1]} : vector<12x256xf32> to vector<12x255xf32>
    %153 = vector.extract_strided_slice %136 {offsets = [0, 0], sizes = [12, 1], strides = [1, 1]} : vector<12x256xf32> to vector<12x1xf32>
    %154 = tpu.concatenate %152, %153 in 1 : vector<12x255xf32>, vector<12x1xf32> -> vector<12x256xf32>
    %c-1_i32_35 = arith.constant -1 : i32
    %155 = vector.broadcast %c-1_i32_35 : i32 to vector<1x256xi32>
    %156 = arith.cmpi sge, %138, %155 : vector<1x256xi32>
    %c63_i32 = arith.constant 63 : i32
    %157 = vector.broadcast %c63_i32 : i32 to vector<1x256xi32>
    %158 = arith.cmpi slt, %138, %157 : vector<1x256xi32>
    %159 = arith.andi %156, %158 : vector<1x256xi1>
    %cst_36 = arith.constant 0.000000e+00 : f32
    %160 = vector.shape_cast %159 : vector<1x256xi1> to vector<1x256xi1>
    %161 = vector.broadcast %160 : vector<1x256xi1> to vector<12x256xi1>
    %162 = vector.broadcast %cst_36 : f32 to vector<12x256xf32>
    %163 = arith.select %161, %154, %162 : vector<12x256xi1>, vector<12x256xf32>
    %164 = tpu.concatenate %151, %136, %163, %137 in 0 : vector<12x256xf32>, vector<12x256xf32>, vector<12x256xf32>, vector<1x256xf32> -> vector<37x256xf32>
    %165 = arith.truncf %164 : vector<37x256xf32> to vector<37x256xbf16>
    %cst_37 = arith.constant dense<0.000000e+00> : vector<8x256xf32>
    %166 = tpu.matmul %139, %165, %cst_37 {dimension_numbers = #tpu.dot_dimension_numbers<[1], [0], [0], [1], [0, 0, 1, 1], [], []>} : vector<8x37xbf16>, vector<37x256xbf16>, vector<8x256xf32> -> vector<8x256xf32>
    %cst_38 = arith.constant 0.000000e+00 : f32
    %167 = vector.broadcast %cst_38 : f32 to vector<8x256xf32>
    %168 = arith.maximumf %166, %167 : vector<8x256xf32>
    %c0_39 = arith.constant 0 : index
    %c0_40 = arith.constant 0 : index
    %169 = vector.load %arg6[%c0_39, %c0_40] : memref<8x25xbf16, #tpu.memory_space<vmem>>, vector<8x25xbf16>
    %170 = vector.extract_strided_slice %168 {offsets = [0, 255], sizes = [8, 1], strides = [1, 1]} : vector<8x256xf32> to vector<8x1xf32>
    %171 = vector.extract_strided_slice %168 {offsets = [0, 0], sizes = [8, 255], strides = [1, 1]} : vector<8x256xf32> to vector<8x255xf32>
    %172 = tpu.concatenate %170, %171 in 1 : vector<8x1xf32>, vector<8x255xf32> -> vector<8x256xf32>
    %c1_i32_41 = arith.constant 1 : i32
    %173 = vector.broadcast %c1_i32_41 : i32 to vector<1x256xi32>
    %174 = arith.cmpi sge, %138, %173 : vector<1x256xi32>
    %c65_i32_42 = arith.constant 65 : i32
    %175 = vector.broadcast %c65_i32_42 : i32 to vector<1x256xi32>
    %176 = arith.cmpi slt, %138, %175 : vector<1x256xi32>
    %177 = arith.andi %174, %176 : vector<1x256xi1>
    %cst_43 = arith.constant 0.000000e+00 : f32
    %178 = vector.shape_cast %177 : vector<1x256xi1> to vector<1x256xi1>
    %179 = vector.broadcast %178 : vector<1x256xi1> to vector<8x256xi1>
    %180 = vector.broadcast %cst_43 : f32 to vector<8x256xf32>
    %181 = arith.select %179, %172, %180 : vector<8x256xi1>, vector<8x256xf32>
    %182 = vector.extract_strided_slice %168 {offsets = [0, 1], sizes = [8, 255], strides = [1, 1]} : vector<8x256xf32> to vector<8x255xf32>
    %183 = vector.extract_strided_slice %168 {offsets = [0, 0], sizes = [8, 1], strides = [1, 1]} : vector<8x256xf32> to vector<8x1xf32>
    %184 = tpu.concatenate %182, %183 in 1 : vector<8x255xf32>, vector<8x1xf32> -> vector<8x256xf32>
    %c-1_i32_44 = arith.constant -1 : i32
    %185 = vector.broadcast %c-1_i32_44 : i32 to vector<1x256xi32>
    %186 = arith.cmpi sge, %138, %185 : vector<1x256xi32>
    %c63_i32_45 = arith.constant 63 : i32
    %187 = vector.broadcast %c63_i32_45 : i32 to vector<1x256xi32>
    %188 = arith.cmpi slt, %138, %187 : vector<1x256xi32>
    %189 = arith.andi %186, %188 : vector<1x256xi1>
    %cst_46 = arith.constant 0.000000e+00 : f32
    %190 = vector.shape_cast %189 : vector<1x256xi1> to vector<1x256xi1>
    %191 = vector.broadcast %190 : vector<1x256xi1> to vector<8x256xi1>
    %192 = vector.broadcast %cst_46 : f32 to vector<8x256xf32>
    %193 = arith.select %191, %184, %192 : vector<8x256xi1>, vector<8x256xf32>
    %194 = tpu.concatenate %181, %168, %193, %137 in 0 : vector<8x256xf32>, vector<8x256xf32>, vector<8x256xf32>, vector<1x256xf32> -> vector<25x256xf32>
    %195 = arith.truncf %194 : vector<25x256xf32> to vector<25x256xbf16>
    %cst_47 = arith.constant dense<0.000000e+00> : vector<8x256xf32>
    %196 = tpu.matmul %169, %195, %cst_47 {dimension_numbers = #tpu.dot_dimension_numbers<[1], [0], [0], [1], [0, 0, 1, 1], [], []>} : vector<8x25xbf16>, vector<25x256xbf16>, vector<8x256xf32> -> vector<8x256xf32>
    %cst_48 = arith.constant 0.000000e+00 : f32
    %197 = vector.broadcast %cst_48 : f32 to vector<8x256xf32>
    %198 = arith.maximumf %196, %197 : vector<8x256xf32>
    %c0_49 = arith.constant 0 : index
    %c0_50 = arith.constant 0 : index
    %199 = vector.load %arg10[%c0_49, %c0_50] : memref<256x128xf32, #tpu.memory_space<vmem>>, vector<256x128xf32>
    %200 = vector.extract_strided_slice %198 {offsets = [0, 1], sizes = [8, 255], strides = [1, 1]} : vector<8x256xf32> to vector<8x255xf32>
    %201 = vector.extract_strided_slice %198 {offsets = [0, 0], sizes = [8, 1], strides = [1, 1]} : vector<8x256xf32> to vector<8x1xf32>
    %202 = tpu.concatenate %200, %201 in 1 : vector<8x255xf32>, vector<8x1xf32> -> vector<8x256xf32>
    %203 = arith.maximumf %198, %202 : vector<8x256xf32>
    %cst_51 = arith.constant dense<0.000000e+00> : vector<8x128xf32>
    %204 = tpu.matmul %203, %199, %cst_51 {dimension_numbers = #tpu.dot_dimension_numbers<[1], [0], [0], [1], [0, 0, 1, 1], [], []>} : vector<8x256xf32>, vector<256x128xf32>, vector<8x128xf32> -> vector<8x128xf32>
    %c0_52 = arith.constant 0 : index
    %c0_53 = arith.constant 0 : index
    %205 = vector.load %arg11[%c0_52, %c0_53] : memref<8x128xf32, #tpu.memory_space<vmem>>, vector<8x128xf32>
    tpu.vector_store %arg11[%c0_52, %c0_53], %204 {strides = array<i32>} : memref<8x128xf32, #tpu.memory_space<vmem>>, vector<8x128xf32>,
    return
  }
  func.func @transform_0(%arg0: i32) -> (i32, i32) {
    %c0_i32 = arith.constant 0 : i32
    %c0_i32_0 = arith.constant 0 : i32
    return %c0_i32, %arg0 : i32, i32
  }
  func.func @transform_1(%arg0: i32) -> (i32, i32) {
    %c0_i32 = arith.constant 0 : i32
    %c0_i32_0 = arith.constant 0 : i32
    %c0_i32_1 = arith.constant 0 : i32
    return %c0_i32, %c0_i32_0 : i32, i32
  }
  func.func @transform_2(%arg0: i32) -> (i32, i32) {
    %c0_i32 = arith.constant 0 : i32
    %c0_i32_0 = arith.constant 0 : i32
    %c0_i32_1 = arith.constant 0 : i32
    return %c0_i32, %c0_i32_0 : i32, i32
  }
  func.func @transform_3(%arg0: i32) -> (i32, i32) {
    %c0_i32 = arith.constant 0 : i32
    %c0_i32_0 = arith.constant 0 : i32
    %c0_i32_1 = arith.constant 0 : i32
    return %c0_i32, %c0_i32_0 : i32, i32
  }
  func.func @transform_4(%arg0: i32) -> (i32, i32) {
    %c0_i32 = arith.constant 0 : i32
    %c0_i32_0 = arith.constant 0 : i32
    %c0_i32_1 = arith.constant 0 : i32
    return %c0_i32, %c0_i32_0 : i32, i32
  }
  func.func @transform_5(%arg0: i32) -> (i32, i32) {
    %c0_i32 = arith.constant 0 : i32
    %c0_i32_0 = arith.constant 0 : i32
    %c0_i32_1 = arith.constant 0 : i32
    return %c0_i32, %c0_i32_0 : i32, i32
  }
  func.func @transform_6(%arg0: i32) -> (i32, i32) {
    %c0_i32 = arith.constant 0 : i32
    %c0_i32_0 = arith.constant 0 : i32
    %c0_i32_1 = arith.constant 0 : i32
    return %c0_i32, %c0_i32_0 : i32, i32
  }
  func.func @transform_7(%arg0: i32) -> (i32, i32) {
    %c0_i32 = arith.constant 0 : i32
    %c0_i32_0 = arith.constant 0 : i32
    %c0_i32_1 = arith.constant 0 : i32
    return %c0_i32, %c0_i32_0 : i32, i32
  }
  func.func @transform_8(%arg0: i32) -> (i32, i32) {
    %c0_i32 = arith.constant 0 : i32
    %c0_i32_0 = arith.constant 0 : i32
    %c0_i32_1 = arith.constant 0 : i32
    return %c0_i32, %c0_i32_0 : i32, i32
  }
  func.func @transform_9(%arg0: i32) -> (i32, i32) {
    %c0_i32 = arith.constant 0 : i32
    %c0_i32_0 = arith.constant 0 : i32
    %c0_i32_1 = arith.constant 0 : i32
    return %c0_i32, %c0_i32_0 : i32, i32
  }
  func.func @transform_10(%arg0: i32) -> (i32, i32) {
    %c0_i32 = arith.constant 0 : i32
    %c0_i32_0 = arith.constant 0 : i32
    return %c0_i32, %arg0 : i32, i32
  }
}

</mosaic_0001>

<llo_original>
// kernel: tpu_custom_call.1
$region0: #{tpu_custom_call.1}
  #allocation0 [shape = 'u32[]', space=smem, size = 0x4, offset = 0x4, fixed_abs, tag = 'smem constant byte address 0x4 - core index']
  #allocation1 [shape = 'u32[144,128]{1,0:T(1,128)}', space=vmem, size = 0x12000, scoped, tag = 'internal scratch']
  %s0 = inlined_call_operand.hbm [shape: f32[8,128], index: 0, kind: input, shape index: {}]
  %s1 = inlined_call_operand.hbm [shape: f32[8,128], index: 1, kind: output, shape index: {}]
  %s2 = sld [smem:[#allocation0]]
  $region18: #{tpu_custom_call.1} parent=0
    _
  %s4 = ssub.s32 1, %s2
  %s5 = scalar_select 0, %s4, %s2
  $region1: #{tpu_custom_call.1} parent=0
    #allocation2 [shape = 'u8[4096]{0}', space=vmem, size = 0x1000, scoped, tag = 'input window, operand 0, single buffered']
    #allocation3 [shape = 's32[1]{0}', space=sflag, size = 0x4, scoped, tag = 'scoped memory for tpu_custom_call.1']
    #allocation4 [shape = 's32[1]{0}', space=sflag, size = 0x4, scoped, tag = 'scoped memory for tpu_custom_call.1']
    #allocation5 [shape = 'u8[4096]{0}', space=vmem, size = 0x1000, scoped, tag = 'output window, operand 0, single buffered']
    %6 = vsyncpa [#allocation3], 0
    %7 = vsyncpa [#allocation4], 0
    // Predicated region
    $region2: #{tpu_custom_call.1} parent=1 // pred_check
      _
    $region3: #{tpu_custom_call.1} parent=1 // pred_check_branch
      %9 = sbr.rel (0) target = $region5
    $region4: #{tpu_custom_call.1} parent=1 // pred_region
      %s11 = ssub.s32 128, 128
      %12 = vsyncadd [#allocation3], %s11
      %s14 = sshll.u32 [#allocation2], 4
      %s15 = int_to_ptr.vmem [resolvable:$true] %s14
      %17 = dma.hbm_to_vmem [thread:$0]  %s0, 128, %s15, [#allocation3]
    $region5: #{tpu_custom_call.1} parent=1 // pred_fallthru
      _
    // Predicated region
    $region6: #{tpu_custom_call.1} parent=1 // pred_check
      _
    $region7: #{tpu_custom_call.1} parent=1 // pred_check_branch
      %19 = sbr.rel (0) target = $region9
    $region8: #{tpu_custom_call.1} parent=1 // pred_region
      %20 = dma.done [#allocation3], 128
    $region9: #{tpu_custom_call.1} parent=1 // pred_fallthru
      _
    %v21 = vld [vmem:[#allocation2] sm:$0xff]
    %22 = vrot.lane.b32.xlu0 %v21, 1
    %v23 = vpop.permute.xlu0 %22
    %24 = vst [vmem:[#allocation5] sm:$0xff] %v23
    // Predicated region
    $region10: #{tpu_custom_call.1} parent=1 // pred_check
      _
    $region11: #{tpu_custom_call.1} parent=1 // pred_check_branch
      %26 = sbr.rel (0) target = $region13
    $region12: #{tpu_custom_call.1} parent=1 // pred_region
      %s28 = ssub.s32 128, 128
      %29 = vsyncadd [#allocation4], %s28
      %s31 = sshll.u32 [#allocation5], 4
      %s32 = int_to_ptr.vmem [resolvable:$true] %s31
      %34 = dma.vmem_to_hbm [thread:$0]  %s32, 128, %s1, [#allocation4]
    $region13: #{tpu_custom_call.1} parent=1 // pred_fallthru
      _
    // Predicated region
    $region14: #{tpu_custom_call.1} parent=1 // pred_check
      _
    $region15: #{tpu_custom_call.1} parent=1 // pred_check_branch
      %36 = sbr.rel (0) target = $region17
    $region16: #{tpu_custom_call.1} parent=1 // pred_region
      %37 = dma.done [#allocation4], 128
    $region17: #{tpu_custom_call.1} parent=1 // pred_fallthru
      _
    %38 = vsyncpa [#allocation3], 1
    %39 = vsyncpa [#allocation4], 1

// kernel: fwd.3
$region0: #{fwd.3}
  #allocation0 [shape = 'u32[]', space=smem, size = 0x4, offset = 0x4, fixed_abs, tag = 'smem constant byte address 0x4 - core index']
  #allocation1 [shape = 'u32[144,128]{1,0:T(1,128)}', space=vmem, size = 0x12000, scoped, tag = 'internal scratch']
  %s0 = inlined_call_operand.vmem [shape: f32[8,256], index: 0, kind: input, shape index: {}]
  %s1 = inlined_call_operand.vmem [shape: bf16[256,64], index: 1, kind: input, shape index: {}]
  %s2 = inlined_call_operand.vmem [shape: bf16[64,32], index: 2, kind: input, shape index: {}]
  %s3 = inlined_call_operand.vmem [shape: bf16[32,5], index: 3, kind: input, shape index: {}]
  %s4 = inlined_call_operand.vmem [shape: f32[1,101], index: 4, kind: input, shape index: {}]
  %s5 = inlined_call_operand.hbm [shape: f32[8,5], index: 5, kind: output, shape index: {}]
  %s6 = sld [smem:[#allocation0]]
  $region30: #{fwd.3} parent=0
    _
  %s8 = ssub.s32 1, %s6
  %s9 = scalar_select 0, %s8, %s6
  $region1: #{fwd.3} parent=0
    #allocation2 [shape = 'u8[4096]{0}', space=vmem, size = 0x1000, scoped, tag = 'output window, operand 0, single buffered']
    #allocation3 [shape = 's32[1]{0}', space=sflag, size = 0x4, scoped, tag = 'scoped memory for fwd.3']
    %10 = vsyncpa [#allocation3], 0
    // Predicated region
    $region2: #{fwd.3} parent=1 // pred_check
      _
    $region3: #{fwd.3} parent=1 // pred_check_branch
      %12 = sbr.rel (0) target = $region5
    $region4: #{fwd.3} parent=1 // pred_region
      _
    $region5: #{fwd.3} parent=1 // pred_fallthru
      _
    // Predicated region
    $region6: #{fwd.3} parent=1 // pred_check
      _
    $region7: #{fwd.3} parent=1 // pred_check_branch
      %14 = sbr.rel (0) target = $region9
    $region8: #{fwd.3} parent=1 // pred_region
      _
    $region9: #{fwd.3} parent=1 // pred_fallthru
      _
    // Predicated region
    $region10: #{fwd.3} parent=1 // pred_check
      _
    $region11: #{fwd.3} parent=1 // pred_check_branch
      %16 = sbr.rel (0) target = $region13
    $region12: #{fwd.3} parent=1 // pred_region
      _
    $region13: #{fwd.3} parent=1 // pred_fallthru
      _
    // Predicated region
    $region14: #{fwd.3} parent=1 // pred_check
      _
    $region15: #{fwd.3} parent=1 // pred_check_branch
      %18 = sbr.rel (0) target = $region17
    $region16: #{fwd.3} parent=1 // pred_region
      _
    $region17: #{fwd.3} parent=1 // pred_fallthru
      _
    // Predicated region
    $region18: #{fwd.3} parent=1 // pred_check
      _
    $region19: #{fwd.3} parent=1 // pred_check_branch
      %20 = sbr.rel (0) target = $region21
    $region20: #{fwd.3} parent=1 // pred_region
      _
    $region21: #{fwd.3} parent=1 // pred_fallthru
      _
    %v22 = vld [vmem:[%s0] sm:$0xff]
    %v23 = vld [vmem:[%s0 + $0x8] sm:$0xff]
    %v24 = vld [vmem:[%s1] sm:$0xf]
    %v25 = vld [vmem:[%s1 + $0x4] sm:$0xf]
    %v26 = vld [vmem:[%s1 + $0x8] sm:$0xf]
    %v27 = vld [vmem:[%s1 + $0xc] sm:$0xf]
    %v28 = vld [vmem:[%s1 + $0x10] sm:$0xf]
    %v29 = vld [vmem:[%s1 + $0x14] sm:$0xf]
    %v30 = vld [vmem:[%s1 + $0x18] sm:$0xf]
    %v31 = vld [vmem:[%s1 + $0x1c] sm:$0xf]
    %v32 = vld [vmem:[%s1 + $0x20] sm:$0xf]
    %v33 = vld [vmem:[%s1 + $0x24] sm:$0xf]
    %v34 = vld [vmem:[%s1 + $0x28] sm:$0xf]
    %v35 = vld [vmem:[%s1 + $0x2c] sm:$0xf]
    %v36 = vld [vmem:[%s1 + $0x30] sm:$0xf]
    %v37 = vld [vmem:[%s1 + $0x34] sm:$0xf]
    %v38 = vld [vmem:[%s1 + $0x38] sm:$0xf]
    %v39 = vld [vmem:[%s1 + $0x3c] sm:$0xf]
    %v40 = vld [vmem:[%s1 + $0x40] sm:$0xf]
    %v41 = vld [vmem:[%s1 + $0x44] sm:$0xf]
    %v42 = vld [vmem:[%s1 + $0x48] sm:$0xf]
    %v43 = vld [vmem:[%s1 + $0x4c] sm:$0xf]
    %v44 = vld [vmem:[%s1 + $0x50] sm:$0xf]
    %v45 = vld [vmem:[%s1 + $0x54] sm:$0xf]
    %v46 = vld [vmem:[%s1 + $0x58] sm:$0xf]
    %v47 = vld [vmem:[%s1 + $0x5c] sm:$0xf]
    %v48 = vld [vmem:[%s1 + $0x60] sm:$0xf]
    %v49 = vld [vmem:[%s1 + $0x64] sm:$0xf]
    %v50 = vld [vmem:[%s1 + $0x68] sm:$0xf]
    %v51 = vld [vmem:[%s1 + $0x6c] sm:$0xf]
    %v52 = vld [vmem:[%s1 + $0x70] sm:$0xf]
    %v53 = vld [vmem:[%s1 + $0x74] sm:$0xf]
    %v54 = vld [vmem:[%s1 + $0x78] sm:$0xf]
    %v55 = vld [vmem:[%s1 + $0x7c] sm:$0xf]
    %v56 = vpack.c.bf16 %v22, %v22
    %v57 = vpack.c.bf16 %v23, %v23
    %v58 = vld [vmem:[%s4] sm:$0x1]
    %v60 = vlaneseq
    %v61 = vshrl.u32 %v60, 7
    %v62 = vsub.s32 0, %v61
    %v63 = vrot.slane %v58, %v62
    %v97 = vunpack.c.l.b16 %v24
    %v98 = vunpack.c.l.b16 %v25
    %v99 = vunpack.c.l.b16 %v26
    %v100 = vunpack.c.l.b16 %v27
    %v101 = vunpack.c.l.b16 %v28
    %v102 = vunpack.c.l.b16 %v29
    %v103 = vunpack.c.l.b16 %v30
    %v104 = vunpack.c.l.b16 %v31
    %v105 = vunpack.c.l.b16 %v32
    %v106 = vunpack.c.l.b16 %v33
    %v107 = vunpack.c.l.b16 %v34
    %v108 = vunpack.c.l.b16 %v35
    %v109 = vunpack.c.l.b16 %v36
    %v110 = vunpack.c.l.b16 %v37
    %v111 = vunpack.c.l.b16 %v38
    %v112 = vunpack.c.l.b16 %v39
    %v113 = vunpack.c.l.b16 %v40
    %v114 = vunpack.c.l.b16 %v41
    %v115 = vunpack.c.l.b16 %v42
    %v116 = vunpack.c.l.b16 %v43
    %v117 = vunpack.c.l.b16 %v44
    %v118 = vunpack.c.l.b16 %v45
    %v119 = vunpack.c.l.b16 %v46
    %v120 = vunpack.c.l.b16 %v47
    %v121 = vunpack.c.l.b16 %v48
    %v122 = vunpack.c.l.b16 %v49
    %v123 = vunpack.c.l.b16 %v50
    %v124 = vunpack.c.l.b16 %v51
    %v125 = vunpack.c.l.b16 %v52
    %v126 = vunpack.c.l.b16 %v53
    %v127 = vunpack.c.l.b16 %v54
    %v128 = vunpack.c.l.b16 %v55
    %v129 = vpack.c.b16 %v98, %v97
    %v130 = vpack.c.b16 %v100, %v99
    %v131 = vpack.c.b16 %v102, %v101
    %v132 = vpack.c.b16 %v104, %v103
    %v133 = vpack.c.b16 %v106, %v105
    %v134 = vpack.c.b16 %v108, %v107
    %v135 = vpack.c.b16 %v110, %v109
    %v136 = vpack.c.b16 %v112, %v111
    %v137 = vpack.c.b16 %v114, %v113
    %v138 = vpack.c.b16 %v116, %v115
    %v139 = vpack.c.b16 %v118, %v117
    %v140 = vpack.c.b16 %v120, %v119
    %v141 = vpack.c.b16 %v122, %v121
    %v142 = vpack.c.b16 %v124, %v123
    %v143 = vpack.c.b16 %v126, %v125
    %v144 = vpack.c.b16 %v128, %v127
    %161 = vmatprep.subr.bf16.mxu0 0
    %162 = vmatpush1.bf16.msra.mxu0 %v136
    %163 = vmatprep.subr.bf16.mxu0 0
    %164 = vmatpush1.bf16.msra.mxu0 %v135
    %165 = vmatprep.subr.bf16.mxu0 0
    %166 = vmatpush1.bf16.msra.mxu0 %v134
    %167 = vmatprep.subr.bf16.mxu0 0
    %168 = vmatpush1.bf16.msra.mxu0 %v133
    %169 = vmatprep.subr.bf16.mxu0 0
    %170 = vmatpush1.bf16.msra.mxu0 %v132
    %171 = vmatprep.subr.bf16.mxu0 0
    %172 = vmatpush1.bf16.msra.mxu0 %v131
    %173 = vmatprep.subr.bf16.mxu0 0
    %174 = vmatpush1.bf16.msra.mxu0 %v130
    %175 = vmatprep.subr.bf16.mxu0 0
    %176 = vmatpush1.bf16.msra.mxu0 %v129
    %177 = vmatprep.subr.bf16.mxu0 0
    %178 = vmatpush2.bf16.msra.mxu0 %v144
    %179 = vmatprep.subr.bf16.mxu0 0
    %180 = vmatpush2.bf16.msra.mxu0 %v143
    %181 = vmatprep.subr.bf16.mxu0 0
    %182 = vmatpush2.bf16.msra.mxu0 %v142
    %183 = vmatprep.subr.bf16.mxu0 0
    %184 = vmatpush2.bf16.msra.mxu0 %v141
    %185 = vmatprep.subr.bf16.mxu0 0
    %186 = vmatpush2.bf16.msra.mxu0 %v140
    %187 = vmatprep.subr.bf16.mxu0 0
    %188 = vmatpush2.bf16.msra.mxu0 %v139
    %189 = vmatprep.subr.bf16.mxu0 0
    %190 = vmatpush2.bf16.msra.mxu0 %v138
    %191 = vmatprep.subr.bf16.mxu0 0
    %192 = vmatpush2.bf16.msra.mxu0 %v137
    %193 = vmatprep.mubr.bf16.mxu0 %v57
    %194 = vmatmul.mubr.bf16.gmra.mxu0 %v56
    %v195 = vpop.f32.mrf.mxu0
    %v196 = vadd.f32 %v63, %v195
    %v197 = vpop.f32.mrf.mxu0
    %v198 = vpop.f32.mrf.mxu0
    %v199 = vpop.f32.mrf.mxu0
    %200 = vdwg.mxu0
    %v201 = vmax.f32 %v196, 0.0
    %v202 = vld [vmem:[%s2] sm:$0xf]
    %v203 = vld [vmem:[%s2 + $0x4] sm:$0xf]
    %v204 = vld [vmem:[%s2 + $0x8] sm:$0xf]
    %v205 = vld [vmem:[%s2 + $0xc] sm:$0xf]
    %v206 = vld [vmem:[%s2 + $0x10] sm:$0xf]
    %v207 = vld [vmem:[%s2 + $0x14] sm:$0xf]
    %v208 = vld [vmem:[%s2 + $0x18] sm:$0xf]
    %v209 = vld [vmem:[%s2 + $0x1c] sm:$0xf]
    %v210 = vpack.c.bf16 %v201, %v201
    %v219 = vunpack.c.l.b16 %v202
    %v220 = vunpack.c.l.b16 %v203
    %v221 = vunpack.c.l.b16 %v204
    %v222 = vunpack.c.l.b16 %v205
    %v223 = vunpack.c.l.b16 %v206
    %v224 = vunpack.c.l.b16 %v207
    %v225 = vunpack.c.l.b16 %v208
    %v226 = vunpack.c.l.b16 %v209
    %v227 = vpack.c.b16 %v220, %v219
    %v228 = vpack.c.b16 %v222, %v221
    %v229 = vpack.c.b16 %v224, %v223
    %v230 = vpack.c.b16 %v226, %v225
    %235 = vrot.lane.b32.xlu0 %v63, 64
    %v236 = vpop.permute.xlu0 %235
    %vm238 = vcmask 523264
    %v240 = vsel %vm238, %v210, 0
    %242 = vmatprep.subr.bf16.mxu0 0
    %243 = vmatpush1.bf16.msra.mxu0 0
    %244 = vmatprep.subr.bf16.mxu0 0
    %245 = vmatpush1.bf16.msra.mxu0 0
    %246 = vmatprep.subr.bf16.mxu0 0
    %247 = vmatpush1.bf16.msra.mxu0 0
    %248 = vmatprep.subr.bf16.mxu0 0
    %249 = vmatpush1.bf16.msra.mxu0 0
    %250 = vmatprep.subr.bf16.mxu0 0
    %251 = vmatpush1.bf16.msra.mxu0 %v230
    %252 = vmatprep.subr.bf16.mxu0 0
    %253 = vmatpush1.bf16.msra.mxu0 %v229
    %254 = vmatprep.subr.bf16.mxu0 0
    %255 = vmatpush1.bf16.msra.mxu0 %v228
    %256 = vmatprep.subr.bf16.mxu0 0
    %257 = vmatpush1.bf16.msra.mxu0 %v227
    %258 = vmatprep.subr.bf16.mxu0 0
    %259 = vmatpush2.bf16.msra.mxu0 0
    %260 = vmatprep.subr.bf16.mxu0 0
    %261 = vmatpush2.bf16.msra.mxu0 0
    %262 = vmatprep.subr.bf16.mxu0 0
    %263 = vmatpush2.bf16.msra.mxu0 0
    %264 = vmatprep.subr.bf16.mxu0 0
    %265 = vmatpush2.bf16.msra.mxu0 0
    %266 = vmatprep.subr.bf16.mxu0 0
    %267 = vmatpush2.bf16.msra.mxu0 0
    %268 = vmatprep.subr.bf16.mxu0 0
    %269 = vmatpush2.bf16.msra.mxu0 0
    %270 = vmatprep.subr.bf16.mxu0 0
    %271 = vmatpush2.bf16.msra.mxu0 0
    %272 = vmatprep.subr.bf16.mxu0 0
    %273 = vmatpush2.bf16.msra.mxu0 0
    %274 = vmatprep.mubr.bf16.mxu0 0
    %275 = vmatmul.mubr.bf16.gmra.mxu0 %v240
    %v276 = vpop.f32.mrf.mxu0
    %v277 = vadd.f32 %v236, %v276
    %v278 = vpop.f32.mrf.mxu0
    %v279 = vpop.f32.mrf.mxu0
    %v280 = vpop.f32.mrf.mxu0
    %281 = vdwg.mxu0
    %v282 = vmax.f32 %v277, 0.0
    %v283 = vld [vmem:[%s3] sm:$0xf]
    %v284 = vld [vmem:[%s3 + $0x4] sm:$0xf]
    %v285 = vld [vmem:[%s3 + $0x8] sm:$0xf]
    %v286 = vld [vmem:[%s3 + $0xc] sm:$0xf]
    %v287 = vpack.c.bf16 %v282, %v282
    %v292 = vunpack.c.l.b16 %v283
    %v293 = vunpack.c.l.b16 %v284
    %v294 = vunpack.c.l.b16 %v285
    %v295 = vunpack.c.l.b16 %v286
    %v296 = vpack.c.b16 %v293, %v292
    %v297 = vpack.c.b16 %v295, %v294
    %300 = vrot.lane.b32.xlu0 %v63, 32
    %v301 = vpop.permute.xlu0 %300
    %vm303 = vcmask 261120
    %v305 = vsel %vm303, %v287, 0
    %307 = vmatprep.subr.bf16.mxu0 0
    %308 = vmatpush1.bf16.msra.mxu0 0
    %309 = vmatprep.subr.bf16.mxu0 0
    %310 = vmatpush1.bf16.msra.mxu0 0
    %311 = vmatprep.subr.bf16.mxu0 0
    %312 = vmatpush1.bf16.msra.mxu0 0
    %313 = vmatprep.subr.bf16.mxu0 0
    %314 = vmatpush1.bf16.msra.mxu0 0
    %315 = vmatprep.subr.bf16.mxu0 0
    %316 = vmatpush1.bf16.msra.mxu0 0
    %317 = vmatprep.subr.bf16.mxu0 0
    %318 = vmatpush1.bf16.msra.mxu0 0
    %319 = vmatprep.subr.bf16.mxu0 0
    %320 = vmatpush1.bf16.msra.mxu0 %v297
    %321 = vmatprep.subr.bf16.mxu0 0
    %322 = vmatpush1.bf16.msra.mxu0 %v296
    %323 = vmatprep.subr.bf16.mxu0 0
    %324 = vmatpush2.bf16.msra.mxu0 0
    %325 = vmatprep.subr.bf16.mxu0 0
    %326 = vmatpush2.bf16.msra.mxu0 0
    %327 = vmatprep.subr.bf16.mxu0 0
    %328 = vmatpush2.bf16.msra.mxu0 0
    %329 = vmatprep.subr.bf16.mxu0 0
    %330 = vmatpush2.bf16.msra.mxu0 0
    %331 = vmatprep.subr.bf16.mxu0 0
    %332 = vmatpush2.bf16.msra.mxu0 0
    %333 = vmatprep.subr.bf16.mxu0 0
    %334 = vmatpush2.bf16.msra.mxu0 0
    %335 = vmatprep.subr.bf16.mxu0 0
    %336 = vmatpush2.bf16.msra.mxu0 0
    %337 = vmatprep.subr.bf16.mxu0 0
    %338 = vmatpush2.bf16.msra.mxu0 0
    %339 = vmatprep.mubr.bf16.mxu0 0
    %340 = vmatmul.mubr.bf16.gmra.mxu0 %v305
    %v341 = vpop.f32.mrf.mxu0
    %v342 = vadd.f32 %v301, %v341
    %v343 = vpop.f32.mrf.mxu0
    %v344 = vpop.f32.mrf.mxu0
    %v345 = vpop.f32.mrf.mxu0
    %346 = vdwg.mxu0
    %vm347 = vcmask 39936
    %348 = vst.msk [vmem:[#allocation2] sm:$0xff] %vm347, %v342
    // Predicated region
    $region22: #{fwd.3} parent=1 // pred_check
      _
    $region23: #{fwd.3} parent=1 // pred_check_branch
      %350 = sbr.rel (0) target = $region25
    $region24: #{fwd.3} parent=1 // pred_region
      %s352 = ssub.s32 128, 128
      %353 = vsyncadd [#allocation3], %s352
      %s355 = sshll.u32 [#allocation2], 4
      %s356 = int_to_ptr.vmem [resolvable:$true] %s355
      %358 = dma.vmem_to_hbm [thread:$0]  %s356, 128, %s5, [#allocation3]
    $region25: #{fwd.3} parent=1 // pred_fallthru
      _
    // Predicated region
    $region26: #{fwd.3} parent=1 // pred_check
      _
    $region27: #{fwd.3} parent=1 // pred_check_branch
      %360 = sbr.rel (0) target = $region29
    $region28: #{fwd.3} parent=1 // pred_region
      %361 = dma.done [#allocation3], 128
    $region29: #{fwd.3} parent=1 // pred_fallthru
      _
    %362 = vsyncpa [#allocation3], 1

// kernel: fwd.2
$region0: #{fwd.2}
  #allocation0 [shape = 'u32[]', space=smem, size = 0x4, offset = 0x4, fixed_abs, tag = 'smem constant byte address 0x4 - core index']
  #allocation1 [shape = 'u32[144,128]{1,0:T(1,128)}', space=vmem, size = 0x12000, scoped, tag = 'internal scratch']
  %s0 = inlined_call_operand.hbm [shape: f32[1,1024], index: 0, kind: input, shape index: {}]
  %s1 = inlined_call_operand.hbm [shape: bf16[4,4], index: 1, kind: input, shape index: {}]
  %s2 = inlined_call_operand.hbm [shape: bf16[4,13], index: 2, kind: input, shape index: {}]
  %s3 = inlined_call_operand.vmem [shape: bf16[12,29], index: 3, kind: input, shape index: {}]
  %s4 = inlined_call_operand.hbm [shape: bf16[8,37], index: 4, kind: input, shape index: {}]
  %s5 = inlined_call_operand.vmem [shape: bf16[8,25], index: 5, kind: input, shape index: {}]
  %s6 = inlined_call_operand.vmem [shape: s32[1,512], index: 6, kind: input, shape index: {}]
  %s7 = inlined_call_operand.vmem [shape: s32[1,256], index: 7, kind: input, shape index: {}]
  %s8 = inlined_call_operand.hbm [shape: f32[512,256], index: 8, kind: input, shape index: {}]
  %s9 = inlined_call_operand.hbm [shape: f32[256,128], index: 9, kind: input, shape index: {}]
  %s10 = inlined_call_operand.vmem [shape: f32[8,256], index: 10, kind: output, shape index: {}]
  %s11 = sld [smem:[#allocation0]]
  $region97: #{fwd.2} parent=0
    _
  %s13 = ssub.s32 1, %s11
  %s14 = scalar_select 0, %s13, %s11
  $region1: #{fwd.2} parent=0
    #allocation2 [shape = 'u8[4096]{0}', space=vmem, size = 0x1000, scoped, tag = 'input window, operand 0']
    #allocation3 [shape = 's32[2]{0}', space=sflag, size = 0x8, scoped, tag = 'scoped memory for fwd.2']
    #allocation4 [shape = 'u8[1024]{0}', space=vmem, size = 0x400, scoped, tag = 'input window, operand 1, single buffered']
    #allocation5 [shape = 's32[1]{0}', space=sflag, size = 0x4, scoped, tag = 'scoped memory for fwd.2']
    #allocation6 [shape = 'u8[1024]{0}', space=vmem, size = 0x400, scoped, tag = 'input window, operand 2, single buffered']
    #allocation7 [shape = 'u8[2048]{0}', space=vmem, size = 0x800, scoped, tag = 'input window, operand 4, single buffered']
    #allocation8 [shape = 's32[1]{0}', space=sflag, size = 0x4, scoped, tag = 'scoped memory for fwd.2']
    #allocation9 [shape = 'u8[524288]{0}', space=vmem, size = 0x80000, scoped, tag = 'input window, operand 8, single buffered']
    #allocation10 [shape = 'u8[131072]{0}', space=vmem, size = 0x20000, scoped, tag = 'input window, operand 9, single buffered']
    #allocation11 [shape = 's32[1]{0}', space=sflag, size = 0x4, scoped, tag = 'scoped memory for fwd.2']
    %15 = vsyncpa [#allocation3], 0
    %s16 = scalar_lea.sflag [#allocation3], 1
    %17 = vsyncpa %s16, 0
    %18 = vsyncpa [#allocation5], 0
    %19 = vsyncpa [#allocation8], 0
    %20 = vsyncpa [#allocation11], 0
    loop: start=0, step=1, limit=4
    $region2: #{fwd.2} parent=1 // loop_pre_header
      _
    $region3: #{fwd.2} parent=1 // loop_header
      %s22 = sphi 0, %s26
      %p23 = scmp.ge.s32.totalorder %s22, 4
      %s32 = sphi 0, %s34
      %s35 = sphi 0, %s32
      %s36 = sphi 0, %s35
      %s52 = sphi 0, %s36
      %s56 = sphi 0, %s56
      %s58 = sphi 0, %s56
      %s59 = sphi 0, %s58
      %s73 = sphi 0, %s59
      %s77 = sphi 0, %s77
      %s79 = sphi 0, %s77
      %s80 = sphi 0, %s79
      %s94 = sphi 0, %s80
      %s98 = sphi 0, %s98
      %s100 = sphi 0, %s98
      %s101 = sphi 0, %s100
      %s115 = sphi 0, %s101
      %s119 = sphi 0, %s119
      %s121 = sphi 0, %s119
      %s122 = sphi 0, %s121
      %s136 = sphi 0, %s122
      %s140 = sphi 0, %s140
      %s142 = sphi 0, %s140
      %s143 = sphi 0, %s142
      %s157 = sphi 0, %s143
      %s161 = sphi 0, %s161
      %s163 = sphi 0, %s161
      %s164 = sphi 0, %s163
      %s178 = sphi 0, %s164
      %s182 = sphi 0, %s182
      %s184 = sphi 0, %s182
      %s185 = sphi 0, %s184
      %s199 = sphi 0, %s185
      %s203 = sphi 0, %s203
      %s205 = sphi 0, %s203
      %s206 = sphi 0, %s205
      %s220 = sphi 0, %s206
      %s224 = sphi 0, %s224
      %s226 = sphi 0, %s224
      %s227 = sphi 0, %s226
      %s241 = sphi 0, %s227
      %s247 = sphi 0, %s249
      %s250 = sphi 0, %s247
      %s251 = sphi 0, %s250
      %s267 = sphi 0, %s251
    $region4: #{fwd.2} parent=1 // loop_header_branch
      %25 = sbr.rel (%p23) target = $region8
    $region5: #{fwd.2} parent=1 // loop_body
      %s27 = ssub.s32 %s22, 1
      %s28 = ssub.s32 %s22, 2
      %s29 = sadd.s32 %s22, 1
      %s30 = ssub.s32 %s22, %s29
      %p31 = scmp.eq.s32.totalorder %s30, 0
      %s33 = sadd.s32 %s32, 1
      %s34 = scalar_select %p31, %s32, %s33
      %p37 = pneg %p31
      %p38 = scmp.eq.s32.totalorder %s22, 1
      %p39 = por %p37, %p38
      %p40 = scmp.ne.s32.totalorder %s32, %s35
      %p41 = scmp.eq.s32.totalorder %s22, 0
      %p42 = por %p40, %p41
      %p43 = scmp.ne.s32.totalorder %s32, %s35
      %p44 = scmp.eq.s32.totalorder %s27, 1
      %p45 = por %p43, %p44
      %p46 = scmp.ne.s32.totalorder %s35, %s36
      %p47 = scmp.eq.s32.totalorder %s27, 0
      %p48 = por %p46, %p47
      %p49 = scmp.ne.s32.totalorder %s35, %s36
      %p50 = scmp.eq.s32.totalorder %s28, 1
      %p51 = por %p49, %p50
      %p53 = scmp.ne.s32.totalorder %s36, %s52
      %p54 = scmp.eq.s32.totalorder %s28, 0
      %p55 = por %p53, %p54
      %s57 = sadd.s32 %s56, 1
      %p60 = scmp.eq.s32.totalorder %s22, 1
      %p61 = scmp.ne.s32.totalorder %s56, %s58
      %p62 = scmp.eq.s32.totalorder %s22, 0
      %p63 = por %p61, %p62
      %p64 = scmp.ne.s32.totalorder %s56, %s58
      %p65 = scmp.eq.s32.totalorder %s27, 1
      %p66 = por %p64, %p65
      %p67 = scmp.ne.s32.totalorder %s58, %s59
      %p68 = scmp.eq.s32.totalorder %s27, 0
      %p69 = por %p67, %p68
      %p70 = scmp.ne.s32.totalorder %s58, %s59
      %p71 = scmp.eq.s32.totalorder %s28, 1
      %p72 = por %p70, %p71
      %p74 = scmp.ne.s32.totalorder %s59, %s73
      %p75 = scmp.eq.s32.totalorder %s28, 0
      %p76 = por %p74, %p75
      %s78 = sadd.s32 %s77, 1
      %p81 = scmp.eq.s32.totalorder %s22, 1
      %p82 = scmp.ne.s32.totalorder %s77, %s79
      %p83 = scmp.eq.s32.totalorder %s22, 0
      %p84 = por %p82, %p83
      %p85 = scmp.ne.s32.totalorder %s77, %s79
      %p86 = scmp.eq.s32.totalorder %s27, 1
      %p87 = por %p85, %p86
      %p88 = scmp.ne.s32.totalorder %s79, %s80
      %p89 = scmp.eq.s32.totalorder %s27, 0
      %p90 = por %p88, %p89
      %p91 = scmp.ne.s32.totalorder %s79, %s80
      %p92 = scmp.eq.s32.totalorder %s28, 1
      %p93 = por %p91, %p92
      %p95 = scmp.ne.s32.totalorder %s80, %s94
      %p96 = scmp.eq.s32.totalorder %s28, 0
      %p97 = por %p95, %p96
      %s99 = sadd.s32 %s98, 1
      %p102 = scmp.eq.s32.totalorder %s22, 1
      %p103 = scmp.ne.s32.totalorder %s98, %s100
      %p104 = scmp.eq.s32.totalorder %s22, 0
      %p105 = por %p103, %p104
      %p106 = scmp.ne.s32.totalorder %s98, %s100
      %p107 = scmp.eq.s32.totalorder %s27, 1
      %p108 = por %p106, %p107
      %p109 = scmp.ne.s32.totalorder %s100, %s101
      %p110 = scmp.eq.s32.totalorder %s27, 0
      %p111 = por %p109, %p110
      %p112 = scmp.ne.s32.totalorder %s100, %s101
      %p113 = scmp.eq.s32.totalorder %s28, 1
      %p114 = por %p112, %p113
      %p116 = scmp.ne.s32.totalorder %s101, %s115
      %p117 = scmp.eq.s32.totalorder %s28, 0
      %p118 = por %p116, %p117
      %s120 = sadd.s32 %s119, 1
      %p123 = scmp.eq.s32.totalorder %s22, 1
      %p124 = scmp.ne.s32.totalorder %s119, %s121
      %p125 = scmp.eq.s32.totalorder %s22, 0
      %p126 = por %p124, %p125
      %p127 = scmp.ne.s32.totalorder %s119, %s121
      %p128 = scmp.eq.s32.totalorder %s27, 1
      %p129 = por %p127, %p128
      %p130 = scmp.ne.s32.totalorder %s121, %s122
      %p131 = scmp.eq.s32.totalorder %s27, 0
      %p132 = por %p130, %p131
      %p133 = scmp.ne.s32.totalorder %s121, %s122
      %p134 = scmp.eq.s32.totalorder %s28, 1
      %p135 = por %p133, %p134
      %p137 = scmp.ne.s32.totalorder %s122, %s136
      %p138 = scmp.eq.s32.totalorder %s28, 0
      %p139 = por %p137, %p138
      %s141 = sadd.s32 %s140, 1
      %p144 = scmp.eq.s32.totalorder %s22, 1
      %p145 = scmp.ne.s32.totalorder %s140, %s142
      %p146 = scmp.eq.s32.totalorder %s22, 0
      %p147 = por %p145, %p146
      %p148 = scmp.ne.s32.totalorder %s140, %s142
      %p149 = scmp.eq.s32.totalorder %s27, 1
      %p150 = por %p148, %p149
      %p151 = scmp.ne.s32.totalorder %s142, %s143
      %p152 = scmp.eq.s32.totalorder %s27, 0
      %p153 = por %p151, %p152
      %p154 = scmp.ne.s32.totalorder %s142, %s143
      %p155 = scmp.eq.s32.totalorder %s28, 1
      %p156 = por %p154, %p155
      %p158 = scmp.ne.s32.totalorder %s143, %s157
      %p159 = scmp.eq.s32.totalorder %s28, 0
      %p160 = por %p158, %p159
      %s162 = sadd.s32 %s161, 1
      %p165 = scmp.eq.s32.totalorder %s22, 1
      %p166 = scmp.ne.s32.totalorder %s161, %s163
      %p167 = scmp.eq.s32.totalorder %s22, 0
      %p168 = por %p166, %p167
      %p169 = scmp.ne.s32.totalorder %s161, %s163
      %p170 = scmp.eq.s32.totalorder %s27, 1
      %p171 = por %p169, %p170
      %p172 = scmp.ne.s32.totalorder %s163, %s164
      %p173 = scmp.eq.s32.totalorder %s27, 0
      %p174 = por %p172, %p173
      %p175 = scmp.ne.s32.totalorder %s163, %s164
      %p176 = scmp.eq.s32.totalorder %s28, 1
      %p177 = por %p175, %p176
      %p179 = scmp.ne.s32.totalorder %s164, %s178
      %p180 = scmp.eq.s32.totalorder %s28, 0
      %p181 = por %p179, %p180
      %s183 = sadd.s32 %s182, 1
      %p186 = scmp.eq.s32.totalorder %s22, 1
      %p187 = scmp.ne.s32.totalorder %s182, %s184
      %p188 = scmp.eq.s32.totalorder %s22, 0
      %p189 = por %p187, %p188
      %p190 = scmp.ne.s32.totalorder %s182, %s184
      %p191 = scmp.eq.s32.totalorder %s27, 1
      %p192 = por %p190, %p191
      %p193 = scmp.ne.s32.totalorder %s184, %s185
      %p194 = scmp.eq.s32.totalorder %s27, 0
      %p195 = por %p193, %p194
      %p196 = scmp.ne.s32.totalorder %s184, %s185
      %p197 = scmp.eq.s32.totalorder %s28, 1
      %p198 = por %p196, %p197
      %p200 = scmp.ne.s32.totalorder %s185, %s199
      %p201 = scmp.eq.s32.totalorder %s28, 0
      %p202 = por %p200, %p201
      %s204 = sadd.s32 %s203, 1
      %p207 = scmp.eq.s32.totalorder %s22, 1
      %p208 = scmp.ne.s32.totalorder %s203, %s205
      %p209 = scmp.eq.s32.totalorder %s22, 0
      %p210 = por %p208, %p209
      %p211 = scmp.ne.s32.totalorder %s203, %s205
      %p212 = scmp.eq.s32.totalorder %s27, 1
      %p213 = por %p211, %p212
      %p214 = scmp.ne.s32.totalorder %s205, %s206
      %p215 = scmp.eq.s32.totalorder %s27, 0
      %p216 = por %p214, %p215
      %p217 = scmp.ne.s32.totalorder %s205, %s206
      %p218 = scmp.eq.s32.totalorder %s28, 1
      %p219 = por %p217, %p218
      %p221 = scmp.ne.s32.totalorder %s206, %s220
      %p222 = scmp.eq.s32.totalorder %s28, 0
      %p223 = por %p221, %p222
      %s225 = sadd.s32 %s224, 1
      %p228 = scmp.eq.s32.totalorder %s22, 1
      %p229 = scmp.ne.s32.totalorder %s224, %s226
      %p230 = scmp.eq.s32.totalorder %s22, 0
      %p231 = por %p229, %p230
      %p232 = scmp.ne.s32.totalorder %s224, %s226
      %p233 = scmp.eq.s32.totalorder %s27, 1
      %p234 = por %p232, %p233
      %p235 = scmp.ne.s32.totalorder %s226, %s227
      %p236 = scmp.eq.s32.totalorder %s27, 0
      %p237 = por %p235, %p236
      %p238 = scmp.ne.s32.totalorder %s226, %s227
      %p239 = scmp.eq.s32.totalorder %s28, 1
      %p240 = por %p238, %p239
      %p242 = scmp.ne.s32.totalorder %s227, %s241
      %p243 = scmp.eq.s32.totalorder %s28, 0
      %p244 = por %p242, %p243
      %s245 = ssub.s32 %s22, %s29
      %p246 = scmp.eq.s32.totalorder %s245, 0
      %s248 = sadd.s32 %s247, 1
      %s249 = scalar_select %p246, %s247, %s248
      %p252 = pneg %p246
      %p253 = scmp.eq.s32.totalorder %s22, 1
      %p254 = por %p252, %p253
      %p255 = scmp.ne.s32.totalorder %s247, %s250
      %p256 = scmp.eq.s32.totalorder %s22, 0
      %p257 = por %p255, %p256
      %p258 = scmp.ne.s32.totalorder %s247, %s250
      %p259 = scmp.eq.s32.totalorder %s27, 1
      %p260 = por %p258, %p259
      %p261 = scmp.ne.s32.totalorder %s250, %s251
      %p262 = scmp.eq.s32.totalorder %s27, 0
      %p263 = por %p261, %p262
      %p264 = scmp.ne.s32.totalorder %s250, %s251
      %p265 = scmp.eq.s32.totalorder %s28, 1
      %p266 = por %p264, %p265
      %p268 = scmp.ne.s32.totalorder %s251, %s267
      %p269 = scmp.eq.s32.totalorder %s28, 0
      %p270 = por %p268, %p269
      %p271 = scmp.le.s32.totalorder 1, %s22
      %p272 = scmp.lt.s32.totalorder %s22, 3
      %p273 = pnand %p271, %p272
      %p274 = pneg %p273
      // Predicated region
      $region9: #{fwd.2} parent=5 // pred_check
        _
      $region10: #{fwd.2} parent=5 // pred_check_branch
        %276 = sbr.rel (%p273) target = $region12
      $region11: #{fwd.2} parent=5 // pred_region
        %s277 = ssub.s32 %s22, 1
        // Predicated region
        $region13: #{fwd.2} parent=11 // pred_check
          %p278 = pneg %p69
        $region14: #{fwd.2} parent=11 // pred_check_branch
          %280 = sbr.rel (%p278) target = $region16
        $region15: #{fwd.2} parent=11 // pred_region
          %s282 = ssub.s32 32, 32
          %283 = vsyncadd [#allocation5], %s282
          %s285 = sshll.u32 [#allocation4], 4
          %s286 = int_to_ptr.vmem [resolvable:$true] %s285
          %288 = dma.hbm_to_vmem [thread:$0]  %s1, 32, %s286, [#allocation5]
        $region16: #{fwd.2} parent=11 // pred_fallthru
          _
        // Predicated region
        $region17: #{fwd.2} parent=11 // pred_check
          %p289 = pneg %p90
        $region18: #{fwd.2} parent=11 // pred_check_branch
          %291 = sbr.rel (%p289) target = $region20
        $region19: #{fwd.2} parent=11 // pred_region
          %s293 = ssub.s32 32, 32
          %294 = vsyncadd [#allocation5], %s293
          %s296 = sshll.u32 [#allocation6], 4
          %s297 = int_to_ptr.vmem [resolvable:$true] %s296
          %299 = dma.hbm_to_vmem [thread:$0]  %s2, 32, %s297, [#allocation5]
        $region20: #{fwd.2} parent=11 // pred_fallthru
          _
        // Predicated region
        $region21: #{fwd.2} parent=11 // pred_check
          %p300 = pneg %p111
        $region22: #{fwd.2} parent=11 // pred_check_branch
          %302 = sbr.rel (%p300) target = $region24
        $region23: #{fwd.2} parent=11 // pred_region
          _
        $region24: #{fwd.2} parent=11 // pred_fallthru
          _
        // Predicated region
        $region25: #{fwd.2} parent=11 // pred_check
          %p303 = pneg %p132
        $region26: #{fwd.2} parent=11 // pred_check_branch
          %305 = sbr.rel (%p303) target = $region28
        $region27: #{fwd.2} parent=11 // pred_region
          %s307 = ssub.s32 64, 64
          %308 = vsyncadd [#allocation8], %s307
          %s310 = sshll.u32 [#allocation7], 4
          %s311 = int_to_ptr.vmem [resolvable:$true] %s310
          %313 = dma.hbm_to_vmem [thread:$0]  %s4, 64, %s311, [#allocation8]
        $region28: #{fwd.2} parent=11 // pred_fallthru
          _
        // Predicated region
        $region29: #{fwd.2} parent=11 // pred_check
          %p314 = pneg %p153
        $region30: #{fwd.2} parent=11 // pred_check_branch
          %316 = sbr.rel (%p314) target = $region32
        $region31: #{fwd.2} parent=11 // pred_region
          _
        $region32: #{fwd.2} parent=11 // pred_fallthru
          _
        // Predicated region
        $region33: #{fwd.2} parent=11 // pred_check
          %p317 = pneg %p174
        $region34: #{fwd.2} parent=11 // pred_check_branch
          %319 = sbr.rel (%p317) target = $region36
        $region35: #{fwd.2} parent=11 // pred_region
          _
        $region36: #{fwd.2} parent=11 // pred_fallthru
          _
        // Predicated region
        $region37: #{fwd.2} parent=11 // pred_check
          %p320 = pneg %p195
        $region38: #{fwd.2} parent=11 // pred_check_branch
          %322 = sbr.rel (%p320) target = $region40
        $region39: #{fwd.2} parent=11 // pred_region
          _
        $region40: #{fwd.2} parent=11 // pred_fallthru
          _
        // Predicated region
        $region41: #{fwd.2} parent=11 // pred_check
          %p323 = pneg %p216
        $region42: #{fwd.2} parent=11 // pred_check_branch
          %325 = sbr.rel (%p323) target = $region44
        $region43: #{fwd.2} parent=11 // pred_region
          %s327 = ssub.s32 16384, 16384
          %328 = vsyncadd [#allocation8], %s327
          %s329 = sshll.u32 [#allocation9], 4
          %s330 = int_to_ptr.vmem [resolvable:$true] %s329
          %335 = dma.hbm_to_vmem [thread:$0]  %s8, 16384, %s330, [#allocation8], 256, 256, 16
        $region44: #{fwd.2} parent=11 // pred_fallthru
          _
        // Predicated region
        $region45: #{fwd.2} parent=11 // pred_check
          %p336 = pneg %p237
        $region46: #{fwd.2} parent=11 // pred_check_branch
          %338 = sbr.rel (%p336) target = $region48
        $region47: #{fwd.2} parent=11 // pred_region
          %s340 = ssub.s32 4096, 4096
          %341 = vsyncadd [#allocation11], %s340
          %s342 = sshll.u32 [#allocation10], 4
          %s343 = int_to_ptr.vmem [resolvable:$true] %s342
          %348 = dma.hbm_to_vmem [thread:$0]  %s9, 4096, %s343, [#allocation11], 128, 128, 8
        $region48: #{fwd.2} parent=11 // pred_fallthru
          _
      $region12: #{fwd.2} parent=5 // pred_fallthru
        _
      %p349 = scmp.lt.s32.totalorder %s22, 2
      // Predicated region
      $region49: #{fwd.2} parent=5 // pred_check
        %p350 = pneg %p349
      $region50: #{fwd.2} parent=5 // pred_check_branch
        %352 = sbr.rel (%p350) target = $region52
      $region51: #{fwd.2} parent=5 // pred_region
        // Predicated region
        $region53: #{fwd.2} parent=51 // pred_check
          %p353 = pneg %p42
        $region54: #{fwd.2} parent=51 // pred_check_branch
          %355 = sbr.rel (%p353) target = $region56
        $region55: #{fwd.2} parent=51 // pred_region
          %s356 = sand.u32 %s32, 1
          %s357 = scalar_lea.sflag [#allocation3], %s356
          %s358 = sand.u32 %s32, 1
          %s359 = smul.addr %s358, 4
          %s360 = scalar_lea.vmem [#allocation2], %s359
          %s361 = smul.u32 4, %s22
          %s363 = ssub.s32 64, 64
          %364 = vsyncadd %s357, %s363
          %s365 = smul.addr %s361, 16
          %s366 = scalar_lea.hbm %s0, %s365
          %s368 = sshll.u32 %s360, 4
          %s369 = int_to_ptr.vmem [resolvable:$true] %s368
          %371 = dma.hbm_to_vmem [thread:$0]  %s366, 64, %s369, %s357
        $region56: #{fwd.2} parent=51 // pred_fallthru
          _
      $region52: #{fwd.2} parent=5 // pred_fallthru
        _
      %p372 = scmp.le.s32.totalorder 1, %s22
      %p373 = scmp.lt.s32.totalorder %s22, 3
      %p374 = pnand %p372, %p373
      %p375 = pneg %p374
      // Predicated region
      $region57: #{fwd.2} parent=5 // pred_check
        _
      $region58: #{fwd.2} parent=5 // pred_check_branch
        %377 = sbr.rel (%p374) target = $region60
      $region59: #{fwd.2} parent=5 // pred_region
        %s378 = ssub.s32 %s22, 1
        %s379 = sand.u32 %s35, 1
        %s380 = scalar_lea.sflag [#allocation3], %s379
        %s381 = sand.u32 %s35, 1
        %s382 = smul.addr %s381, 4
        %s383 = scalar_lea.vmem [#allocation2], %s382
        // Predicated region
        $region61: #{fwd.2} parent=59 // pred_check
          %p384 = pneg %p48
        $region62: #{fwd.2} parent=59 // pred_check_branch
          %386 = sbr.rel (%p384) target = $region64
        $region63: #{fwd.2} parent=59 // pred_region
          %387 = dma.done %s380, 64
        $region64: #{fwd.2} parent=59 // pred_fallthru
          _
        // Predicated region
        $region65: #{fwd.2} parent=59 // pred_check
          %p388 = pneg %p69
        $region66: #{fwd.2} parent=59 // pred_check_branch
          %390 = sbr.rel (%p388) target = $region68
        $region67: #{fwd.2} parent=59 // pred_region
          %391 = dma.done [#allocation5], 32
        $region68: #{fwd.2} parent=59 // pred_fallthru
          _
        // Predicated region
        $region69: #{fwd.2} parent=59 // pred_check
          %p392 = pneg %p90
        $region70: #{fwd.2} parent=59 // pred_check_branch
          %394 = sbr.rel (%p392) target = $region72
        $region71: #{fwd.2} parent=59 // pred_region
          %395 = dma.done [#allocation5], 32
        $region72: #{fwd.2} parent=59 // pred_fallthru
          _
        // Predicated region
        $region73: #{fwd.2} parent=59 // pred_check
          %p396 = pneg %p132
        $region74: #{fwd.2} parent=59 // pred_check_branch
          %398 = sbr.rel (%p396) target = $region76
        $region75: #{fwd.2} parent=59 // pred_region
          %399 = dma.done [#allocation8], 64
        $region76: #{fwd.2} parent=59 // pred_fallthru
          _
        // Predicated region
        $region77: #{fwd.2} parent=59 // pred_check
          %p400 = pneg %p216
        $region78: #{fwd.2} parent=59 // pred_check_branch
          %402 = sbr.rel (%p400) target = $region80
        $region79: #{fwd.2} parent=59 // pred_region
          %403 = dma.done [#allocation8], 16384
        $region80: #{fwd.2} parent=59 // pred_fallthru
          _
        // Predicated region
        $region81: #{fwd.2} parent=59 // pred_check
          %p404 = pneg %p237
        $region82: #{fwd.2} parent=59 // pred_check_branch
          %406 = sbr.rel (%p404) target = $region84
        $region83: #{fwd.2} parent=59 // pred_region
          %407 = dma.done [#allocation11], 4096
        $region84: #{fwd.2} parent=59 // pred_fallthru
          _
        %s408 = sand.u32 %s35, 1
        %s409 = scalar_lea.sflag [#allocation3], %s408
        %s410 = sand.u32 %s35, 1
        %s411 = smul.addr %s410, 4
        %s412 = scalar_lea.vmem [#allocation2], %s411
        %p413 = pneg %p48
        %p414 = pneg %p45
        %p415 = pneg %p69
        %p416 = pneg %p66
        %p417 = pneg %p90
        %p418 = pneg %p87
        %p419 = pneg %p111
        %p420 = pneg %p108
        %p421 = pneg %p132
        %p422 = pneg %p129
        %p423 = pneg %p153
        %p424 = pneg %p150
        %p425 = pneg %p174
        %p426 = pneg %p171
        %p427 = pneg %p195
        %p428 = pneg %p192
        %p429 = pneg %p216
        %p430 = pneg %p213
        %p431 = pneg %p237
        %p432 = pneg %p234
        %p433 = pneg %p263
        %p434 = pneg %p260
        %p435 = scmp.lt.s32.totalorder %s27, 1
        %s436 = scalar_select %p435, %s27, 1
        %s437 = smul.addr %s436, 8
        %s438 = scalar_lea.vmem %s10, %s437
        %s439 = smul.u32 4, %s27
        %p440 = scmp.lt.s32.totalorder %s27, 1
        %s441 = scalar_select %p440, %s27, 1
        %s442 = smul.addr %s441, 8
        %s443 = scalar_lea.vmem %s10, %s442
        %v445 = vld [vmem:[%s383] sm:$0xf]
        %v446 = vld [vmem:[%s6] sm:$0xf]
        %v447 = vld [vmem:[#allocation4] sm:$0x3]
        %v449 = vlaneseq
        %v450 = vshrl.u32 %v449, 7
        %v451 = vsub.s32 3, %v450
        %v452 = vrot.slane %v445, %v451
        %453 = vrot.lane.b32.xlu0 %v452, 1
        %v454 = vpop.permute.xlu0 %453
        %v456 = vlaneseq
        %v457 = vshrl.u32 %v456, 7
        %v458 = vsub.s32 0, %v457
        %v459 = vrot.slane %v445, %v458
        %v460 = vlaneseq
        %v461 = vshrl.u32 %v460, 7
        %v462 = vsub.s32 1, %v461
        %v463 = vrot.slane %v445, %v462
        %v464 = vlaneseq
        %v465 = vshrl.u32 %v464, 7
        %v466 = vsub.s32 2, %v465
        %v467 = vrot.slane %v445, %v466
        %468 = vrot.lane.b32.xlu0 %v459, 1
        %v469 = vpop.permute.xlu0 %468
        %470 = vrot.lane.b32.xlu0 %v463, 1
        %v471 = vpop.permute.xlu0 %470
        %472 = vrot.lane.b32.xlu0 %v467, 1
        %v473 = vpop.permute.xlu0 %472
        %vm474 = vcmask 7168
        %v475 = vsel %vm474, %v469, %v471
        %v476 = vsel %vm474, %v471, %v473
        %v477 = vsel %vm474, %v473, %v454
        %v479 = vsel %vm474, %v454, %v469
        %vm480 = vcmp.ge.s32.totalorder %v446, 1
        %vm481 = vcmp.lt.s32.totalorder %v446, 129
        %vm482 = vmand %vm480, %vm481
        %v484 = vcombine.low %v479, %v475
        %v485 = vcombine.low %v476, %v477
        %v487 = vunpack.c.l.s4 1966171168
        %v488 = vunpack.c.0.s8 %v487
        %v489 = vlaneseq
        %v490 = vshrl.u32 %v489, 7
        %v491 = vsub.s32 %v488, %v490
        %v492 = vrot.slane %v484, %v491
        %v494 = vunpack.c.l.s4 1966171168
        %v495 = vunpack.c.0.s8 %v494
        %v496 = vlaneseq
        %v497 = vshrl.u32 %v496, 7
        %v498 = vsub.s32 %v495, %v497
        %v499 = vrot.slane %v485, %v498
        %v500 = vcombine.low %v492, %v499
        %v502 = vunpack.c.l.s4 1966171168
        %v503 = vunpack.c.0.s8 %v502
        %v504 = vlaneseq
        %v505 = vshrl.u32 %v504, 7
        %v506 = vsub.s32 %v503, %v505
        %v507 = vrot.slane %v500, %v506
        %v509 = vsel %vm482, %v507, 0.0
        %510 = vrot.lane.b32.xlu0 %v459, 127
        %v511 = vpop.permute.xlu0 %510
        %512 = vrot.lane.b32.xlu0 %v463, 127
        %v513 = vpop.permute.xlu0 %512
        %514 = vrot.lane.b32.xlu0 %v467, 127
        %v515 = vpop.permute.xlu0 %514
        %516 = vrot.lane.b32.xlu0 %v452, 127
        %v517 = vpop.permute.xlu0 %516
        %vm518 = vcmask 1039360
        %v519 = vsel %vm518, %v511, %v513
        %v520 = vsel %vm518, %v513, %v515
        %v521 = vsel %vm518, %v515, %v517
        %v524 = vsel %vm518, %v517, %v511
        %vm525 = vcmp.ge.s32.totalorder %v446, 4294967295
        %vm526 = vcmp.lt.s32.totalorder %v446, 127
        %vm527 = vmand %vm525, %vm526
        %v529 = vcombine.low %v519, %v520
        %v530 = vcombine.low %v521, %v524
        %v532 = vunpack.c.l.s4 1966171168
        %v533 = vunpack.c.0.s8 %v532
        %v534 = vlaneseq
        %v535 = vshrl.u32 %v534, 7
        %v536 = vsub.s32 %v533, %v535
        %v537 = vrot.slane %v529, %v536
        %v539 = vunpack.c.l.s4 1966171168
        %v540 = vunpack.c.0.s8 %v539
        %v541 = vlaneseq
        %v542 = vshrl.u32 %v541, 7
        %v543 = vsub.s32 %v540, %v542
        %v544 = vrot.slane %v530, %v543
        %v545 = vcombine.low %v537, %v544
        %v547 = vunpack.c.l.s4 1966171168
        %v548 = vunpack.c.0.s8 %v547
        %v549 = vlaneseq
        %v550 = vshrl.u32 %v549, 7
        %v551 = vsub.s32 %v548, %v550
        %v552 = vrot.slane %v545, %v551
        %v554 = vsel %vm527, %v552, 0.0
        %v556 = vlaneseq
        %v557 = vshrl.u32 %v556, 7
        %v558 = vsub.s32 0, %v557
        %v559 = vrot.slane %v509, %v558
        %v560 = vlaneseq
        %v561 = vshrl.u32 %v560, 7
        %v562 = vsub.s32 1, %v561
        %v563 = vrot.slane %v509, %v562
        %v564 = vlaneseq
        %v565 = vshrl.u32 %v564, 7
        %v566 = vsub.s32 2, %v565
        %v567 = vrot.slane %v509, %v566
        %v568 = vlaneseq
        %v569 = vshrl.u32 %v568, 7
        %v570 = vsub.s32 3, %v569
        %v571 = vrot.slane %v509, %v570
        %v581 = vlaneseq
        %v582 = vshrl.u32 %v581, 7
        %v583 = vsub.s32 0, %v582
        %v584 = vrot.slane %v554, %v583
        %v585 = vlaneseq
        %v586 = vshrl.u32 %v585, 7
        %v587 = vsub.s32 1, %v586
        %v588 = vrot.slane %v554, %v587
        %v589 = vlaneseq
        %v590 = vshrl.u32 %v589, 7
        %v591 = vsub.s32 2, %v590
        %v592 = vrot.slane %v554, %v591
        %v593 = vlaneseq
        %v594 = vshrl.u32 %v593, 7
        %v595 = vsub.s32 3, %v594
        %v596 = vrot.slane %v554, %v595
        %vm601 = vcmask 1040384
        %v602 = vsel %vm601, %v559, %v459
        %v603 = vsel %vm601, %v563, %v463
        %v604 = vsel %vm601, %v567, %v467
        %v605 = vsel %vm601, %v571, %v452
        %vm606 = vcmask 1041408
        %v607 = vsel %vm606, %v602, %v584
        %v608 = vsel %vm606, %v603, %v588
        %v609 = vsel %vm606, %v604, %v592
        %v610 = vsel %vm606, %v605, %v596
        %vm611 = vcmask 1042432
        %v612 = vsel %vm611, %v607, 1.0
        %v613 = vsel %vm611, %v608, 1.0
        %v614 = vsel %vm611, %v609, 1.0
        %v615 = vsel %vm611, %v610, 1.0
        %v616 = vpack.c.bf16 %v612, %v612
        %v617 = vpack.c.bf16 %v613, %v613
        %v618 = vpack.c.bf16 %v614, %v614
        %v619 = vpack.c.bf16 %v615, %v615
        %vm620 = vcmask 31744
        %v622 = vsel %vm620, %v447, 0
        %v625 = vsel %vm606, %v616, 0
        %v628 = vsel %vm606, %v617, 0
        %v631 = vsel %vm606, %v618, 0
        %v634 = vsel %vm606, %v619, 0
        %636 = vmatprep.subr.bf16.mxu0 0
        %637 = vmatpush1.bf16.msra.mxu0 0
        %638 = vmatprep.subr.bf16.mxu0 0
        %639 = vmatpush1.bf16.msra.mxu0 0
        %640 = vmatprep.subr.bf16.mxu0 0
        %641 = vmatpush1.bf16.msra.mxu0 0
        %642 = vmatprep.subr.bf16.mxu0 0
        %643 = vmatpush1.bf16.msra.mxu0 0
        %644 = vmatprep.subr.bf16.mxu0 0
        %645 = vmatpush1.bf16.msra.mxu0 0
        %646 = vmatprep.subr.bf16.mxu0 0
        %647 = vmatpush1.bf16.msra.mxu0 0
        %648 = vmatprep.subr.bf16.mxu0 0
        %649 = vmatpush1.bf16.msra.mxu0 0
        %650 = vmatprep.subr.bf16.mxu0 %v628
        %651 = vmatpush1.bf16.msra.mxu0 %v625
        %652 = vmatprep.subr.bf16.mxu0 0
        %653 = vmatpush2.bf16.msra.mxu0 0
        %654 = vmatprep.subr.bf16.mxu0 0
        %655 = vmatpush2.bf16.msra.mxu0 0
        %656 = vmatprep.subr.bf16.mxu0 0
        %657 = vmatpush2.bf16.msra.mxu0 0
        %658 = vmatprep.subr.bf16.mxu0 0
        %659 = vmatpush2.bf16.msra.mxu0 0
        %660 = vmatprep.subr.bf16.mxu0 0
        %661 = vmatpush2.bf16.msra.mxu0 0
        %662 = vmatprep.subr.bf16.mxu0 0
        %663 = vmatpush2.bf16.msra.mxu0 0
        %664 = vmatprep.subr.bf16.mxu0 0
        %665 = vmatpush2.bf16.msra.mxu0 0
        %666 = vmatprep.subr.bf16.mxu0 0
        %667 = vmatpush2.bf16.msra.mxu0 0
        %668 = vmatprep.mubr.bf16.mxu0 0
        %669 = vmatmul.mubr.bf16.gmra.mxu0 %v622
        %v670 = vpop.f32.mrf.mxu0
        %v671 = vadd.f32 0.0, %v670
        %v672 = vpop.f32.mrf.mxu0
        %v673 = vadd.f32 0.0, %v672
        %v674 = vpop.f32.mrf.mxu0
        %v675 = vpop.f32.mrf.mxu0
        %676 = vdwg.mxu0
        %677 = vmatprep.subr.bf16.mxu0 0
        %678 = vmatpush1.bf16.msra.mxu0 0
        %679 = vmatprep.subr.bf16.mxu0 0
        %680 = vmatpush1.bf16.msra.mxu0 0
        %681 = vmatprep.subr.bf16.mxu0 0
        %682 = vmatpush1.bf16.msra.mxu0 0
        %683 = vmatprep.subr.bf16.mxu0 0
        %684 = vmatpush1.bf16.msra.mxu0 0
        %685 = vmatprep.subr.bf16.mxu0 0
        %686 = vmatpush1.bf16.msra.mxu0 0
        %687 = vmatprep.subr.bf16.mxu0 0
        %688 = vmatpush1.bf16.msra.mxu0 0
        %689 = vmatprep.subr.bf16.mxu0 0
        %690 = vmatpush1.bf16.msra.mxu0 0
        %691 = vmatprep.subr.bf16.mxu0 %v634
        %692 = vmatpush1.bf16.msra.mxu0 %v631
        %693 = vmatprep.subr.bf16.mxu0 0
        %694 = vmatpush2.bf16.msra.mxu0 0
        %695 = vmatprep.subr.bf16.mxu0 0
        %696 = vmatpush2.bf16.msra.mxu0 0
        %697 = vmatprep.subr.bf16.mxu0 0
        %698 = vmatpush2.bf16.msra.mxu0 0
        %699 = vmatprep.subr.bf16.mxu0 0
        %700 = vmatpush2.bf16.msra.mxu0 0
        %701 = vmatprep.subr.bf16.mxu0 0
        %702 = vmatpush2.bf16.msra.mxu0 0
        %703 = vmatprep.subr.bf16.mxu0 0
        %704 = vmatpush2.bf16.msra.mxu0 0
        %705 = vmatprep.subr.bf16.mxu0 0
        %706 = vmatpush2.bf16.msra.mxu0 0
        %707 = vmatprep.subr.bf16.mxu0 0
        %708 = vmatpush2.bf16.msra.mxu0 0
        %709 = vmatprep.mubr.bf16.mxu0 0
        %710 = vmatmul.mubr.bf16.gmra.mxu0 %v622
        %v711 = vpop.f32.mrf.mxu0
        %v712 = vadd.f32 0.0, %v711
        %v713 = vpop.f32.mrf.mxu0
        %v714 = vadd.f32 0.0, %v713
        %v715 = vpop.f32.mrf.mxu0
        %v716 = vpop.f32.mrf.mxu0
        %717 = vdwg.mxu0
        %v718 = vmax.f32 %v671, 0.0
        %v719 = vmax.f32 %v673, 0.0
        %v720 = vmax.f32 %v712, 0.0
        %v721 = vmax.f32 %v714, 0.0
        %v722 = vld [vmem:[#allocation6] sm:$0x3]
        %724 = vrot.lane.b32.xlu0 %v721, 1
        %v725 = vpop.permute.xlu0 %724
        %730 = vrot.lane.b32.xlu0 %v718, 1
        %v731 = vpop.permute.xlu0 %730
        %732 = vrot.lane.b32.xlu0 %v719, 1
        %v733 = vpop.permute.xlu0 %732
        %734 = vrot.lane.b32.xlu0 %v720, 1
        %v735 = vpop.permute.xlu0 %734
        %v736 = vsel %vm474, %v731, %v733
        %v737 = vsel %vm474, %v733, %v735
        %v738 = vsel %vm474, %v735, %v725
        %v743 = vsel %vm474, %v725, %v731
        %v744 = vsel %vm482, 1, 0
        %v745 = vlaneseq
        %v746 = vshrl.u32 %v745, 7
        %v747 = vsub.s32 0, %v746
        %v748 = vrot.slane %v744, %v747
        %v749 = vlaneseq
        %v750 = vshrl.u32 %v749, 7
        %v751 = vsub.s32 1, %v750
        %v752 = vrot.slane %v744, %v751
        %v753 = vlaneseq
        %v754 = vshrl.u32 %v753, 7
        %v755 = vsub.s32 2, %v754
        %v756 = vrot.slane %v744, %v755
        %v757 = vlaneseq
        %v758 = vshrl.u32 %v757, 7
        %v759 = vsub.s32 3, %v758
        %v760 = vrot.slane %v744, %v759
        %vm761 = vcmp.eq.s32.totalorder %v748, 1
        %vm762 = vcmp.eq.s32.totalorder %v752, 1
        %vm763 = vcmp.eq.s32.totalorder %v756, 1
        %vm764 = vcmp.eq.s32.totalorder %v760, 1
        %v765 = vsel %vm761, %v743, 0.0
        %v766 = vsel %vm762, %v736, 0.0
        %v767 = vsel %vm763, %v737, 0.0
        %v768 = vsel %vm764, %v738, 0.0
        %769 = vrot.lane.b32.xlu0 %v718, 127
        %v770 = vpop.permute.xlu0 %769
        %771 = vrot.lane.b32.xlu0 %v719, 127
        %v772 = vpop.permute.xlu0 %771
        %773 = vrot.lane.b32.xlu0 %v720, 127
        %v774 = vpop.permute.xlu0 %773
        %775 = vrot.lane.b32.xlu0 %v721, 127
        %v776 = vpop.permute.xlu0 %775
        %v777 = vsel %vm518, %v770, %v772
        %v778 = vsel %vm518, %v772, %v774
        %v779 = vsel %vm518, %v774, %v776
        %v785 = vsel %vm518, %v776, %v770
        %v786 = vsel %vm527, 1, 0
        %v787 = vlaneseq
        %v788 = vshrl.u32 %v787, 7
        %v789 = vsub.s32 0, %v788
        %v790 = vrot.slane %v786, %v789
        %v791 = vlaneseq
        %v792 = vshrl.u32 %v791, 7
        %v793 = vsub.s32 1, %v792
        %v794 = vrot.slane %v786, %v793
        %v795 = vlaneseq
        %v796 = vshrl.u32 %v795, 7
        %v797 = vsub.s32 2, %v796
        %v798 = vrot.slane %v786, %v797
        %v799 = vlaneseq
        %v800 = vshrl.u32 %v799, 7
        %v801 = vsub.s32 3, %v800
        %v802 = vrot.slane %v786, %v801
        %vm803 = vcmp.eq.s32.totalorder %v790, 1
        %vm804 = vcmp.eq.s32.totalorder %v794, 1
        %vm805 = vcmp.eq.s32.totalorder %v798, 1
        %vm806 = vcmp.eq.s32.totalorder %v802, 1
        %v807 = vsel %vm803, %v777, 0.0
        %v808 = vsel %vm804, %v778, 0.0
        %v809 = vsel %vm805, %v779, 0.0
        %v810 = vsel %vm806, %v785, 0.0
        %v811 = vrot.slane %v718, 4
        %v812 = vrot.slane %v719, 4
        %v813 = vrot.slane %v720, 4
        %v814 = vrot.slane %v721, 4
        %vm819 = vcmask 1043456
        %v820 = vsel %vm819, %v765, %v811
        %v821 = vsel %vm819, %v766, %v812
        %v822 = vsel %vm819, %v767, %v813
        %v823 = vsel %vm819, %v768, %v814
        %v824 = vsel %vm819, %v807, 1.0
        %v825 = vsel %vm819, %v808, 1.0
        %v826 = vsel %vm819, %v809, 1.0
        %v827 = vsel %vm819, %v810, 1.0
        %v828 = vpack.c.bf16 %v824, %v820
        %v829 = vpack.c.bf16 %v825, %v821
        %v830 = vpack.c.bf16 %v826, %v822
        %v831 = vpack.c.bf16 %v827, %v823
        %vm832 = vcmask 105472
        %v834 = vsel %vm832, %v722, 0
        %vm836 = vcmask 1045504
        %vm837 = vcmask 1046528
        %v838 = vsel %vm836, 4294967295, 65535
        %v839 = vsel %vm837, %v838, 0
        %v841 = vand.u32 %v828, %v839
        %v844 = vand.u32 %v829, %v839
        %v847 = vand.u32 %v830, %v839
        %v850 = vand.u32 %v831, %v839
        %852 = vmatprep.subr.bf16.mxu0 0
        %853 = vmatpush1.bf16.msra.mxu0 0
        %854 = vmatprep.subr.bf16.mxu0 0
        %855 = vmatpush1.bf16.msra.mxu0 0
        %856 = vmatprep.subr.bf16.mxu0 0
        %857 = vmatpush1.bf16.msra.mxu0 0
        %858 = vmatprep.subr.bf16.mxu0 0
        %859 = vmatpush1.bf16.msra.mxu0 0
        %860 = vmatprep.subr.bf16.mxu0 0
        %861 = vmatpush1.bf16.msra.mxu0 0
        %862 = vmatprep.subr.bf16.mxu0 0
        %863 = vmatpush1.bf16.msra.mxu0 0
        %864 = vmatprep.subr.bf16.mxu0 0
        %865 = vmatpush1.bf16.msra.mxu0 0
        %866 = vmatprep.subr.bf16.mxu0 %v844
        %867 = vmatpush1.bf16.msra.mxu0 %v841
        %868 = vmatprep.subr.bf16.mxu0 0
        %869 = vmatpush2.bf16.msra.mxu0 0
        %870 = vmatprep.subr.bf16.mxu0 0
        %871 = vmatpush2.bf16.msra.mxu0 0
        %872 = vmatprep.subr.bf16.mxu0 0
        %873 = vmatpush2.bf16.msra.mxu0 0
        %874 = vmatprep.subr.bf16.mxu0 0
        %875 = vmatpush2.bf16.msra.mxu0 0
        %876 = vmatprep.subr.bf16.mxu0 0
        %877 = vmatpush2.bf16.msra.mxu0 0
        %878 = vmatprep.subr.bf16.mxu0 0
        %879 = vmatpush2.bf16.msra.mxu0 0
        %880 = vmatprep.subr.bf16.mxu0 0
        %881 = vmatpush2.bf16.msra.mxu0 0
        %882 = vmatprep.subr.bf16.mxu0 0
        %883 = vmatpush2.bf16.msra.mxu0 0
        %884 = vmatprep.mubr.bf16.mxu0 0
        %885 = vmatmul.mubr.bf16.gmra.mxu0 %v834
        %v886 = vpop.f32.mrf.mxu0
        %v887 = vadd.f32 0.0, %v886
        %v888 = vpop.f32.mrf.mxu0
        %v889 = vadd.f32 0.0, %v888
        %v890 = vpop.f32.mrf.mxu0
        %v891 = vpop.f32.mrf.mxu0
        %892 = vdwg.mxu0
        %893 = vmatprep.subr.bf16.mxu0 0
        %894 = vmatpush1.bf16.msra.mxu0 0
        %895 = vmatprep.subr.bf16.mxu0 0
        %896 = vmatpush1.bf16.msra.mxu0 0
        %897 = vmatprep.subr.bf16.mxu0 0
        %898 = vmatpush1.bf16.msra.mxu0 0
        %899 = vmatprep.subr.bf16.mxu0 0
        %900 = vmatpush1.bf16.msra.mxu0 0
        %901 = vmatprep.subr.bf16.mxu0 0
        %902 = vmatpush1.bf16.msra.mxu0 0
        %903 = vmatprep.subr.bf16.mxu0 0
        %904 = vmatpush1.bf16.msra.mxu0 0
        %905 = vmatprep.subr.bf16.mxu0 0
        %906 = vmatpush1.bf16.msra.mxu0 0
        %907 = vmatprep.subr.bf16.mxu0 %v850
        %908 = vmatpush1.bf16.msra.mxu0 %v847
        %909 = vmatprep.subr.bf16.mxu0 0
        %910 = vmatpush2.bf16.msra.mxu0 0
        %911 = vmatprep.subr.bf16.mxu0 0
        %912 = vmatpush2.bf16.msra.mxu0 0
        %913 = vmatprep.subr.bf16.mxu0 0
        %914 = vmatpush2.bf16.msra.mxu0 0
        %915 = vmatprep.subr.bf16.mxu0 0
        %916 = vmatpush2.bf16.msra.mxu0 0
        %917 = vmatprep.subr.bf16.mxu0 0
        %918 = vmatpush2.bf16.msra.mxu0 0
        %919 = vmatprep.subr.bf16.mxu0 0
        %920 = vmatpush2.bf16.msra.mxu0 0
        %921 = vmatprep.subr.bf16.mxu0 0
        %922 = vmatpush2.bf16.msra.mxu0 0
        %923 = vmatprep.subr.bf16.mxu0 0
        %924 = vmatpush2.bf16.msra.mxu0 0
        %925 = vmatprep.mubr.bf16.mxu0 0
        %926 = vmatmul.mubr.bf16.gmra.mxu0 %v834
        %v927 = vpop.f32.mrf.mxu0
        %v928 = vadd.f32 0.0, %v927
        %v929 = vpop.f32.mrf.mxu0
        %v930 = vadd.f32 0.0, %v929
        %v931 = vpop.f32.mrf.mxu0
        %v932 = vpop.f32.mrf.mxu0
        %933 = vdwg.mxu0
        %v934 = vmax.f32 %v887, 0.0
        %v935 = vmax.f32 %v889, 0.0
        %v936 = vmax.f32 %v928, 0.0
        %v937 = vmax.f32 %v930, 0.0
        %v938 = vld [vmem:[%s3] sm:$0xf]
        %v939 = vld [vmem:[%s3 + $0x4] sm:$0x3]
        %vm940 = vcmp.lt.s32.totalorder %v446, 4
        %945 = vrot.lane.b32.xlu0 %v934, 4
        %v946 = vpop.permute.xlu0 %945
        %947 = vrot.lane.b32.xlu0 %v935, 4
        %v948 = vpop.permute.xlu0 %947
        %949 = vrot.lane.b32.xlu0 %v936, 4
        %v950 = vpop.permute.xlu0 %949
        %951 = vrot.lane.b32.xlu0 %v937, 4
        %v952 = vpop.permute.xlu0 %951
        %v953 = vsel %vm620, %v946, %v948
        %v954 = vsel %vm620, %v948, %v950
        %v955 = vsel %vm620, %v950, %v952
        %v961 = vsel %vm620, %v952, %v946
        %v962 = vsel %vm940, 1, 0
        %v963 = vlaneseq
        %v964 = vshrl.u32 %v963, 7
        %v965 = vsub.s32 0, %v964
        %v966 = vrot.slane %v962, %v965
        %v967 = vlaneseq
        %v968 = vshrl.u32 %v967, 7
        %v969 = vsub.s32 1, %v968
        %v970 = vrot.slane %v962, %v969
        %v971 = vlaneseq
        %v972 = vshrl.u32 %v971, 7
        %v973 = vsub.s32 2, %v972
        %v974 = vrot.slane %v962, %v973
        %v975 = vlaneseq
        %v976 = vshrl.u32 %v975, 7
        %v977 = vsub.s32 3, %v976
        %v978 = vrot.slane %v962, %v977
        %vm979 = vcmp.eq.s32.totalorder %v966, 1
        %vm980 = vcmp.eq.s32.totalorder %v970, 1
        %vm981 = vcmp.eq.s32.totalorder %v974, 1
        %vm982 = vcmp.eq.s32.totalorder %v978, 1
        %v983 = vsel %vm979, %v953, %v961
        %v984 = vsel %vm980, %v954, %v953
        %v985 = vsel %vm981, %v955, %v954
        %v986 = vsel %vm982, %v961, %v955
        %vm987 = vcmp.lt.s32.totalorder %v446, 2
        %988 = vrot.lane.b32.xlu0 %v934, 2
        %v989 = vpop.permute.xlu0 %988
        %990 = vrot.lane.b32.xlu0 %v935, 2
        %v991 = vpop.permute.xlu0 %990
        %992 = vrot.lane.b32.xlu0 %v936, 2
        %v993 = vpop.permute.xlu0 %992
        %994 = vrot.lane.b32.xlu0 %v937, 2
        %v995 = vpop.permute.xlu0 %994
        %vm996 = vcmask 15360
        %v997 = vsel %vm996, %v989, %v991
        %v998 = vsel %vm996, %v991, %v993
        %v999 = vsel %vm996, %v993, %v995
        %v1005 = vsel %vm996, %v995, %v989
        %v1006 = vsel %vm987, 1, 0
        %v1007 = vlaneseq
        %v1008 = vshrl.u32 %v1007, 7
        %v1009 = vsub.s32 0, %v1008
        %v1010 = vrot.slane %v1006, %v1009
        %v1011 = vlaneseq
        %v1012 = vshrl.u32 %v1011, 7
        %v1013 = vsub.s32 1, %v1012
        %v1014 = vrot.slane %v1006, %v1013
        %v1015 = vlaneseq
        %v1016 = vshrl.u32 %v1015, 7
        %v1017 = vsub.s32 2, %v1016
        %v1018 = vrot.slane %v1006, %v1017
        %v1019 = vlaneseq
        %v1020 = vshrl.u32 %v1019, 7
        %v1021 = vsub.s32 3, %v1020
        %v1022 = vrot.slane %v1006, %v1021
        %vm1023 = vcmp.eq.s32.totalorder %v1010, 1
        %vm1024 = vcmp.eq.s32.totalorder %v1014, 1
        %vm1025 = vcmp.eq.s32.totalorder %v1018, 1
        %vm1026 = vcmp.eq.s32.totalorder %v1022, 1
        %v1027 = vsel %vm1023, %v997, %v1005
        %v1028 = vsel %vm1024, %v998, %v997
        %v1029 = vsel %vm1025, %v999, %v998
        %v1030 = vsel %vm1026, %v1005, %v999
        %vm1031 = vcmp.lt.s32.totalorder %v446, 1
        %1032 = vrot.lane.b32.xlu0 %v934, 1
        %v1033 = vpop.permute.xlu0 %1032
        %1034 = vrot.lane.b32.xlu0 %v935, 1
        %v1035 = vpop.permute.xlu0 %1034
        %1036 = vrot.lane.b32.xlu0 %v936, 1
        %v1037 = vpop.permute.xlu0 %1036
        %1038 = vrot.lane.b32.xlu0 %v937, 1
        %v1039 = vpop.permute.xlu0 %1038
        %v1040 = vsel %vm474, %v1033, %v1035
        %v1041 = vsel %vm474, %v1035, %v1037
        %v1042 = vsel %vm474, %v1037, %v1039
        %v1048 = vsel %vm474, %v1039, %v1033
        %v1049 = vsel %vm1031, 1, 0
        %v1050 = vlaneseq
        %v1051 = vshrl.u32 %v1050, 7
        %v1052 = vsub.s32 0, %v1051
        %v1053 = vrot.slane %v1049, %v1052
        %v1054 = vlaneseq
        %v1055 = vshrl.u32 %v1054, 7
        %v1056 = vsub.s32 1, %v1055
        %v1057 = vrot.slane %v1049, %v1056
        %v1058 = vlaneseq
        %v1059 = vshrl.u32 %v1058, 7
        %v1060 = vsub.s32 2, %v1059
        %v1061 = vrot.slane %v1049, %v1060
        %v1062 = vlaneseq
        %v1063 = vshrl.u32 %v1062, 7
        %v1064 = vsub.s32 3, %v1063
        %v1065 = vrot.slane %v1049, %v1064
        %vm1066 = vcmp.eq.s32.totalorder %v1053, 1
        %vm1067 = vcmp.eq.s32.totalorder %v1057, 1
        %vm1068 = vcmp.eq.s32.totalorder %v1061, 1
        %vm1069 = vcmp.eq.s32.totalorder %v1065, 1
        %v1070 = vsel %vm1066, %v1040, %v1048
        %v1071 = vsel %vm1067, %v1041, %v1040
        %v1072 = vsel %vm1068, %v1042, %v1041
        %v1073 = vsel %vm1069, %v1048, %v1042
        %1074 = vrot.lane.b32.xlu0 %v934, 127
        %v1075 = vpop.permute.xlu0 %1074
        %1076 = vrot.lane.b32.xlu0 %v935, 127
        %v1077 = vpop.permute.xlu0 %1076
        %1078 = vrot.lane.b32.xlu0 %v936, 127
        %v1079 = vpop.permute.xlu0 %1078
        %1080 = vrot.lane.b32.xlu0 %v937, 127
        %v1081 = vpop.permute.xlu0 %1080
        %v1082 = vsel %vm518, %v1075, %v1077
        %v1083 = vsel %vm518, %v1077, %v1079
        %v1084 = vsel %vm518, %v1079, %v1081
        %v1090 = vsel %vm518, %v1081, %v1075
        %v1091 = vsel %vm526, 1, 0
        %v1092 = vlaneseq
        %v1093 = vshrl.u32 %v1092, 7
        %v1094 = vsub.s32 0, %v1093
        %v1095 = vrot.slane %v1091, %v1094
        %v1096 = vlaneseq
        %v1097 = vshrl.u32 %v1096, 7
        %v1098 = vsub.s32 1, %v1097
        %v1099 = vrot.slane %v1091, %v1098
        %v1100 = vlaneseq
        %v1101 = vshrl.u32 %v1100, 7
        %v1102 = vsub.s32 2, %v1101
        %v1103 = vrot.slane %v1091, %v1102
        %v1104 = vlaneseq
        %v1105 = vshrl.u32 %v1104, 7
        %v1106 = vsub.s32 3, %v1105
        %v1107 = vrot.slane %v1091, %v1106
        %vm1108 = vcmp.eq.s32.totalorder %v1095, 1
        %vm1109 = vcmp.eq.s32.totalorder %v1099, 1
        %vm1110 = vcmp.eq.s32.totalorder %v1103, 1
        %vm1111 = vcmp.eq.s32.totalorder %v1107, 1
        %v1112 = vsel %vm1108, %v1082, %v1090
        %v1113 = vsel %vm1109, %v1083, %v1082
        %v1114 = vsel %vm1110, %v1084, %v1083
        %v1115 = vsel %vm1111, %v1090, %v1084
        %vm1116 = vcmp.lt.s32.totalorder %v446, 126
        %1117 = vrot.lane.b32.xlu0 %v934, 126
        %v1118 = vpop.permute.xlu0 %1117
        %1119 = vrot.lane.b32.xlu0 %v935, 126
        %v1120 = vpop.permute.xlu0 %1119
        %1121 = vrot.lane.b32.xlu0 %v936, 126
        %v1122 = vpop.permute.xlu0 %1121
        %1123 = vrot.lane.b32.xlu0 %v937, 126
        %v1124 = vpop.permute.xlu0 %1123
        %vm1125 = vcmask 1031168
        %v1126 = vsel %vm1125, %v1118, %v1120
        %v1127 = vsel %vm1125, %v1120, %v1122
        %v1128 = vsel %vm1125, %v1122, %v1124
        %v1134 = vsel %vm1125, %v1124, %v1118
        %v1135 = vsel %vm1116, 1, 0
        %v1136 = vlaneseq
        %v1137 = vshrl.u32 %v1136, 7
        %v1138 = vsub.s32 0, %v1137
        %v1139 = vrot.slane %v1135, %v1138
        %v1140 = vlaneseq
        %v1141 = vshrl.u32 %v1140, 7
        %v1142 = vsub.s32 1, %v1141
        %v1143 = vrot.slane %v1135, %v1142
        %v1144 = vlaneseq
        %v1145 = vshrl.u32 %v1144, 7
        %v1146 = vsub.s32 2, %v1145
        %v1147 = vrot.slane %v1135, %v1146
        %v1148 = vlaneseq
        %v1149 = vshrl.u32 %v1148, 7
        %v1150 = vsub.s32 3, %v1149
        %v1151 = vrot.slane %v1135, %v1150
        %vm1152 = vcmp.eq.s32.totalorder %v1139, 1
        %vm1153 = vcmp.eq.s32.totalorder %v1143, 1
        %vm1154 = vcmp.eq.s32.totalorder %v1147, 1
        %vm1155 = vcmp.eq.s32.totalorder %v1151, 1
        %v1156 = vsel %vm1152, %v1126, %v1134
        %v1157 = vsel %vm1153, %v1127, %v1126
        %v1158 = vsel %vm1154, %v1128, %v1127
        %v1159 = vsel %vm1155, %v1134, %v1128
        %vm1160 = vcmp.lt.s32.totalorder %v446, 124
        %1161 = vrot.lane.b32.xlu0 %v934, 124
        %v1162 = vpop.permute.xlu0 %1161
        %1163 = vrot.lane.b32.xlu0 %v935, 124
        %v1164 = vpop.permute.xlu0 %1163
        %1165 = vrot.lane.b32.xlu0 %v936, 124
        %v1166 = vpop.permute.xlu0 %1165
        %1167 = vrot.lane.b32.xlu0 %v937, 124
        %v1168 = vpop.permute.xlu0 %1167
        %vm1169 = vcmask 1014784
        %v1170 = vsel %vm1169, %v1162, %v1164
        %v1171 = vsel %vm1169, %v1164, %v1166
        %v1172 = vsel %vm1169, %v1166, %v1168
        %v1178 = vsel %vm1169, %v1168, %v1162
        %v1179 = vsel %vm1160, 1, 0
        %v1180 = vlaneseq
        %v1181 = vshrl.u32 %v1180, 7
        %v1182 = vsub.s32 0, %v1181
        %v1183 = vrot.slane %v1179, %v1182
        %v1184 = vlaneseq
        %v1185 = vshrl.u32 %v1184, 7
        %v1186 = vsub.s32 1, %v1185
        %v1187 = vrot.slane %v1179, %v1186
        %v1188 = vlaneseq
        %v1189 = vshrl.u32 %v1188, 7
        %v1190 = vsub.s32 2, %v1189
        %v1191 = vrot.slane %v1179, %v1190
        %v1192 = vlaneseq
        %v1193 = vshrl.u32 %v1192, 7
        %v1194 = vsub.s32 3, %v1193
        %v1195 = vrot.slane %v1179, %v1194
        %vm1196 = vcmp.eq.s32.totalorder %v1183, 1
        %vm1197 = vcmp.eq.s32.totalorder %v1187, 1
        %vm1198 = vcmp.eq.s32.totalorder %v1191, 1
        %vm1199 = vcmp.eq.s32.totalorder %v1195, 1
        %v1200 = vsel %vm1196, %v1170, %v1178
        %v1201 = vsel %vm1197, %v1171, %v1170
        %v1202 = vsel %vm1198, %v1172, %v1171
        %v1203 = vsel %vm1199, %v1178, %v1172
        %v1208 = vrot.slane %v1027, 4
        %v1209 = vrot.slane %v1028, 4
        %v1210 = vrot.slane %v1029, 4
        %v1211 = vrot.slane %v1030, 4
        %v1216 = vrot.slane %v934, 4
        %v1217 = vrot.slane %v935, 4
        %v1218 = vrot.slane %v936, 4
        %v1219 = vrot.slane %v937, 4
        %v1228 = vrot.slane %v1156, 4
        %v1229 = vrot.slane %v1157, 4
        %v1230 = vrot.slane %v1158, 4
        %v1231 = vrot.slane %v1159, 4
        %v1236 = vsel %vm819, %v983, %v1208
        %v1237 = vsel %vm819, %v984, %v1209
        %v1238 = vsel %vm819, %v985, %v1210
        %v1239 = vsel %vm819, %v986, %v1211
        %v1240 = vsel %vm819, %v1070, %v1216
        %v1241 = vsel %vm819, %v1071, %v1217
        %v1242 = vsel %vm819, %v1072, %v1218
        %v1243 = vsel %vm819, %v1073, %v1219
        %v1244 = vsel %vm819, %v1112, %v1228
        %v1245 = vsel %vm819, %v1113, %v1229
        %v1246 = vsel %vm819, %v1114, %v1230
        %v1247 = vsel %vm819, %v1115, %v1231
        %v1248 = vsel %vm819, %v1200, 1.0
        %v1249 = vsel %vm819, %v1201, 1.0
        %v1250 = vsel %vm819, %v1202, 1.0
        %v1251 = vsel %vm819, %v1203, 1.0
        %v1252 = vpack.c.bf16 %v1240, %v1236
        %v1253 = vpack.c.bf16 %v1241, %v1237
        %v1254 = vpack.c.bf16 %v1242, %v1238
        %v1255 = vpack.c.bf16 %v1243, %v1239
        %v1256 = vpack.c.bf16 %v1248, %v1244
        %v1257 = vpack.c.bf16 %v1249, %v1245
        %v1258 = vpack.c.bf16 %v1250, %v1246
        %v1259 = vpack.c.bf16 %v1251, %v1247
        %v1262 = vunpack.c.l.b16 %v938
        %v1263 = vunpack.c.l.b16 %v939
        %v1264 = vpack.c.b16 %v1263, %v1262
        %vm1265 = vcmask 236544
        %v1267 = vsel %vm1265, %v1264, 0
        %v1270 = vand.u32 %v1256, %v839
        %v1273 = vand.u32 %v1257, %v839
        %v1276 = vand.u32 %v1258, %v839
        %v1279 = vand.u32 %v1259, %v839
        %1281 = vmatprep.subr.bf16.mxu0 0
        %1282 = vmatpush1.bf16.msra.mxu0 0
        %1283 = vmatprep.subr.bf16.mxu0 0
        %1284 = vmatpush1.bf16.msra.mxu0 0
        %1285 = vmatprep.subr.bf16.mxu0 0
        %1286 = vmatpush1.bf16.msra.mxu0 0
        %1287 = vmatprep.subr.bf16.mxu0 0
        %1288 = vmatpush1.bf16.msra.mxu0 0
        %1289 = vmatprep.subr.bf16.mxu0 0
        %1290 = vmatpush1.bf16.msra.mxu0 0
        %1291 = vmatprep.subr.bf16.mxu0 0
        %1292 = vmatpush1.bf16.msra.mxu0 0
        %1293 = vmatprep.subr.bf16.mxu0 %v1273
        %1294 = vmatpush1.bf16.msra.mxu0 %v1270
        %1295 = vmatprep.subr.bf16.mxu0 %v1253
        %1296 = vmatpush1.bf16.msra.mxu0 %v1252
        %1297 = vmatprep.subr.bf16.mxu0 0
        %1298 = vmatpush2.bf16.msra.mxu0 0
        %1299 = vmatprep.subr.bf16.mxu0 0
        %1300 = vmatpush2.bf16.msra.mxu0 0
        %1301 = vmatprep.subr.bf16.mxu0 0
        %1302 = vmatpush2.bf16.msra.mxu0 0
        %1303 = vmatprep.subr.bf16.mxu0 0
        %1304 = vmatpush2.bf16.msra.mxu0 0
        %1305 = vmatprep.subr.bf16.mxu0 0
        %1306 = vmatpush2.bf16.msra.mxu0 0
        %1307 = vmatprep.subr.bf16.mxu0 0
        %1308 = vmatpush2.bf16.msra.mxu0 0
        %1309 = vmatprep.subr.bf16.mxu0 0
        %1310 = vmatpush2.bf16.msra.mxu0 0
        %1311 = vmatprep.subr.bf16.mxu0 0
        %1312 = vmatpush2.bf16.msra.mxu0 0
        %1313 = vmatprep.mubr.bf16.mxu0 0
        %1314 = vmatmul.mubr.bf16.gmra.mxu0 %v1267
        %v1315 = vpop.f32.mrf.mxu0
        %v1316 = vadd.f32 0.0, %v1315
        %v1317 = vpop.f32.mrf.mxu0
        %v1318 = vadd.f32 0.0, %v1317
        %v1319 = vpop.f32.mrf.mxu0
        %v1320 = vadd.f32 0.0, %v1319
        %v1321 = vpop.f32.mrf.mxu0
        %v1322 = vadd.f32 0.0, %v1321
        %1323 = vdwg.mxu0
        %1324 = vmatprep.subr.bf16.mxu0 0
        %1325 = vmatpush1.bf16.msra.mxu0 0
        %1326 = vmatprep.subr.bf16.mxu0 0
        %1327 = vmatpush1.bf16.msra.mxu0 0
        %1328 = vmatprep.subr.bf16.mxu0 0
        %1329 = vmatpush1.bf16.msra.mxu0 0
        %1330 = vmatprep.subr.bf16.mxu0 0
        %1331 = vmatpush1.bf16.msra.mxu0 0
        %1332 = vmatprep.subr.bf16.mxu0 0
        %1333 = vmatpush1.bf16.msra.mxu0 0
        %1334 = vmatprep.subr.bf16.mxu0 0
        %1335 = vmatpush1.bf16.msra.mxu0 0
        %1336 = vmatprep.subr.bf16.mxu0 %v1279
        %1337 = vmatpush1.bf16.msra.mxu0 %v1276
        %1338 = vmatprep.subr.bf16.mxu0 %v1255
        %1339 = vmatpush1.bf16.msra.mxu0 %v1254
        %1340 = vmatprep.subr.bf16.mxu0 0
        %1341 = vmatpush2.bf16.msra.mxu0 0
        %1342 = vmatprep.subr.bf16.mxu0 0
        %1343 = vmatpush2.bf16.msra.mxu0 0
        %1344 = vmatprep.subr.bf16.mxu0 0
        %1345 = vmatpush2.bf16.msra.mxu0 0
        %1346 = vmatprep.subr.bf16.mxu0 0
        %1347 = vmatpush2.bf16.msra.mxu0 0
        %1348 = vmatprep.subr.bf16.mxu0 0
        %1349 = vmatpush2.bf16.msra.mxu0 0
        %1350 = vmatprep.subr.bf16.mxu0 0
        %1351 = vmatpush2.bf16.msra.mxu0 0
        %1352 = vmatprep.subr.bf16.mxu0 0
        %1353 = vmatpush2.bf16.msra.mxu0 0
        %1354 = vmatprep.subr.bf16.mxu0 0
        %1355 = vmatpush2.bf16.msra.mxu0 0
        %1356 = vmatprep.mubr.bf16.mxu0 0
        %1357 = vmatmul.mubr.bf16.gmra.mxu0 %v1267
        %v1358 = vpop.f32.mrf.mxu0
        %v1359 = vadd.f32 0.0, %v1358
        %v1360 = vpop.f32.mrf.mxu0
        %v1361 = vadd.f32 0.0, %v1360
        %v1362 = vpop.f32.mrf.mxu0
        %v1363 = vadd.f32 0.0, %v1362
        %v1364 = vpop.f32.mrf.mxu0
        %v1365 = vadd.f32 0.0, %v1364
        %1366 = vdwg.mxu0
        %v1367 = vmax.f32 %v1316, 0.0
        %v1368 = vmax.f32 %v1318, 0.0
        %v1369 = vmax.f32 %v1359, 0.0
        %v1370 = vmax.f32 %v1361, 0.0
        %v1371 = vmax.f32 %v1320, 0.0
        %v1372 = vmax.f32 %v1322, 0.0
        %v1373 = vmax.f32 %v1363, 0.0
        %v1374 = vmax.f32 %v1365, 0.0
        %v1375 = vld [vmem:[#allocation9] sm:$0xff]
        %v1376 = vld [vmem:[#allocation9 + $0x8] sm:$0xff]
        %v1377 = vld [vmem:[#allocation9 + $0x10] sm:$0xff]
        %v1378 = vld [vmem:[#allocation9 + $0x18] sm:$0xff]
        %v1379 = vld [vmem:[#allocation9 + $0x20] sm:$0xff]
        %v1380 = vld [vmem:[#allocation9 + $0x28] sm:$0xff]
        %v1381 = vld [vmem:[#allocation9 + $0x30] sm:$0xff]
        %v1382 = vld [vmem:[#allocation9 + $0x38] sm:$0xff]
        %v1383 = vld [vmem:[#allocation9 + $0x40] sm:$0xff]
        %v1384 = vld [vmem:[#allocation9 + $0x48] sm:$0xff]
        %v1385 = vld [vmem:[#allocation9 + $0x50] sm:$0xff]
        %v1386 = vld [vmem:[#allocation9 + $0x58] sm:$0xff]
        %v1387 = vld [vmem:[#allocation9 + $0x60] sm:$0xff]
        %v1388 = vld [vmem:[#allocation9 + $0x68] sm:$0xff]
        %v1389 = vld [vmem:[#allocation9 + $0x70] sm:$0xff]
        %v1390 = vld [vmem:[#allocation9 + $0x78] sm:$0xff]
        %v1391 = vld [vmem:[#allocation9 + $0x80] sm:$0xff]
        %v1392 = vld [vmem:[#allocation9 + $0x88] sm:$0xff]
        %v1393 = vld [vmem:[#allocation9 + $0x90] sm:$0xff]
        %v1394 = vld [vmem:[#allocation9 + $0x98] sm:$0xff]
        %v1395 = vld [vmem:[#allocation9 + $0xa0] sm:$0xff]
        %v1396 = vld [vmem:[#allocation9 + $0xa8] sm:$0xff]
        %v1397 = vld [vmem:[#allocation9 + $0xb0] sm:$0xff]
        %v1398 = vld [vmem:[#allocation9 + $0xb8] sm:$0xff]
        %v1399 = vld [vmem:[#allocation9 + $0xc0] sm:$0xff]
        %v1400 = vld [vmem:[#allocation9 + $0xc8] sm:$0xff]
        %v1401 = vld [vmem:[#allocation9 + $0xd0] sm:$0xff]
        %v1402 = vld [vmem:[#allocation9 + $0xd8] sm:$0xff]
        %v1403 = vld [vmem:[#allocation9 + $0xe0] sm:$0xff]
        %v1404 = vld [vmem:[#allocation9 + $0xe8] sm:$0xff]
        %v1405 = vld [vmem:[#allocation9 + $0xf0] sm:$0xff]
        %v1406 = vld [vmem:[#allocation9 + $0xf8] sm:$0xff]
        %v1407 = vld [vmem:[#allocation9 + $0x100] sm:$0xff]
        %v1408 = vld [vmem:[#allocation9 + $0x108] sm:$0xff]
        %v1409 = vld [vmem:[#allocation9 + $0x110] sm:$0xff]
        %v1410 = vld [vmem:[#allocation9 + $0x118] sm:$0xff]
        %v1411 = vld [vmem:[#allocation9 + $0x120] sm:$0xff]
        %v1412 = vld [vmem:[#allocation9 + $0x128] sm:$0xff]
        %v1413 = vld [vmem:[#allocation9 + $0x130] sm:$0xff]
        %v1414 = vld [vmem:[#allocation9 + $0x138] sm:$0xff]
        %v1415 = vld [vmem:[#allocation9 + $0x140] sm:$0xff]
        %v1416 = vld [vmem:[#allocation9 + $0x148] sm:$0xff]
        %v1417 = vld [vmem:[#allocation9 + $0x150] sm:$0xff]
        %v1418 = vld [vmem:[#allocation9 + $0x158] sm:$0xff]
        %v1419 = vld [vmem:[#allocation9 + $0x160] sm:$0xff]
        %v1420 = vld [vmem:[#allocation9 + $0x168] sm:$0xff]
        %v1421 = vld [vmem:[#allocation9 + $0x170] sm:$0xff]
        %v1422 = vld [vmem:[#allocation9 + $0x178] sm:$0xff]
        %v1423 = vld [vmem:[#allocation9 + $0x180] sm:$0xff]
        %v1424 = vld [vmem:[#allocation9 + $0x188] sm:$0xff]
        %v1425 = vld [vmem:[#allocation9 + $0x190] sm:$0xff]
        %v1426 = vld [vmem:[#allocation9 + $0x198] sm:$0xff]
        %v1427 = vld [vmem:[#allocation9 + $0x1a0] sm:$0xff]
        %v1428 = vld [vmem:[#allocation9 + $0x1a8] sm:$0xff]
        %v1429 = vld [vmem:[#allocation9 + $0x1b0] sm:$0xff]
        %v1430 = vld [vmem:[#allocation9 + $0x1b8] sm:$0xff]
        %v1431 = vld [vmem:[#allocation9 + $0x1c0] sm:$0xff]
        %v1432 = vld [vmem:[#allocation9 + $0x1c8] sm:$0xff]
        %v1433 = vld [vmem:[#allocation9 + $0x1d0] sm:$0xff]
        %v1434 = vld [vmem:[#allocation9 + $0x1d8] sm:$0xff]
        %v1435 = vld [vmem:[#allocation9 + $0x1e0] sm:$0xff]
        %v1436 = vld [vmem:[#allocation9 + $0x1e8] sm:$0xff]
        %v1437 = vld [vmem:[#allocation9 + $0x1f0] sm:$0xff]
        %v1438 = vld [vmem:[#allocation9 + $0x1f8] sm:$0xff]
        %v1439 = vld [vmem:[#allocation9 + $0x200] sm:$0xff]
        %v1440 = vld [vmem:[#allocation9 + $0x208] sm:$0xff]
        %v1441 = vld [vmem:[#allocation9 + $0x210] sm:$0xff]
        %v1442 = vld [vmem:[#allocation9 + $0x218] sm:$0xff]
        %v1443 = vld [vmem:[#allocation9 + $0x220] sm:$0xff]
        %v1444 = vld [vmem:[#allocation9 + $0x228] sm:$0xff]
        %v1445 = vld [vmem:[#allocation9 + $0x230] sm:$0xff]
        %v1446 = vld [vmem:[#allocation9 + $0x238] sm:$0xff]
        %v1447 = vld [vmem:[#allocation9 + $0x240] sm:$0xff]
        %v1448 = vld [vmem:[#allocation9 + $0x248] sm:$0xff]
        %v1449 = vld [vmem:[#allocation9 + $0x250] sm:$0xff]
        %v1450 = vld [vmem:[#allocation9 + $0x258] sm:$0xff]
        %v1451 = vld [vmem:[#allocation9 + $0x260] sm:$0xff]
        %v1452 = vld [vmem:[#allocation9 + $0x268] sm:$0xff]
        %v1453 = vld [vmem:[#allocation9 + $0x270] sm:$0xff]
        %v1454 = vld [vmem:[#allocation9 + $0x278] sm:$0xff]
        %v1455 = vld [vmem:[#allocation9 + $0x280] sm:$0xff]
        %v1456 = vld [vmem:[#allocation9 + $0x288] sm:$0xff]
        %v1457 = vld [vmem:[#allocation9 + $0x290] sm:$0xff]
        %v1458 = vld [vmem:[#allocation9 + $0x298] sm:$0xff]
        %v1459 = vld [vmem:[#allocation9 + $0x2a0] sm:$0xff]
        %v1460 = vld [vmem:[#allocation9 + $0x2a8] sm:$0xff]
        %v1461 = vld [vmem:[#allocation9 + $0x2b0] sm:$0xff]
        %v1462 = vld [vmem:[#allocation9 + $0x2b8] sm:$0xff]
        %v1463 = vld [vmem:[#allocation9 + $0x2c0] sm:$0xff]
        %v1464 = vld [vmem:[#allocation9 + $0x2c8] sm:$0xff]
        %v1465 = vld [vmem:[#allocation9 + $0x2d0] sm:$0xff]
        %v1466 = vld [vmem:[#allocation9 + $0x2d8] sm:$0xff]
        %v1467 = vld [vmem:[#allocation9 + $0x2e0] sm:$0xff]
        %v1468 = vld [vmem:[#allocation9 + $0x2e8] sm:$0xff]
        %v1469 = vld [vmem:[#allocation9 + $0x2f0] sm:$0xff]
        %v1470 = vld [vmem:[#allocation9 + $0x2f8] sm:$0xff]
        %v1471 = vld [vmem:[#allocation9 + $0x300] sm:$0xff]
        %v1472 = vld [vmem:[#allocation9 + $0x308] sm:$0xff]
        %v1473 = vld [vmem:[#allocation9 + $0x310] sm:$0xff]
        %v1474 = vld [vmem:[#allocation9 + $0x318] sm:$0xff]
        %v1475 = vld [vmem:[#allocation9 + $0x320] sm:$0xff]
        %v1476 = vld [vmem:[#allocation9 + $0x328] sm:$0xff]
        %v1477 = vld [vmem:[#allocation9 + $0x330] sm:$0xff]
        %v1478 = vld [vmem:[#allocation9 + $0x338] sm:$0xff]
        %v1479 = vld [vmem:[#allocation9 + $0x340] sm:$0xff]
        %v1480 = vld [vmem:[#allocation9 + $0x348] sm:$0xff]
        %v1481 = vld [vmem:[#allocation9 + $0x350] sm:$0xff]
        %v1482 = vld [vmem:[#allocation9 + $0x358] sm:$0xff]
        %v1483 = vld [vmem:[#allocation9 + $0x360] sm:$0xff]
        %v1484 = vld [vmem:[#allocation9 + $0x368] sm:$0xff]
        %v1485 = vld [vmem:[#allocation9 + $0x370] sm:$0xff]
        %v1486 = vld [vmem:[#allocation9 + $0x378] sm:$0xff]
        %v1487 = vld [vmem:[#allocation9 + $0x380] sm:$0xff]
        %v1488 = vld [vmem:[#allocation9 + $0x388] sm:$0xff]
        %v1489 = vld [vmem:[#allocation9 + $0x390] sm:$0xff]
        %v1490 = vld [vmem:[#allocation9 + $0x398] sm:$0xff]
        %v1491 = vld [vmem:[#allocation9 + $0x3a0] sm:$0xff]
        %v1492 = vld [vmem:[#allocation9 + $0x3a8] sm:$0xff]
        %v1493 = vld [vmem:[#allocation9 + $0x3b0] sm:$0xff]
        %v1494 = vld [vmem:[#allocation9 + $0x3b8] sm:$0xff]
        %v1495 = vld [vmem:[#allocation9 + $0x3c0] sm:$0xff]
        %v1496 = vld [vmem:[#allocation9 + $0x3c8] sm:$0xff]
        %v1497 = vld [vmem:[#allocation9 + $0x3d0] sm:$0xff]
        %v1498 = vld [vmem:[#allocation9 + $0x3d8] sm:$0xff]
        %v1499 = vld [vmem:[#allocation9 + $0x3e0] sm:$0xff]
        %v1500 = vld [vmem:[#allocation9 + $0x3e8] sm:$0xff]
        %v1501 = vld [vmem:[#allocation9 + $0x3f0] sm:$0xff]
        %v1502 = vld [vmem:[#allocation9 + $0x3f8] sm:$0xff]
        %1511 = vrot.lane.b32.xlu0 %v1367, 127
        %v1512 = vpop.permute.xlu0 %1511
        %1513 = vrot.lane.b32.xlu0 %v1368, 127
        %v1514 = vpop.permute.xlu0 %1513
        %1515 = vrot.lane.b32.xlu0 %v1369, 127
        %v1516 = vpop.permute.xlu0 %1515
        %1517 = vrot.lane.b32.xlu0 %v1370, 127
        %v1518 = vpop.permute.xlu0 %1517
        %1519 = vrot.lane.b32.xlu0 %v1371, 127
        %v1520 = vpop.permute.xlu0 %1519
        %1521 = vrot.lane.b32.xlu0 %v1372, 127
        %v1522 = vpop.permute.xlu0 %1521
        %1523 = vrot.lane.b32.xlu0 %v1373, 127
        %v1524 = vpop.permute.xlu0 %1523
        %1525 = vrot.lane.b32.xlu0 %v1374, 127
        %v1526 = vpop.permute.xlu0 %1525
        %v1527 = vsel %vm518, %v1512, %v1514
        %v1528 = vsel %vm518, %v1514, %v1516
        %v1529 = vsel %vm518, %v1516, %v1518
        %v1530 = vsel %vm518, %v1520, %v1522
        %v1531 = vsel %vm518, %v1522, %v1524
        %v1532 = vsel %vm518, %v1524, %v1526
        %v1543 = vsel %vm518, %v1518, %v1512
        %v1544 = vsel %vm518, %v1526, %v1520
        %v1545 = vmax.f32 %v1367, %v1527
        %v1546 = vmax.f32 %v1368, %v1528
        %v1547 = vmax.f32 %v1369, %v1529
        %v1548 = vmax.f32 %v1370, %v1543
        %v1549 = vmax.f32 %v1371, %v1530
        %v1550 = vmax.f32 %v1372, %v1531
        %v1551 = vmax.f32 %v1373, %v1532
        %v1552 = vmax.f32 %v1374, %v1544
        %1553 = vmatprep.subr.mxu0 %v1406
        %1554 = vmatpush1.msra.mxu0 %v1405
        %1555 = vmatprep.subr.mxu0 %v1404
        %1556 = vmatpush1.msra.mxu0 %v1403
        %1557 = vmatprep.subr.mxu0 %v1402
        %1558 = vmatpush1.msra.mxu0 %v1401
        %1559 = vmatprep.subr.mxu0 %v1400
        %1560 = vmatpush1.msra.mxu0 %v1399
        %1561 = vmatprep.subr.mxu0 %v1398
        %1562 = vmatpush1.msra.mxu0 %v1397
        %1563 = vmatprep.subr.mxu0 %v1396
        %1564 = vmatpush1.msra.mxu0 %v1395
        %1565 = vmatprep.subr.mxu0 %v1394
        %1566 = vmatpush1.msra.mxu0 %v1393
        %1567 = vmatprep.subr.mxu0 %v1392
        %1568 = vmatpush1.msra.mxu0 %v1391
        %1569 = vmatprep.subr.mxu0 %v1390
        %1570 = vmatpush1.msra.mxu0 %v1389
        %1571 = vmatprep.subr.mxu0 %v1388
        %1572 = vmatpush1.msra.mxu0 %v1387
        %1573 = vmatprep.subr.mxu0 %v1386
        %1574 = vmatpush1.msra.mxu0 %v1385
        %1575 = vmatprep.subr.mxu0 %v1384
        %1576 = vmatpush1.msra.mxu0 %v1383
        %1577 = vmatprep.subr.mxu0 %v1382
        %1578 = vmatpush1.msra.mxu0 %v1381
        %1579 = vmatprep.subr.mxu0 %v1380
        %1580 = vmatpush1.msra.mxu0 %v1379
        %1581 = vmatprep.subr.mxu0 %v1378
        %1582 = vmatpush1.msra.mxu0 %v1377
        %1583 = vmatprep.subr.mxu0 %v1376
        %1584 = vmatpush1.msra.mxu0 %v1375
        %1585 = vmatprep.subr.mxu0 %v1438
        %1586 = vmatpush2.msra.mxu0 %v1437
        %1587 = vmatprep.subr.mxu0 %v1436
        %1588 = vmatpush2.msra.mxu0 %v1435
        %1589 = vmatprep.subr.mxu0 %v1434
        %1590 = vmatpush2.msra.mxu0 %v1433
        %1591 = vmatprep.subr.mxu0 %v1432
        %1592 = vmatpush2.msra.mxu0 %v1431
        %1593 = vmatprep.subr.mxu0 %v1430
        %1594 = vmatpush2.msra.mxu0 %v1429
        %1595 = vmatprep.subr.mxu0 %v1428
        %1596 = vmatpush2.msra.mxu0 %v1427
        %1597 = vmatprep.subr.mxu0 %v1426
        %1598 = vmatpush2.msra.mxu0 %v1425
        %1599 = vmatprep.subr.mxu0 %v1424
        %1600 = vmatpush2.msra.mxu0 %v1423
        %1601 = vmatprep.subr.mxu0 %v1422
        %1602 = vmatpush2.msra.mxu0 %v1421
        %1603 = vmatprep.subr.mxu0 %v1420
        %1604 = vmatpush2.msra.mxu0 %v1419
        %1605 = vmatprep.subr.mxu0 %v1418
        %1606 = vmatpush2.msra.mxu0 %v1417
        %1607 = vmatprep.subr.mxu0 %v1416
        %1608 = vmatpush2.msra.mxu0 %v1415
        %1609 = vmatprep.subr.mxu0 %v1414
        %1610 = vmatpush2.msra.mxu0 %v1413
        %1611 = vmatprep.subr.mxu0 %v1412
        %1612 = vmatpush2.msra.mxu0 %v1411
        %1613 = vmatprep.subr.mxu0 %v1410
        %1614 = vmatpush2.msra.mxu0 %v1409
        %1615 = vmatprep.subr.mxu0 %v1408
        %1616 = vmatpush2.msra.mxu0 %v1407
        %1617 = vmatprep.mubr.f32.mxu0 %v1546
        %1618 = vmatmul.mubr.f32.gmra.mxu0 %v1545
        %v1619 = vpop.f32.mrf.mxu0
        %v1620 = vadd.f32 0.0, %v1619
        %v1621 = vpop.f32.mrf.mxu0
        %v1622 = vadd.f32 0.0, %v1621
        %1623 = vmatprep.mubr.f32.mxu0 %v1550
        %1624 = vmatmul.mubr.f32.gmra.mxu0 %v1549
        %v1625 = vpop.f32.mrf.mxu0
        %v1626 = vadd.f32 0.0, %v1625
        %v1627 = vpop.f32.mrf.mxu0
        %v1628 = vadd.f32 0.0, %v1627
        %1629 = vdwg.mxu0
        %1630 = vmatprep.subr.mxu0 %v1470
        %1631 = vmatpush1.msra.mxu0 %v1469
        %1632 = vmatprep.subr.mxu0 %v1468
        %1633 = vmatpush1.msra.mxu0 %v1467
        %1634 = vmatprep.subr.mxu0 %v1466
        %1635 = vmatpush1.msra.mxu0 %v1465
        %1636 = vmatprep.subr.mxu0 %v1464
        %1637 = vmatpush1.msra.mxu0 %v1463
        %1638 = vmatprep.subr.mxu0 %v1462
        %1639 = vmatpush1.msra.mxu0 %v1461
        %1640 = vmatprep.subr.mxu0 %v1460
        %1641 = vmatpush1.msra.mxu0 %v1459
        %1642 = vmatprep.subr.mxu0 %v1458
        %1643 = vmatpush1.msra.mxu0 %v1457
        %1644 = vmatprep.subr.mxu0 %v1456
        %1645 = vmatpush1.msra.mxu0 %v1455
        %1646 = vmatprep.subr.mxu0 %v1454
        %1647 = vmatpush1.msra.mxu0 %v1453
        %1648 = vmatprep.subr.mxu0 %v1452
        %1649 = vmatpush1.msra.mxu0 %v1451
        %1650 = vmatprep.subr.mxu0 %v1450
        %1651 = vmatpush1.msra.mxu0 %v1449
        %1652 = vmatprep.subr.mxu0 %v1448
        %1653 = vmatpush1.msra.mxu0 %v1447
        %1654 = vmatprep.subr.mxu0 %v1446
        %1655 = vmatpush1.msra.mxu0 %v1445
        %1656 = vmatprep.subr.mxu0 %v1444
        %1657 = vmatpush1.msra.mxu0 %v1443
        %1658 = vmatprep.subr.mxu0 %v1442
        %1659 = vmatpush1.msra.mxu0 %v1441
        %1660 = vmatprep.subr.mxu0 %v1440
        %1661 = vmatpush1.msra.mxu0 %v1439
        %1662 = vmatprep.subr.mxu0 %v1502
        %1663 = vmatpush2.msra.mxu0 %v1501
        %1664 = vmatprep.subr.mxu0 %v1500
        %1665 = vmatpush2.msra.mxu0 %v1499
        %1666 = vmatprep.subr.mxu0 %v1498
        %1667 = vmatpush2.msra.mxu0 %v1497
        %1668 = vmatprep.subr.mxu0 %v1496
        %1669 = vmatpush2.msra.mxu0 %v1495
        %1670 = vmatprep.subr.mxu0 %v1494
        %1671 = vmatpush2.msra.mxu0 %v1493
        %1672 = vmatprep.subr.mxu0 %v1492
        %1673 = vmatpush2.msra.mxu0 %v1491
        %1674 = vmatprep.subr.mxu0 %v1490
        %1675 = vmatpush2.msra.mxu0 %v1489
        %1676 = vmatprep.subr.mxu0 %v1488
        %1677 = vmatpush2.msra.mxu0 %v1487
        %1678 = vmatprep.subr.mxu0 %v1486
        %1679 = vmatpush2.msra.mxu0 %v1485
        %1680 = vmatprep.subr.mxu0 %v1484
        %1681 = vmatpush2.msra.mxu0 %v1483
        %1682 = vmatprep.subr.mxu0 %v1482
        %1683 = vmatpush2.msra.mxu0 %v1481
        %1684 = vmatprep.subr.mxu0 %v1480
        %1685 = vmatpush2.msra.mxu0 %v1479
        %1686 = vmatprep.subr.mxu0 %v1478
        %1687 = vmatpush2.msra.mxu0 %v1477
        %1688 = vmatprep.subr.mxu0 %v1476
        %1689 = vmatpush2.msra.mxu0 %v1475
        %1690 = vmatprep.subr.mxu0 %v1474
        %1691 = vmatpush2.msra.mxu0 %v1473
        %1692 = vmatprep.subr.mxu0 %v1472
        %1693 = vmatpush2.msra.mxu0 %v1471
        %1694 = vmatprep.mubr.f32.mxu0 %v1548
        %1695 = vmatmul.mubr.f32.gmra.mxu0 %v1547
        %v1696 = vpop.f32.mrf.mxu0
        %v1697 = vadd.f32 %v1620, %v1696
        %v1698 = vpop.f32.mrf.mxu0
        %v1699 = vadd.f32 %v1622, %v1698
        %1700 = vmatprep.mubr.f32.mxu0 %v1552
        %1701 = vmatmul.mubr.f32.gmra.mxu0 %v1551
        %v1702 = vpop.f32.mrf.mxu0
        %v1703 = vadd.f32 %v1626, %v1702
        %v1704 = vpop.f32.mrf.mxu0
        %v1705 = vadd.f32 %v1628, %v1704
        %1706 = vdwg.mxu0
        %v1707 = vld [vmem:[%s7] sm:$0x3]
        %v1708 = vld [vmem:[#allocation7] sm:$0xf]
        %1711 = vrot.lane.b32.xlu0 %v1699, 1
        %v1712 = vpop.permute.xlu0 %1711
        %1713 = vrot.lane.b32.xlu0 %v1705, 1
        %v1714 = vpop.permute.xlu0 %1713
        %1719 = vrot.lane.b32.xlu0 %v1697, 1
        %v1720 = vpop.permute.xlu0 %1719
        %1721 = vrot.lane.b32.xlu0 %v1703, 1
        %v1722 = vpop.permute.xlu0 %1721
        %v1723 = vsel %vm474, %v1720, %v1712
        %v1724 = vsel %vm474, %v1722, %v1714
        %v1729 = vsel %vm474, %v1712, %v1720
        %v1730 = vsel %vm474, %v1714, %v1722
        %vm1731 = vcmp.ge.s32.totalorder %v1707, 1
        %vm1732 = vcmp.lt.s32.totalorder %v1707, 65
        %vm1733 = vmand %vm1731, %vm1732
        %v1734 = vsel %vm1733, 1, 0
        %v1735 = vlaneseq
        %v1736 = vshrl.u32 %v1735, 7
        %v1737 = vsub.s32 0, %v1736
        %v1738 = vrot.slane %v1734, %v1737
        %v1739 = vlaneseq
        %v1740 = vshrl.u32 %v1739, 7
        %v1741 = vsub.s32 1, %v1740
        %v1742 = vrot.slane %v1734, %v1741
        %vm1743 = vcmp.eq.s32.totalorder %v1738, 1
        %vm1744 = vcmp.eq.s32.totalorder %v1742, 1
        %v1745 = vsel %vm1743, %v1729, 0.0
        %v1746 = vsel %vm1744, %v1723, 0.0
        %v1747 = vsel %vm1743, %v1730, 0.0
        %v1748 = vsel %vm1744, %v1724, 0.0
        %1749 = vrot.lane.b32.xlu0 %v1697, 127
        %v1750 = vpop.permute.xlu0 %1749
        %1751 = vrot.lane.b32.xlu0 %v1699, 127
        %v1752 = vpop.permute.xlu0 %1751
        %1753 = vrot.lane.b32.xlu0 %v1703, 127
        %v1754 = vpop.permute.xlu0 %1753
        %1755 = vrot.lane.b32.xlu0 %v1705, 127
        %v1756 = vpop.permute.xlu0 %1755
        %v1757 = vsel %vm518, %v1750, %v1752
        %v1758 = vsel %vm518, %v1754, %v1756
        %v1765 = vsel %vm518, %v1752, %v1750
        %v1766 = vsel %vm518, %v1756, %v1754
        %vm1767 = vcmp.ge.s32.totalorder %v1707, 4294967295
        %vm1768 = vcmp.lt.s32.totalorder %v1707, 63
        %vm1769 = vmand %vm1767, %vm1768
        %v1770 = vsel %vm1769, 1, 0
        %v1771 = vlaneseq
        %v1772 = vshrl.u32 %v1771, 7
        %v1773 = vsub.s32 0, %v1772
        %v1774 = vrot.slane %v1770, %v1773
        %v1775 = vlaneseq
        %v1776 = vshrl.u32 %v1775, 7
        %v1777 = vsub.s32 1, %v1776
        %v1778 = vrot.slane %v1770, %v1777
        %vm1779 = vcmp.eq.s32.totalorder %v1774, 1
        %vm1780 = vcmp.eq.s32.totalorder %v1778, 1
        %v1781 = vsel %vm1779, %v1757, 0.0
        %v1782 = vsel %vm1780, %v1765, 0.0
        %v1783 = vsel %vm1779, %v1758, 0.0
        %v1784 = vsel %vm1780, %v1766, 0.0
        %v1785 = vrot.slane %v1697, 4
        %v1786 = vrot.slane %v1699, 4
        %v1787 = vrot.slane %v1703, 4
        %v1788 = vsel %vm819, %v1785, %v1787
        %v1789 = vrot.slane %v1705, 4
        %v1790 = vsel %vm819, %v1786, %v1789
        %v1795 = vsel %vm819, %v1747, %v1785
        %v1796 = vsel %vm819, %v1748, %v1786
        %v1797 = vsel %vm819, %v1783, 1.0
        %v1798 = vsel %vm819, %v1784, 1.0
        %v1799 = vpack.c.bf16 %v1795, %v1745
        %v1800 = vpack.c.bf16 %v1796, %v1746
        %v1801 = vpack.c.bf16 %v1781, %v1788
        %v1802 = vpack.c.bf16 %v1782, %v1790
        %v1803 = vpack.c.bf16 %v1797, %v1797
        %v1804 = vpack.c.bf16 %v1798, %v1798
        %vm1805 = vcmask 302080
        %v1807 = vsel %vm1805, %v1708, 0
        %v1809 = vsel %vm606, 4294967295, 65535
        %v1810 = vsel %vm611, %v1809, 0
        %v1812 = vand.u32 %v1803, %v1810
        %v1815 = vand.u32 %v1804, %v1810
        %1817 = vmatprep.subr.bf16.mxu0 0
        %1818 = vmatpush1.bf16.msra.mxu0 0
        %1819 = vmatprep.subr.bf16.mxu0 0
        %1820 = vmatpush1.bf16.msra.mxu0 0
        %1821 = vmatprep.subr.bf16.mxu0 0
        %1822 = vmatpush1.bf16.msra.mxu0 0
        %1823 = vmatprep.subr.bf16.mxu0 0
        %1824 = vmatpush1.bf16.msra.mxu0 0
        %1825 = vmatprep.subr.bf16.mxu0 0
        %1826 = vmatpush1.bf16.msra.mxu0 0
        %1827 = vmatprep.subr.bf16.mxu0 %v1815
        %1828 = vmatpush1.bf16.msra.mxu0 %v1812
        %1829 = vmatprep.subr.bf16.mxu0 %v1802
        %1830 = vmatpush1.bf16.msra.mxu0 %v1801
        %1831 = vmatprep.subr.bf16.mxu0 %v1800
        %1832 = vmatpush1.bf16.msra.mxu0 %v1799
        %1833 = vmatprep.subr.bf16.mxu0 0
        %1834 = vmatpush2.bf16.msra.mxu0 0
        %1835 = vmatprep.subr.bf16.mxu0 0
        %1836 = vmatpush2.bf16.msra.mxu0 0
        %1837 = vmatprep.subr.bf16.mxu0 0
        %1838 = vmatpush2.bf16.msra.mxu0 0
        %1839 = vmatprep.subr.bf16.mxu0 0
        %1840 = vmatpush2.bf16.msra.mxu0 0
        %1841 = vmatprep.subr.bf16.mxu0 0
        %1842 = vmatpush2.bf16.msra.mxu0 0
        %1843 = vmatprep.subr.bf16.mxu0 0
        %1844 = vmatpush2.bf16.msra.mxu0 0
        %1845 = vmatprep.subr.bf16.mxu0 0
        %1846 = vmatpush2.bf16.msra.mxu0 0
        %1847 = vmatprep.subr.bf16.mxu0 0
        %1848 = vmatpush2.bf16.msra.mxu0 0
        %1849 = vmatprep.mubr.bf16.mxu0 0
        %1850 = vmatmul.mubr.bf16.gmra.mxu0 %v1807
        %v1851 = vpop.f32.mrf.mxu0
        %v1852 = vadd.f32 0.0, %v1851
        %v1853 = vpop.f32.mrf.mxu0
        %v1854 = vadd.f32 0.0, %v1853
        %v1855 = vpop.f32.mrf.mxu0
        %v1856 = vpop.f32.mrf.mxu0
        %1857 = vdwg.mxu0
        %v1858 = vmax.f32 %v1852, 0.0
        %v1859 = vmax.f32 %v1854, 0.0
        %v1860 = vld [vmem:[%s5] sm:$0xf]
        %1862 = vrot.lane.b32.xlu0 %v1859, 1
        %v1863 = vpop.permute.xlu0 %1862
        %1866 = vrot.lane.b32.xlu0 %v1858, 1
        %v1867 = vpop.permute.xlu0 %1866
        %v1868 = vsel %vm474, %v1867, %v1863
        %v1871 = vsel %vm474, %v1863, %v1867
        %v1872 = vsel %vm1743, %v1871, 0.0
        %v1873 = vsel %vm1744, %v1868, 0.0
        %1874 = vrot.lane.b32.xlu0 %v1858, 127
        %v1875 = vpop.permute.xlu0 %1874
        %1876 = vrot.lane.b32.xlu0 %v1859, 127
        %v1877 = vpop.permute.xlu0 %1876
        %v1878 = vsel %vm518, %v1875, %v1877
        %v1882 = vsel %vm518, %v1877, %v1875
        %v1883 = vsel %vm1779, %v1878, 0.0
        %v1884 = vsel %vm1780, %v1882, 0.0
        %v1885 = vpack.c.bf16 %v1858, %v1872
        %v1886 = vpack.c.bf16 %v1859, %v1873
        %v1887 = vpack.c.bf16 1.0, %v1883
        %v1888 = vpack.c.bf16 1.0, %v1884
        %vm1889 = vcmask 203776
        %v1891 = vsel %vm1889, %v1860, 0
        %vm1893 = vcmask 1044480
        %v1894 = vsel %vm819, 4294967295, 65535
        %v1895 = vsel %vm1893, %v1894, 0
        %v1897 = vand.u32 %v1887, %v1895
        %v1900 = vand.u32 %v1888, %v1895
        %1902 = vmatprep.subr.bf16.mxu0 0
        %1903 = vmatpush1.bf16.msra.mxu0 0
        %1904 = vmatprep.subr.bf16.mxu0 0
        %1905 = vmatpush1.bf16.msra.mxu0 0
        %1906 = vmatprep.subr.bf16.mxu0 0
        %1907 = vmatpush1.bf16.msra.mxu0 0
        %1908 = vmatprep.subr.bf16.mxu0 0
        %1909 = vmatpush1.bf16.msra.mxu0 0
        %1910 = vmatprep.subr.bf16.mxu0 0
        %1911 = vmatpush1.bf16.msra.mxu0 0
        %1912 = vmatprep.subr.bf16.mxu0 0
        %1913 = vmatpush1.bf16.msra.mxu0 0
        %1914 = vmatprep.subr.bf16.mxu0 %v1900
        %1915 = vmatpush1.bf16.msra.mxu0 %v1897
        %1916 = vmatprep.subr.bf16.mxu0 %v1886
        %1917 = vmatpush1.bf16.msra.mxu0 %v1885
        %1918 = vmatprep.subr.bf16.mxu0 0
        %1919 = vmatpush2.bf16.msra.mxu0 0
        %1920 = vmatprep.subr.bf16.mxu0 0
        %1921 = vmatpush2.bf16.msra.mxu0 0
        %1922 = vmatprep.subr.bf16.mxu0 0
        %1923 = vmatpush2.bf16.msra.mxu0 0
        %1924 = vmatprep.subr.bf16.mxu0 0
        %1925 = vmatpush2.bf16.msra.mxu0 0
        %1926 = vmatprep.subr.bf16.mxu0 0
        %1927 = vmatpush2.bf16.msra.mxu0 0
        %1928 = vmatprep.subr.bf16.mxu0 0
        %1929 = vmatpush2.bf16.msra.mxu0 0
        %1930 = vmatprep.subr.bf16.mxu0 0
        %1931 = vmatpush2.bf16.msra.mxu0 0
        %1932 = vmatprep.subr.bf16.mxu0 0
        %1933 = vmatpush2.bf16.msra.mxu0 0
        %1934 = vmatprep.mubr.bf16.mxu0 0
        %1935 = vmatmul.mubr.bf16.gmra.mxu0 %v1891
        %v1936 = vpop.f32.mrf.mxu0
        %v1937 = vadd.f32 0.0, %v1936
        %v1938 = vpop.f32.mrf.mxu0
        %v1939 = vadd.f32 0.0, %v1938
        %v1940 = vpop.f32.mrf.mxu0
        %v1941 = vpop.f32.mrf.mxu0
        %1942 = vdwg.mxu0
        %v1943 = vmax.f32 %v1937, 0.0
        %v1944 = vmax.f32 %v1939, 0.0
        %v1945 = vld [vmem:[#allocation10] sm:$0xff]
        %v1946 = vld [vmem:[#allocation10 + $0x8] sm:$0xff]
        %v1947 = vld [vmem:[#allocation10 + $0x10] sm:$0xff]
        %v1948 = vld [vmem:[#allocation10 + $0x18] sm:$0xff]
        %v1949 = vld [vmem:[#allocation10 + $0x20] sm:$0xff]
        %v1950 = vld [vmem:[#allocation10 + $0x28] sm:$0xff]
        %v1951 = vld [vmem:[#allocation10 + $0x30] sm:$0xff]
        %v1952 = vld [vmem:[#allocation10 + $0x38] sm:$0xff]
        %v1953 = vld [vmem:[#allocation10 + $0x40] sm:$0xff]
        %v1954 = vld [vmem:[#allocation10 + $0x48] sm:$0xff]
        %v1955 = vld [vmem:[#allocation10 + $0x50] sm:$0xff]
        %v1956 = vld [vmem:[#allocation10 + $0x58] sm:$0xff]
        %v1957 = vld [vmem:[#allocation10 + $0x60] sm:$0xff]
        %v1958 = vld [vmem:[#allocation10 + $0x68] sm:$0xff]
        %v1959 = vld [vmem:[#allocation10 + $0x70] sm:$0xff]
        %v1960 = vld [vmem:[#allocation10 + $0x78] sm:$0xff]
        %v1961 = vld [vmem:[#allocation10 + $0x80] sm:$0xff]
        %v1962 = vld [vmem:[#allocation10 + $0x88] sm:$0xff]
        %v1963 = vld [vmem:[#allocation10 + $0x90] sm:$0xff]
        %v1964 = vld [vmem:[#allocation10 + $0x98] sm:$0xff]
        %v1965 = vld [vmem:[#allocation10 + $0xa0] sm:$0xff]
        %v1966 = vld [vmem:[#allocation10 + $0xa8] sm:$0xff]
        %v1967 = vld [vmem:[#allocation10 + $0xb0] sm:$0xff]
        %v1968 = vld [vmem:[#allocation10 + $0xb8] sm:$0xff]
        %v1969 = vld [vmem:[#allocation10 + $0xc0] sm:$0xff]
        %v1970 = vld [vmem:[#allocation10 + $0xc8] sm:$0xff]
        %v1971 = vld [vmem:[#allocation10 + $0xd0] sm:$0xff]
        %v1972 = vld [vmem:[#allocation10 + $0xd8] sm:$0xff]
        %v1973 = vld [vmem:[#allocation10 + $0xe0] sm:$0xff]
        %v1974 = vld [vmem:[#allocation10 + $0xe8] sm:$0xff]
        %v1975 = vld [vmem:[#allocation10 + $0xf0] sm:$0xff]
        %v1976 = vld [vmem:[#allocation10 + $0xf8] sm:$0xff]
        %1979 = vrot.lane.b32.xlu0 %v1943, 127
        %v1980 = vpop.permute.xlu0 %1979
        %1981 = vrot.lane.b32.xlu0 %v1944, 127
        %v1982 = vpop.permute.xlu0 %1981
        %v1983 = vsel %vm518, %v1980, %v1982
        %v1987 = vsel %vm518, %v1982, %v1980
        %v1988 = vmax.f32 %v1943, %v1983
        %v1989 = vmax.f32 %v1944, %v1987
        %1990 = vmatprep.subr.mxu0 0.0
        %1991 = vmatpush1.msra.mxu0 %v1960
        %1992 = vmatprep.subr.mxu0 0.0
        %1993 = vmatpush1.msra.mxu0 %v1959
        %1994 = vmatprep.subr.mxu0 0.0
        %1995 = vmatpush1.msra.mxu0 %v1958
        %1996 = vmatprep.subr.mxu0 0.0
        %1997 = vmatpush1.msra.mxu0 %v1957
        %1998 = vmatprep.subr.mxu0 0.0
        %1999 = vmatpush1.msra.mxu0 %v1956
        %2000 = vmatprep.subr.mxu0 0.0
        %2001 = vmatpush1.msra.mxu0 %v1955
        %2002 = vmatprep.subr.mxu0 0.0
        %2003 = vmatpush1.msra.mxu0 %v1954
        %2004 = vmatprep.subr.mxu0 0.0
        %2005 = vmatpush1.msra.mxu0 %v1953
        %2006 = vmatprep.subr.mxu0 0.0
        %2007 = vmatpush1.msra.mxu0 %v1952
        %2008 = vmatprep.subr.mxu0 0.0
        %2009 = vmatpush1.msra.mxu0 %v1951
        %2010 = vmatprep.subr.mxu0 0.0
        %2011 = vmatpush1.msra.mxu0 %v1950
        %2012 = vmatprep.subr.mxu0 0.0
        %2013 = vmatpush1.msra.mxu0 %v1949
        %2014 = vmatprep.subr.mxu0 0.0
        %2015 = vmatpush1.msra.mxu0 %v1948
        %2016 = vmatprep.subr.mxu0 0.0
        %2017 = vmatpush1.msra.mxu0 %v1947
        %2018 = vmatprep.subr.mxu0 0.0
        %2019 = vmatpush1.msra.mxu0 %v1946
        %2020 = vmatprep.subr.mxu0 0.0
        %2021 = vmatpush1.msra.mxu0 %v1945
        %2022 = vmatprep.subr.mxu0 0.0
        %2023 = vmatpush2.msra.mxu0 %v1976
        %2024 = vmatprep.subr.mxu0 0.0
        %2025 = vmatpush2.msra.mxu0 %v1975
        %2026 = vmatprep.subr.mxu0 0.0
        %2027 = vmatpush2.msra.mxu0 %v1974
        %2028 = vmatprep.subr.mxu0 0.0
        %2029 = vmatpush2.msra.mxu0 %v1973
        %2030 = vmatprep.subr.mxu0 0.0
        %2031 = vmatpush2.msra.mxu0 %v1972
        %2032 = vmatprep.subr.mxu0 0.0
        %2033 = vmatpush2.msra.mxu0 %v1971
        %2034 = vmatprep.subr.mxu0 0.0
        %2035 = vmatpush2.msra.mxu0 %v1970
        %2036 = vmatprep.subr.mxu0 0.0
        %2037 = vmatpush2.msra.mxu0 %v1969
        %2038 = vmatprep.subr.mxu0 0.0
        %2039 = vmatpush2.msra.mxu0 %v1968
        %2040 = vmatprep.subr.mxu0 0.0
        %2041 = vmatpush2.msra.mxu0 %v1967
        %2042 = vmatprep.subr.mxu0 0.0
        %2043 = vmatpush2.msra.mxu0 %v1966
        %2044 = vmatprep.subr.mxu0 0.0
        %2045 = vmatpush2.msra.mxu0 %v1965
        %2046 = vmatprep.subr.mxu0 0.0
        %2047 = vmatpush2.msra.mxu0 %v1964
        %2048 = vmatprep.subr.mxu0 0.0
        %2049 = vmatpush2.msra.mxu0 %v1963
        %2050 = vmatprep.subr.mxu0 0.0
        %2051 = vmatpush2.msra.mxu0 %v1962
        %2052 = vmatprep.subr.mxu0 0.0
        %2053 = vmatpush2.msra.mxu0 %v1961
        %2054 = vmatprep.mubr.f32.mxu0 %v1989
        %2055 = vmatmul.mubr.f32.gmra.mxu0 %v1988
        %v2056 = vpop.f32.mrf.mxu0
        %v2057 = vadd.f32 0.0, %v2056
        %v2058 = vpop.f32.mrf.mxu0
        %2059 = vdwg.mxu0
        %2060 = vst [vmem:[%s443] sm:$0xff] %v2057
        %p2061 = scmp.lt.s32.totalorder %s27, 1
        %s2062 = scalar_select %p2061, %s27, 1
        %s2063 = smul.addr %s2062, 8
        %s2064 = scalar_lea.vmem %s10, %s2063
        // Predicated region
        $region85: #{fwd.2} parent=59 // pred_check
          %p2065 = pneg %p260
        $region86: #{fwd.2} parent=59 // pred_check_branch
          %2067 = sbr.rel (%p2065) target = $region88
        $region87: #{fwd.2} parent=59 // pred_region
          _
        $region88: #{fwd.2} parent=59 // pred_fallthru
          _
      $region60: #{fwd.2} parent=5 // pred_fallthru
        _
      %p2068 = scmp.le.s32.totalorder 2, %s22
      // Predicated region
      $region89: #{fwd.2} parent=5 // pred_check
        %p2069 = pneg %p2068
      $region90: #{fwd.2} parent=5 // pred_check_branch
        %2071 = sbr.rel (%p2069) target = $region92
      $region91: #{fwd.2} parent=5 // pred_region
        %s2072 = ssub.s32 %s22, 2
        // Predicated region
        $region93: #{fwd.2} parent=91 // pred_check
          %p2073 = pneg %p266
        $region94: #{fwd.2} parent=91 // pred_check_branch
          %2075 = sbr.rel (%p2073) target = $region96
        $region95: #{fwd.2} parent=91 // pred_region
          %p2076 = scmp.lt.s32.totalorder %s28, 1
          %s2077 = scalar_select %p2076, %s28, 1
          %s2078 = smul.addr %s2077, 8
          %s2079 = scalar_lea.vmem %s10, %s2078
        $region96: #{fwd.2} parent=91 // pred_fallthru
          _
      $region92: #{fwd.2} parent=5 // pred_fallthru
        _
    $region6: #{fwd.2} parent=1 // loop_footer
      %s26 = sadd.s32 1, %s22
    $region7: #{fwd.2} parent=1 // loop_footer_branch
      %21 = sbr.rel target = $region3
    $region8: #{fwd.2} parent=1 // loop_exit
      _
    %2080 = vsyncpa [#allocation3], 1
    %s2081 = scalar_lea.sflag [#allocation3], 1
    %2082 = vsyncpa %s2081, 1
    %2083 = vsyncpa [#allocation5], 1
    %2084 = vsyncpa [#allocation8], 1
    %2085 = vsyncpa [#allocation11], 1

</llo_original>
